<compile_context>
chip_gen: v7x
topology: tpu7x:2x2x1
jax: 0.10.0
libtpu: 0.0.40
codegen_flags: <defaults>
</compile_context>

<pallas_src>
import functools

import jax
import jax.numpy as jnp
from jax import lax
from jax.experimental import pallas as pl
from jax.experimental.pallas import tpu as pltpu


def _shift_cols(a, dc):
    """result[:, w, :] = a[:, w+dc, :], zero outside the W border."""
    if dc == 0:
        return a
    zcol = jnp.zeros((a.shape[0], 1, a.shape[2]), a.dtype)
    if dc == 1:
        return jnp.concatenate([a[:, 1:, :], zcol], axis=1)
    return jnp.concatenate([zcol, a[:, :-1, :]], axis=1)


def _shift_rows(a, dr):
    """result[h, :, :] = a[h+dr, :, :], zero outside the H border (major axis)."""
    if dr == 0:
        return a
    zrow = jnp.zeros((1, a.shape[1], a.shape[2]), a.dtype)
    if dr == 1:
        return jnp.concatenate([a[1:], zrow], axis=0)
    return jnp.concatenate([zrow, a[:-1]], axis=0)


def _top_block_kernel(x_ref,
                      wq_ref, bq_ref, wk_ref, bk_ref, wv_ref, bv_ref,
                      wp3_ref, bp_ref,
                      w1_ref, b1_ref, wdw_ref, bdw_ref, w2_ref, b2_ref,
                      o_ref, *, num_heads, key_dim, d, H, W, block_b,
                      compute_dtype):
    HW = H * W
    bb = block_b
    dim = x_ref.shape[-1]
    hidden = w1_ref.shape[-1]
    approx = compute_dtype != jnp.float32

    # x block: (bb, HW, dim) -- lane-dense token layout, one/two batch elements.
    xf = x_ref[...].reshape(bb * HW, dim)                     # f32
    xc = xf.astype(compute_dtype)

    # ---------------- Attention ----------------
    # 1x1 convs == channel matmuls; BN already folded into weights/bias.
    q = jnp.dot(xc, wq_ref[...], preferred_element_type=jnp.float32) + bq_ref[...]
    k = jnp.dot(xc, wk_ref[...], preferred_element_type=jnp.float32) + bk_ref[...]
    v = jnp.dot(xc, wv_ref[...], preferred_element_type=jnp.float32) + bv_ref[...]
    qc = q.astype(compute_dtype)
    kc = k.astype(compute_dtype)
    vc = v.astype(compute_dtype)

    nt = (((1,), (1,)), ((), ()))                             # A @ B^T
    bp = bp_ref[...]                                          # (1, dim) f32
    attn_rows = []
    for b in range(bb):
        r0 = b * HW
        qb = qc[r0:r0 + HW]
        kb = kc[r0:r0 + HW]
        vb = vc[r0:r0 + HW]
        acc = jnp.zeros((HW, dim), jnp.float32)
        for h in range(num_heads):
            qh = qb[:, h * key_dim:(h + 1) * key_dim]         # (HW, key_dim)
            kh = kb[:, h * key_dim:(h + 1) * key_dim]         # (HW, key_dim)
            vh = vb[:, h * d:(h + 1) * d]                     # (HW, d)
            s = lax.dot_general(qh, kh, nt,
                                preferred_element_type=jnp.float32)  # (HW, HW)
            # NOTE: the reference forward never multiplies by self.scale.
            s = s - jnp.max(s, axis=-1, keepdims=True)
            p = jnp.exp(s)
            denom = jnp.sum(p, axis=-1, keepdims=True)
            if approx:
                p = p * pl.reciprocal(denom, approx=True)
            else:
                p = p / denom
            head = jnp.dot(p.astype(compute_dtype), vh,
                           preferred_element_type=jnp.float32)
            head = jnp.clip(head, 0.0, 6.0).astype(compute_dtype)   # proj ReLU6
            # Fused "concat + proj": accumulate this head's projection directly.
            acc = acc + jnp.dot(head, wp3_ref[h],
                                preferred_element_type=jnp.float32)
        attn_rows.append(acc + bp)
    attn = attn_rows[0] if bb == 1 else jnp.concatenate(attn_rows, axis=0)
    x1 = xf + attn                                            # residual 1 (f32)

    # ---------------- Mlp ----------------
    y = jnp.dot(x1.astype(compute_dtype), w1_ref[...],
                preferred_element_type=jnp.float32) + b1_ref[...]   # (bb*HW, hidden)

    wdw = wdw_ref[...]                                        # (9, hidden) f32
    bdw = bdw_ref[...]                                        # (1, hidden) f32
    csz = 128 if hidden % 128 == 0 else hidden                # channel chunk (vreg pressure)

    # 3x3 depthwise conv, pad=1: zero-padded slice/concat shifts, no scratch.
    dw_rows = []
    for b in range(bb):
        y3 = y[b * HW:(b + 1) * HW].reshape(H, W, hidden)
        chunks = []
        for c0 in range(0, hidden, csz):
            yc = y3[:, :, c0:c0 + csz]
            # Two sublane (W) shifts, reused across the three row taps each.
            cols = {dc: _shift_cols(yc, dc) for dc in (-1, 0, 1)}
            acc_c = jnp.zeros((H, W, csz), jnp.float32)
            for kh in range(3):
                for kw in range(3):
                    tap = _shift_rows(cols[kw - 1], kh - 1)
                    wtap = wdw[3 * kh + kw:3 * kh + kw + 1, c0:c0 + csz]
                    acc_c = acc_c + tap * wtap.reshape(1, 1, csz)
            acc_c = acc_c + bdw[:, c0:c0 + csz].reshape(1, 1, csz)
            chunks.append(jnp.clip(acc_c, 0.0, 6.0))          # ReLU6
        dwb = chunks[0] if len(chunks) == 1 else jnp.concatenate(chunks, axis=-1)
        dw_rows.append(dwb.reshape(HW, hidden))
    dwa = dw_rows[0] if bb == 1 else jnp.concatenate(dw_rows, axis=0)

    y2 = jnp.dot(dwa.astype(compute_dtype), w2_ref[...],
                 preferred_element_type=jnp.float32) + b2_ref[...]

    o_ref[...] = (x1 + y2).reshape(bb, HW, dim).astype(o_ref.dtype)   # residual 2


def top_block_pallas(x_nchw, params, *, num_heads, key_dim, d, H, W,
                     block_b=1, compute_dtype=jnp.bfloat16):
    """top_Block forward.

    block_b = 1 : batch-parallel grid (one element per TensorCore on v7x).
    block_b = B : whole batch fused into one grid step (best on single-TC
                  v5e / v6e: fewer grid steps, full MXU M dimension).
    """
    B, dim, Hx, Wx = x_nchw.shape
    assert (Hx, Wx) == (H, W) and B % block_b == 0
    HW = H * W

    # NCHW -> lane-dense token layout (B, HW, dim); fused by XLA under jit.
    x_tok = jnp.transpose(x_nchw, (0, 2, 3, 1)).reshape(B, HW, dim)

    cdt = compute_dtype
    # Matmul weights in the MXU operand dtype (halves weight DMA for bf16);
    # biases and the depthwise filter stay f32 (VPU epilogue dtype).
    weight_args = (
        params['wq'].astype(cdt), params['bq'],
        params['wk'].astype(cdt), params['bk'],
        params['wv'].astype(cdt), params['bv'],
        params['wp3'].astype(cdt), params['bp'],
        params['w1'].astype(cdt), params['b1'],
        params['wdw'], params['bdw'],
        params['w2'].astype(cdt), params['b2'],
    )

    def full_spec(a):
        nd = a.ndim
        return pl.BlockSpec(a.shape, lambda i, _nd=nd: (0,) * _nd)

    in_specs = [pl.BlockSpec((block_b, HW, dim), lambda i: (i, 0, 0))]
    in_specs += [full_spec(a) for a in weight_args]

    kernel = functools.partial(
        _top_block_kernel, num_heads=num_heads, key_dim=key_dim, d=d,
        H=H, W=W, block_b=block_b, compute_dtype=compute_dtype)

    out_tok = pl.pallas_call(
        kernel,
        out_shape=jax.ShapeDtypeStruct((B, HW, dim), x_tok.dtype),
        grid_spec=pltpu.PrefetchScalarGridSpec(
            num_scalar_prefetch=0,
            grid=(B // block_b,),
            in_specs=in_specs,
            out_specs=pl.BlockSpec((block_b, HW, dim), lambda i: (i, 0, 0)),
        ),
        compiler_params=pltpu.CompilerParams(
            dimension_semantics=("parallel",)),
    )(x_tok, *weight_args)

    return jnp.transpose(out_tok.reshape(B, H, W, dim), (0, 3, 1, 2))


def fold_conv_bn(w, gamma, beta, mean, var, eps=1e-5):
    """Fold eval-mode BN into a bias-free 1x1-conv weight (matmul form Cin,Cout)."""
    scale = gamma / jnp.sqrt(var + eps)
    return w * scale[None, :], (beta - mean * scale).reshape(1, -1)


def ref_top_block(x, raw, *, num_heads, key_dim, d, H, W, eps=1e-5):
    """Pure-JAX NCHW f32 reference mirroring the PyTorch forward (eval mode)."""
    B, dim, _, _ = x.shape
    HW = H * W

    def conv1x1_bn(t, w, gamma, beta, mean, var):
        y = jnp.einsum('io,bihw->bohw', w, t)
        inv = gamma / jnp.sqrt(var + eps)
        return (y - mean[None, :, None, None]) * inv[None, :, None, None] \
            + beta[None, :, None, None]

    q = conv1x1_bn(x, raw['wq'], *raw['bnq'])
    k = conv1x1_bn(x, raw['wk'], *raw['bnk'])
    v = conv1x1_bn(x, raw['wv'], *raw['bnv'])

    qq = q.reshape(B, num_heads, key_dim, HW).transpose(0, 1, 3, 2)
    kk = k.reshape(B, num_heads, key_dim, HW)
    vv = v.reshape(B, num_heads, d, HW).transpose(0, 1, 3, 2)
    attn = jnp.einsum('bhqc,bhcp->bhqp', qq, kk)
    attn = jax.nn.softmax(attn, axis=-1)
    xx = jnp.einsum('bhqp,bhpd->bhqd', attn, vv)
    xx = xx.transpose(0, 1, 3, 2).reshape(B, num_heads * d, H, W)
    xx = jnp.clip(xx, 0.0, 6.0)
    xx = conv1x1_bn(xx, raw['wp'], *raw['bnp'])
    x1 = x + xx

    y = conv1x1_bn(x1, raw['w1'], *raw['bn1'])
    hidden = y.shape[1]
    yp = jnp.pad(y, ((0, 0), (0, 0), (1, 1), (1, 1)))
    dwc = jnp.zeros_like(y)
    for kh in range(3):
        for kw in range(3):
            dwc = dwc + yp[:, :, kh:kh + H, kw:kw + W] * \
                raw['wdw'][3 * kh + kw].reshape(1, hidden, 1, 1)
    dwc = dwc + raw['bdw'].reshape(1, hidden, 1, 1)
    dwc = jnp.clip(dwc, 0.0, 6.0)
    y2 = conv1x1_bn(dwc, raw['w2'], *raw['bn2'])
    return x1 + y2


if __name__ == "__main__":
    # top_Block(dim=128, key_dim=16, num_heads=8, mlp_ratio=2.0, attn_ratio=2.0,
    #           drop=0.0, drop_path=0.0), eval mode.
    B, dim, H, W = 2, 128, 8, 8
    key_dim, num_heads = 16, 8
    attn_ratio, mlp_ratio = 2.0, 2.0
    d = int(attn_ratio * key_dim)          # 32
    dh = d * num_heads                     # 256
    nh_kd = key_dim * num_heads            # 128
    hidden = int(dim * mlp_ratio)          # 256

    kit = iter(jax.random.split(jax.random.PRNGKey(0), 40))

    def nk():
        return next(kit)

    x = jax.random.normal(nk(), (B, dim, H, W), jnp.float32)

    def conv_w(cin, cout, scale=0.05):
        return jax.random.normal(nk(), (cin, cout), jnp.float32) * scale

    def bn(c):
        return (jax.random.uniform(nk(), (c,), minval=0.9, maxval=1.1),   # gamma
                jax.random.normal(nk(), (c,)) * 0.05,                     # beta
                jax.random.normal(nk(), (c,)) * 0.05,                     # running mean
                jax.random.uniform(nk(), (c,), minval=0.8, maxval=1.2))   # running var

    raw = dict(
        wq=conv_w(dim, nh_kd), bnq=bn(nh_kd),
        wk=conv_w(dim, nh_kd), bnk=bn(nh_kd),
        wv=conv_w(dim, dh), bnv=bn(dh),
        wp=conv_w(dh, dim), bnp=bn(dim),
        w1=conv_w(dim, hidden), bn1=bn(hidden),
        wdw=jax.random.normal(nk(), (9, hidden), jnp.float32) * 0.15,
        bdw=jax.random.normal(nk(), (hidden,), jnp.float32) * 0.05,
        w2=conv_w(hidden, dim), bn2=bn(dim),
    )

    # Fold BN into the 1x1-conv weights for the kernel.
    params = {}
    for wname, bnname in (('wq', 'bnq'), ('wk', 'bnk'), ('wv', 'bnv'),
                          ('wp', 'bnp'), ('w1', 'bn1'), ('w2', 'bn2')):
        wf, bf = fold_conv_bn(raw[wname], *raw[bnname])
        params[wname] = wf
        params['b' + wname[1:]] = bf
    # Head-major projection weight: lets the kernel fuse concat+proj per head.
    params['wp3'] = params.pop('wp').reshape(num_heads, d, dim)
    params['wdw'] = raw['wdw']
    params['bdw'] = raw['bdw'].reshape(1, hidden)

    ref = ref_top_block(x, raw, num_heads=num_heads, key_dim=key_dim,
                        d=d, H=H, W=W)

    # 1) bf16 MXU operands, batch-parallel grid (feeds both TensorCores on v7x).
    run_bf16 = jax.jit(functools.partial(
        top_block_pallas, num_heads=num_heads, key_dim=key_dim, d=d, H=H, W=W,
        block_b=1, compute_dtype=jnp.bfloat16))
    out_bf16 = jax.block_until_ready(run_bf16(x, params))
    assert out_bf16.shape == (B, dim, H, W)
    err_bf16 = float(jnp.max(jnp.abs(out_bf16 - ref)))
    assert jnp.allclose(out_bf16, ref, atol=3e-2, rtol=3e-2), \
        f"bf16 path max abs err {err_bf16}"

    # 2) f32 path, whole batch fused into one grid step (single-TC v5e/v6e style);
    #    tight numerical check against the f32 reference.
    run_f32 = jax.jit(functools.partial(
        top_block_pallas, num_heads=num_heads, key_dim=key_dim, d=d, H=H, W=W,
        block_b=B, compute_dtype=jnp.float32))
    out_f32 = jax.block_until_ready(run_f32(x, params))
    err_f32 = float(jnp.max(jnp.abs(out_f32 - ref)))
    assert jnp.allclose(out_f32, ref, atol=2e-3, rtol=2e-3), \
        f"f32 path max abs err {err_f32}"

    print("KERNEL_OK")
</pallas_src>

<mosaic_0001>
module attributes {stable_mosaic.version = 11 : i64} {
  func.func @_top_block_kernel(%arg0: i32, %arg1: memref<1x64x128xf32, #tpu.memory_space<vmem>>, %arg2: memref<128x128xbf16, #tpu.memory_space<vmem>>, %arg3: memref<1x128xf32, #tpu.memory_space<vmem>>, %arg4: memref<128x128xbf16, #tpu.memory_space<vmem>>, %arg5: memref<1x128xf32, #tpu.memory_space<vmem>>, %arg6: memref<128x256xbf16, #tpu.memory_space<vmem>>, %arg7: memref<1x256xf32, #tpu.memory_space<vmem>>, %arg8: memref<8x32x128xbf16, #tpu.memory_space<vmem>>, %arg9: memref<1x128xf32, #tpu.memory_space<vmem>>, %arg10: memref<128x256xbf16, #tpu.memory_space<vmem>>, %arg11: memref<1x256xf32, #tpu.memory_space<vmem>>, %arg12: memref<9x256xf32, #tpu.memory_space<vmem>>, %arg13: memref<1x256xf32, #tpu.memory_space<vmem>>, %arg14: memref<256x128xbf16, #tpu.memory_space<vmem>>, %arg15: memref<1x128xf32, #tpu.memory_space<vmem>>, %arg16: memref<1x64x128xf32, #tpu.memory_space<vmem>>) attributes {dimension_semantics = [#tpu.dimension_semantics<parallel>], iteration_bounds = array<i64: 2>, scalar_prefetch = 0 : i64, scratch_operands = 0 : i64, tpu.core_type = #tpu.core_type<tc>, window_params = [{transform_indices = @transform_0, window_bounds = array<i64: 1, 64, 128>}, {pipeline_mode = #tpu.pipeline_mode<synchronous>, transform_indices = @transform_1, window_bounds = array<i64: 128, 128>}, {pipeline_mode = #tpu.pipeline_mode<synchronous>, transform_indices = @transform_2, window_bounds = array<i64: 1, 128>}, {pipeline_mode = #tpu.pipeline_mode<synchronous>, transform_indices = @transform_3, window_bounds = array<i64: 128, 128>}, {pipeline_mode = #tpu.pipeline_mode<synchronous>, transform_indices = @transform_4, window_bounds = array<i64: 1, 128>}, {pipeline_mode = #tpu.pipeline_mode<synchronous>, transform_indices = @transform_5, window_bounds = array<i64: 128, 256>}, {pipeline_mode = #tpu.pipeline_mode<synchronous>, transform_indices = @transform_6, window_bounds = array<i64: 1, 256>}, {pipeline_mode = #tpu.pipeline_mode<synchronous>, transform_indices = @transform_7, window_bounds = array<i64: 8, 32, 128>}, {pipeline_mode = #tpu.pipeline_mode<synchronous>, transform_indices = @transform_8, window_bounds = array<i64: 1, 128>}, {pipeline_mode = #tpu.pipeline_mode<synchronous>, transform_indices = @transform_9, window_bounds = array<i64: 128, 256>}, {pipeline_mode = #tpu.pipeline_mode<synchronous>, transform_indices = @transform_10, window_bounds = array<i64: 1, 256>}, {pipeline_mode = #tpu.pipeline_mode<synchronous>, transform_indices = @transform_11, window_bounds = array<i64: 9, 256>}, {pipeline_mode = #tpu.pipeline_mode<synchronous>, transform_indices = @transform_12, window_bounds = array<i64: 1, 256>}, {pipeline_mode = #tpu.pipeline_mode<synchronous>, transform_indices = @transform_13, window_bounds = array<i64: 256, 128>}, {pipeline_mode = #tpu.pipeline_mode<synchronous>, transform_indices = @transform_14, window_bounds = array<i64: 1, 128>}, {transform_indices = @transform_15, window_bounds = array<i64: 1, 64, 128>}]} {
    %c0 = arith.constant 0 : index
    %c0_0 = arith.constant 0 : index
    %c0_1 = arith.constant 0 : index
    %0 = vector.load %arg1[%c0, %c0_0, %c0_1] : memref<1x64x128xf32, #tpu.memory_space<vmem>>, vector<1x64x128xf32>
    %1 = vector.shape_cast %0 : vector<1x64x128xf32> to vector<64x128xf32>
    %2 = arith.truncf %1 : vector<64x128xf32> to vector<64x128xbf16>
    %c0_2 = arith.constant 0 : index
    %c0_3 = arith.constant 0 : index
    %3 = vector.load %arg2[%c0_2, %c0_3] : memref<128x128xbf16, #tpu.memory_space<vmem>>, vector<128x128xbf16>
    %cst = arith.constant dense<0.000000e+00> : vector<64x128xf32>
    %4 = tpu.matmul %2, %3, %cst {dimension_numbers = #tpu.dot_dimension_numbers<[1], [0], [0], [1], [0, 0, 1, 1], [], []>} : vector<64x128xbf16>, vector<128x128xbf16>, vector<64x128xf32> -> vector<64x128xf32>
    %c0_4 = arith.constant 0 : index
    %c0_5 = arith.constant 0 : index
    %5 = vector.load %arg3[%c0_4, %c0_5] : memref<1x128xf32, #tpu.memory_space<vmem>>, vector<1x128xf32>
    %6 = vector.broadcast %5 : vector<1x128xf32> to vector<64x128xf32>
    %7 = arith.addf %4, %6 : vector<64x128xf32>
    %c0_6 = arith.constant 0 : index
    %c0_7 = arith.constant 0 : index
    %8 = vector.load %arg4[%c0_6, %c0_7] : memref<128x128xbf16, #tpu.memory_space<vmem>>, vector<128x128xbf16>
    %cst_8 = arith.constant dense<0.000000e+00> : vector<64x128xf32>
    %9 = tpu.matmul %2, %8, %cst_8 {dimension_numbers = #tpu.dot_dimension_numbers<[1], [0], [0], [1], [0, 0, 1, 1], [], []>} : vector<64x128xbf16>, vector<128x128xbf16>, vector<64x128xf32> -> vector<64x128xf32>
    %c0_9 = arith.constant 0 : index
    %c0_10 = arith.constant 0 : index
    %10 = vector.load %arg5[%c0_9, %c0_10] : memref<1x128xf32, #tpu.memory_space<vmem>>, vector<1x128xf32>
    %11 = vector.broadcast %10 : vector<1x128xf32> to vector<64x128xf32>
    %12 = arith.addf %9, %11 : vector<64x128xf32>
    %c0_11 = arith.constant 0 : index
    %c0_12 = arith.constant 0 : index
    %13 = vector.load %arg6[%c0_11, %c0_12] : memref<128x256xbf16, #tpu.memory_space<vmem>>, vector<128x256xbf16>
    %cst_13 = arith.constant dense<0.000000e+00> : vector<64x256xf32>
    %14 = tpu.matmul %2, %13, %cst_13 {dimension_numbers = #tpu.dot_dimension_numbers<[1], [0], [0], [1], [0, 0, 1, 1], [], []>} : vector<64x128xbf16>, vector<128x256xbf16>, vector<64x256xf32> -> vector<64x256xf32>
    %c0_14 = arith.constant 0 : index
    %c0_15 = arith.constant 0 : index
    %15 = vector.load %arg7[%c0_14, %c0_15] : memref<1x256xf32, #tpu.memory_space<vmem>>, vector<1x256xf32>
    %16 = vector.broadcast %15 : vector<1x256xf32> to vector<64x256xf32>
    %17 = arith.addf %14, %16 : vector<64x256xf32>
    %18 = arith.truncf %7 : vector<64x128xf32> to vector<64x128xbf16>
    %19 = arith.truncf %12 : vector<64x128xf32> to vector<64x128xbf16>
    %20 = arith.truncf %17 : vector<64x256xf32> to vector<64x256xbf16>
    %c0_16 = arith.constant 0 : index
    %c0_17 = arith.constant 0 : index
    %21 = vector.load %arg9[%c0_16, %c0_17] : memref<1x128xf32, #tpu.memory_space<vmem>>, vector<1x128xf32>
    %cst_18 = arith.constant 0.000000e+00 : f32
    %22 = vector.broadcast %cst_18 : f32 to vector<64x128xf32>
    %23 = vector.extract_strided_slice %18 {offsets = [0, 0], sizes = [64, 16], strides = [1, 1]} : vector<64x128xbf16> to vector<64x16xbf16>
    %24 = vector.extract_strided_slice %19 {offsets = [0, 0], sizes = [64, 16], strides = [1, 1]} : vector<64x128xbf16> to vector<64x16xbf16>
    %25 = vector.extract_strided_slice %20 {offsets = [0, 0], sizes = [64, 32], strides = [1, 1]} : vector<64x256xbf16> to vector<64x32xbf16>
    %cst_19 = arith.constant dense<0.000000e+00> : vector<64x64xf32>
    %26 = tpu.matmul %23, %24, %cst_19 {dimension_numbers = #tpu.dot_dimension_numbers<[1], [1], [0], [0], [0, 0, 1, 0], [], []>} : vector<64x16xbf16>, vector<64x16xbf16>, vector<64x64xf32> -> vector<64x64xf32>
    %cst_20 = arith.constant dense<0xFF800000> : vector<64xf32>
    %27 = vector.multi_reduction <maximumf>, %26, %cst_20 [1] : vector<64x64xf32> to vector<64xf32>
    %28 = vector.shape_cast %27 : vector<64xf32> to vector<64x1xf32>
    %29 = vector.broadcast %28 : vector<64x1xf32> to vector<64x64xf32>
    %30 = arith.subf %26, %29 : vector<64x64xf32>
    %31 = math.exp %30 : vector<64x64xf32>
    %cst_21 = arith.constant dense<0.000000e+00> : vector<64xf32>
    %32 = vector.multi_reduction <add>, %31, %cst_21 [1] : vector<64x64xf32> to vector<64xf32>
    %33 = vector.shape_cast %32 : vector<64xf32> to vector<64x1xf32>
    %34 = tpu.reciprocal %33 {approx = true} : vector<64x1xf32> -> vector<64x1xf32>
    %35 = vector.broadcast %34 : vector<64x1xf32> to vector<64x64xf32>
    %36 = arith.mulf %31, %35 : vector<64x64xf32>
    %37 = arith.truncf %36 : vector<64x64xf32> to vector<64x64xbf16>
    %cst_22 = arith.constant dense<0.000000e+00> : vector<64x32xf32>
    %38 = tpu.matmul %37, %25, %cst_22 {dimension_numbers = #tpu.dot_dimension_numbers<[1], [0], [0], [1], [0, 0, 1, 1], [], []>} : vector<64x64xbf16>, vector<64x32xbf16>, vector<64x32xf32> -> vector<64x32xf32>
    %cst_23 = arith.constant 0.000000e+00 : f32
    %cst_24 = arith.constant 6.000000e+00 : f32
    %39 = vector.broadcast %cst_23 : f32 to vector<64x32xf32>
    %40 = arith.maximumf %39, %38 : vector<64x32xf32>
    %41 = vector.broadcast %cst_24 : f32 to vector<64x32xf32>
    %42 = arith.minimumf %41, %40 : vector<64x32xf32>
    %43 = arith.truncf %42 : vector<64x32xf32> to vector<64x32xbf16>
    %c0_25 = arith.constant 0 : index
    %c0_26 = arith.constant 0 : index
    %c0_27 = arith.constant 0 : index
    %44 = vector.load %arg8[%c0_25, %c0_26, %c0_27] : memref<8x32x128xbf16, #tpu.memory_space<vmem>>, vector<1x32x128xbf16>
    %45 = vector.shape_cast %44 : vector<1x32x128xbf16> to vector<32x128xbf16>
    %cst_28 = arith.constant dense<0.000000e+00> : vector<64x128xf32>
    %46 = tpu.matmul %43, %45, %cst_28 {dimension_numbers = #tpu.dot_dimension_numbers<[1], [0], [0], [1], [0, 0, 1, 1], [], []>} : vector<64x32xbf16>, vector<32x128xbf16>, vector<64x128xf32> -> vector<64x128xf32>
    %47 = arith.addf %22, %46 : vector<64x128xf32>
    %48 = vector.extract_strided_slice %18 {offsets = [0, 16], sizes = [64, 16], strides = [1, 1]} : vector<64x128xbf16> to vector<64x16xbf16>
    %49 = vector.extract_strided_slice %19 {offsets = [0, 16], sizes = [64, 16], strides = [1, 1]} : vector<64x128xbf16> to vector<64x16xbf16>
    %50 = vector.extract_strided_slice %20 {offsets = [0, 32], sizes = [64, 32], strides = [1, 1]} : vector<64x256xbf16> to vector<64x32xbf16>
    %cst_29 = arith.constant dense<0.000000e+00> : vector<64x64xf32>
    %51 = tpu.matmul %48, %49, %cst_29 {dimension_numbers = #tpu.dot_dimension_numbers<[1], [1], [0], [0], [0, 0, 1, 0], [], []>} : vector<64x16xbf16>, vector<64x16xbf16>, vector<64x64xf32> -> vector<64x64xf32>
    %cst_30 = arith.constant dense<0xFF800000> : vector<64xf32>
    %52 = vector.multi_reduction <maximumf>, %51, %cst_30 [1] : vector<64x64xf32> to vector<64xf32>
    %53 = vector.shape_cast %52 : vector<64xf32> to vector<64x1xf32>
    %54 = vector.broadcast %53 : vector<64x1xf32> to vector<64x64xf32>
    %55 = arith.subf %51, %54 : vector<64x64xf32>
    %56 = math.exp %55 : vector<64x64xf32>
    %cst_31 = arith.constant dense<0.000000e+00> : vector<64xf32>
    %57 = vector.multi_reduction <add>, %56, %cst_31 [1] : vector<64x64xf32> to vector<64xf32>
    %58 = vector.shape_cast %57 : vector<64xf32> to vector<64x1xf32>
    %59 = tpu.reciprocal %58 {approx = true} : vector<64x1xf32> -> vector<64x1xf32>
    %60 = vector.broadcast %59 : vector<64x1xf32> to vector<64x64xf32>
    %61 = arith.mulf %56, %60 : vector<64x64xf32>
    %62 = arith.truncf %61 : vector<64x64xf32> to vector<64x64xbf16>
    %cst_32 = arith.constant dense<0.000000e+00> : vector<64x32xf32>
    %63 = tpu.matmul %62, %50, %cst_32 {dimension_numbers = #tpu.dot_dimension_numbers<[1], [0], [0], [1], [0, 0, 1, 1], [], []>} : vector<64x64xbf16>, vector<64x32xbf16>, vector<64x32xf32> -> vector<64x32xf32>
    %cst_33 = arith.constant 0.000000e+00 : f32
    %cst_34 = arith.constant 6.000000e+00 : f32
    %64 = vector.broadcast %cst_33 : f32 to vector<64x32xf32>
    %65 = arith.maximumf %64, %63 : vector<64x32xf32>
    %66 = vector.broadcast %cst_34 : f32 to vector<64x32xf32>
    %67 = arith.minimumf %66, %65 : vector<64x32xf32>
    %68 = arith.truncf %67 : vector<64x32xf32> to vector<64x32xbf16>
    %c1 = arith.constant 1 : index
    %c0_35 = arith.constant 0 : index
    %c0_36 = arith.constant 0 : index
    %69 = vector.load %arg8[%c1, %c0_35, %c0_36] : memref<8x32x128xbf16, #tpu.memory_space<vmem>>, vector<1x32x128xbf16>
    %70 = vector.shape_cast %69 : vector<1x32x128xbf16> to vector<32x128xbf16>
    %cst_37 = arith.constant dense<0.000000e+00> : vector<64x128xf32>
    %71 = tpu.matmul %68, %70, %cst_37 {dimension_numbers = #tpu.dot_dimension_numbers<[1], [0], [0], [1], [0, 0, 1, 1], [], []>} : vector<64x32xbf16>, vector<32x128xbf16>, vector<64x128xf32> -> vector<64x128xf32>
    %72 = arith.addf %47, %71 : vector<64x128xf32>
    %73 = vector.extract_strided_slice %18 {offsets = [0, 32], sizes = [64, 16], strides = [1, 1]} : vector<64x128xbf16> to vector<64x16xbf16>
    %74 = vector.extract_strided_slice %19 {offsets = [0, 32], sizes = [64, 16], strides = [1, 1]} : vector<64x128xbf16> to vector<64x16xbf16>
    %75 = vector.extract_strided_slice %20 {offsets = [0, 64], sizes = [64, 32], strides = [1, 1]} : vector<64x256xbf16> to vector<64x32xbf16>
    %cst_38 = arith.constant dense<0.000000e+00> : vector<64x64xf32>
    %76 = tpu.matmul %73, %74, %cst_38 {dimension_numbers = #tpu.dot_dimension_numbers<[1], [1], [0], [0], [0, 0, 1, 0], [], []>} : vector<64x16xbf16>, vector<64x16xbf16>, vector<64x64xf32> -> vector<64x64xf32>
    %cst_39 = arith.constant dense<0xFF800000> : vector<64xf32>
    %77 = vector.multi_reduction <maximumf>, %76, %cst_39 [1] : vector<64x64xf32> to vector<64xf32>
    %78 = vector.shape_cast %77 : vector<64xf32> to vector<64x1xf32>
    %79 = vector.broadcast %78 : vector<64x1xf32> to vector<64x64xf32>
    %80 = arith.subf %76, %79 : vector<64x64xf32>
    %81 = math.exp %80 : vector<64x64xf32>
    %cst_40 = arith.constant dense<0.000000e+00> : vector<64xf32>
    %82 = vector.multi_reduction <add>, %81, %cst_40 [1] : vector<64x64xf32> to vector<64xf32>
    %83 = vector.shape_cast %82 : vector<64xf32> to vector<64x1xf32>
    %84 = tpu.reciprocal %83 {approx = true} : vector<64x1xf32> -> vector<64x1xf32>
    %85 = vector.broadcast %84 : vector<64x1xf32> to vector<64x64xf32>
    %86 = arith.mulf %81, %85 : vector<64x64xf32>
    %87 = arith.truncf %86 : vector<64x64xf32> to vector<64x64xbf16>
    %cst_41 = arith.constant dense<0.000000e+00> : vector<64x32xf32>
    %88 = tpu.matmul %87, %75, %cst_41 {dimension_numbers = #tpu.dot_dimension_numbers<[1], [0], [0], [1], [0, 0, 1, 1], [], []>} : vector<64x64xbf16>, vector<64x32xbf16>, vector<64x32xf32> -> vector<64x32xf32>
    %cst_42 = arith.constant 0.000000e+00 : f32
    %cst_43 = arith.constant 6.000000e+00 : f32
    %89 = vector.broadcast %cst_42 : f32 to vector<64x32xf32>
    %90 = arith.maximumf %89, %88 : vector<64x32xf32>
    %91 = vector.broadcast %cst_43 : f32 to vector<64x32xf32>
    %92 = arith.minimumf %91, %90 : vector<64x32xf32>
    %93 = arith.truncf %92 : vector<64x32xf32> to vector<64x32xbf16>
    %c2 = arith.constant 2 : index
    %c0_44 = arith.constant 0 : index
    %c0_45 = arith.constant 0 : index
    %94 = vector.load %arg8[%c2, %c0_44, %c0_45] : memref<8x32x128xbf16, #tpu.memory_space<vmem>>, vector<1x32x128xbf16>
    %95 = vector.shape_cast %94 : vector<1x32x128xbf16> to vector<32x128xbf16>
    %cst_46 = arith.constant dense<0.000000e+00> : vector<64x128xf32>
    %96 = tpu.matmul %93, %95, %cst_46 {dimension_numbers = #tpu.dot_dimension_numbers<[1], [0], [0], [1], [0, 0, 1, 1], [], []>} : vector<64x32xbf16>, vector<32x128xbf16>, vector<64x128xf32> -> vector<64x128xf32>
    %97 = arith.addf %72, %96 : vector<64x128xf32>
    %98 = vector.extract_strided_slice %18 {offsets = [0, 48], sizes = [64, 16], strides = [1, 1]} : vector<64x128xbf16> to vector<64x16xbf16>
    %99 = vector.extract_strided_slice %19 {offsets = [0, 48], sizes = [64, 16], strides = [1, 1]} : vector<64x128xbf16> to vector<64x16xbf16>
    %100 = vector.extract_strided_slice %20 {offsets = [0, 96], sizes = [64, 32], strides = [1, 1]} : vector<64x256xbf16> to vector<64x32xbf16>
    %cst_47 = arith.constant dense<0.000000e+00> : vector<64x64xf32>
    %101 = tpu.matmul %98, %99, %cst_47 {dimension_numbers = #tpu.dot_dimension_numbers<[1], [1], [0], [0], [0, 0, 1, 0], [], []>} : vector<64x16xbf16>, vector<64x16xbf16>, vector<64x64xf32> -> vector<64x64xf32>
    %cst_48 = arith.constant dense<0xFF800000> : vector<64xf32>
    %102 = vector.multi_reduction <maximumf>, %101, %cst_48 [1] : vector<64x64xf32> to vector<64xf32>
    %103 = vector.shape_cast %102 : vector<64xf32> to vector<64x1xf32>
    %104 = vector.broadcast %103 : vector<64x1xf32> to vector<64x64xf32>
    %105 = arith.subf %101, %104 : vector<64x64xf32>
    %106 = math.exp %105 : vector<64x64xf32>
    %cst_49 = arith.constant dense<0.000000e+00> : vector<64xf32>
    %107 = vector.multi_reduction <add>, %106, %cst_49 [1] : vector<64x64xf32> to vector<64xf32>
    %108 = vector.shape_cast %107 : vector<64xf32> to vector<64x1xf32>
    %109 = tpu.reciprocal %108 {approx = true} : vector<64x1xf32> -> vector<64x1xf32>
    %110 = vector.broadcast %109 : vector<64x1xf32> to vector<64x64xf32>
    %111 = arith.mulf %106, %110 : vector<64x64xf32>
    %112 = arith.truncf %111 : vector<64x64xf32> to vector<64x64xbf16>
    %cst_50 = arith.constant dense<0.000000e+00> : vector<64x32xf32>
    %113 = tpu.matmul %112, %100, %cst_50 {dimension_numbers = #tpu.dot_dimension_numbers<[1], [0], [0], [1], [0, 0, 1, 1], [], []>} : vector<64x64xbf16>, vector<64x32xbf16>, vector<64x32xf32> -> vector<64x32xf32>
    %cst_51 = arith.constant 0.000000e+00 : f32
    %cst_52 = arith.constant 6.000000e+00 : f32
    %114 = vector.broadcast %cst_51 : f32 to vector<64x32xf32>
    %115 = arith.maximumf %114, %113 : vector<64x32xf32>
    %116 = vector.broadcast %cst_52 : f32 to vector<64x32xf32>
    %117 = arith.minimumf %116, %115 : vector<64x32xf32>
    %118 = arith.truncf %117 : vector<64x32xf32> to vector<64x32xbf16>
    %c3 = arith.constant 3 : index
    %c0_53 = arith.constant 0 : index
    %c0_54 = arith.constant 0 : index
    %119 = vector.load %arg8[%c3, %c0_53, %c0_54] : memref<8x32x128xbf16, #tpu.memory_space<vmem>>, vector<1x32x128xbf16>
    %120 = vector.shape_cast %119 : vector<1x32x128xbf16> to vector<32x128xbf16>
    %cst_55 = arith.constant dense<0.000000e+00> : vector<64x128xf32>
    %121 = tpu.matmul %118, %120, %cst_55 {dimension_numbers = #tpu.dot_dimension_numbers<[1], [0], [0], [1], [0, 0, 1, 1], [], []>} : vector<64x32xbf16>, vector<32x128xbf16>, vector<64x128xf32> -> vector<64x128xf32>
    %122 = arith.addf %97, %121 : vector<64x128xf32>
    %123 = vector.extract_strided_slice %18 {offsets = [0, 64], sizes = [64, 16], strides = [1, 1]} : vector<64x128xbf16> to vector<64x16xbf16>
    %124 = vector.extract_strided_slice %19 {offsets = [0, 64], sizes = [64, 16], strides = [1, 1]} : vector<64x128xbf16> to vector<64x16xbf16>
    %125 = vector.extract_strided_slice %20 {offsets = [0, 128], sizes = [64, 32], strides = [1, 1]} : vector<64x256xbf16> to vector<64x32xbf16>
    %cst_56 = arith.constant dense<0.000000e+00> : vector<64x64xf32>
    %126 = tpu.matmul %123, %124, %cst_56 {dimension_numbers = #tpu.dot_dimension_numbers<[1], [1], [0], [0], [0, 0, 1, 0], [], []>} : vector<64x16xbf16>, vector<64x16xbf16>, vector<64x64xf32> -> vector<64x64xf32>
    %cst_57 = arith.constant dense<0xFF800000> : vector<64xf32>
    %127 = vector.multi_reduction <maximumf>, %126, %cst_57 [1] : vector<64x64xf32> to vector<64xf32>
    %128 = vector.shape_cast %127 : vector<64xf32> to vector<64x1xf32>
    %129 = vector.broadcast %128 : vector<64x1xf32> to vector<64x64xf32>
    %130 = arith.subf %126, %129 : vector<64x64xf32>
    %131 = math.exp %130 : vector<64x64xf32>
    %cst_58 = arith.constant dense<0.000000e+00> : vector<64xf32>
    %132 = vector.multi_reduction <add>, %131, %cst_58 [1] : vector<64x64xf32> to vector<64xf32>
    %133 = vector.shape_cast %132 : vector<64xf32> to vector<64x1xf32>
    %134 = tpu.reciprocal %133 {approx = true} : vector<64x1xf32> -> vector<64x1xf32>
    %135 = vector.broadcast %134 : vector<64x1xf32> to vector<64x64xf32>
    %136 = arith.mulf %131, %135 : vector<64x64xf32>
    %137 = arith.truncf %136 : vector<64x64xf32> to vector<64x64xbf16>
    %cst_59 = arith.constant dense<0.000000e+00> : vector<64x32xf32>
    %138 = tpu.matmul %137, %125, %cst_59 {dimension_numbers = #tpu.dot_dimension_numbers<[1], [0], [0], [1], [0, 0, 1, 1], [], []>} : vector<64x64xbf16>, vector<64x32xbf16>, vector<64x32xf32> -> vector<64x32xf32>
    %cst_60 = arith.constant 0.000000e+00 : f32
    %cst_61 = arith.constant 6.000000e+00 : f32
    %139 = vector.broadcast %cst_60 : f32 to vector<64x32xf32>
    %140 = arith.maximumf %139, %138 : vector<64x32xf32>
    %141 = vector.broadcast %cst_61 : f32 to vector<64x32xf32>
    %142 = arith.minimumf %141, %140 : vector<64x32xf32>
    %143 = arith.truncf %142 : vector<64x32xf32> to vector<64x32xbf16>
    %c4 = arith.constant 4 : index
    %c0_62 = arith.constant 0 : index
    %c0_63 = arith.constant 0 : index
    %144 = vector.load %arg8[%c4, %c0_62, %c0_63] : memref<8x32x128xbf16, #tpu.memory_space<vmem>>, vector<1x32x128xbf16>
    %145 = vector.shape_cast %144 : vector<1x32x128xbf16> to vector<32x128xbf16>
    %cst_64 = arith.constant dense<0.000000e+00> : vector<64x128xf32>
    %146 = tpu.matmul %143, %145, %cst_64 {dimension_numbers = #tpu.dot_dimension_numbers<[1], [0], [0], [1], [0, 0, 1, 1], [], []>} : vector<64x32xbf16>, vector<32x128xbf16>, vector<64x128xf32> -> vector<64x128xf32>
    %147 = arith.addf %122, %146 : vector<64x128xf32>
    %148 = vector.extract_strided_slice %18 {offsets = [0, 80], sizes = [64, 16], strides = [1, 1]} : vector<64x128xbf16> to vector<64x16xbf16>
    %149 = vector.extract_strided_slice %19 {offsets = [0, 80], sizes = [64, 16], strides = [1, 1]} : vector<64x128xbf16> to vector<64x16xbf16>
    %150 = vector.extract_strided_slice %20 {offsets = [0, 160], sizes = [64, 32], strides = [1, 1]} : vector<64x256xbf16> to vector<64x32xbf16>
    %cst_65 = arith.constant dense<0.000000e+00> : vector<64x64xf32>
    %151 = tpu.matmul %148, %149, %cst_65 {dimension_numbers = #tpu.dot_dimension_numbers<[1], [1], [0], [0], [0, 0, 1, 0], [], []>} : vector<64x16xbf16>, vector<64x16xbf16>, vector<64x64xf32> -> vector<64x64xf32>
    %cst_66 = arith.constant dense<0xFF800000> : vector<64xf32>
    %152 = vector.multi_reduction <maximumf>, %151, %cst_66 [1] : vector<64x64xf32> to vector<64xf32>
    %153 = vector.shape_cast %152 : vector<64xf32> to vector<64x1xf32>
    %154 = vector.broadcast %153 : vector<64x1xf32> to vector<64x64xf32>
    %155 = arith.subf %151, %154 : vector<64x64xf32>
    %156 = math.exp %155 : vector<64x64xf32>
    %cst_67 = arith.constant dense<0.000000e+00> : vector<64xf32>
    %157 = vector.multi_reduction <add>, %156, %cst_67 [1] : vector<64x64xf32> to vector<64xf32>
    %158 = vector.shape_cast %157 : vector<64xf32> to vector<64x1xf32>
    %159 = tpu.reciprocal %158 {approx = true} : vector<64x1xf32> -> vector<64x1xf32>
    %160 = vector.broadcast %159 : vector<64x1xf32> to vector<64x64xf32>
    %161 = arith.mulf %156, %160 : vector<64x64xf32>
    %162 = arith.truncf %161 : vector<64x64xf32> to vector<64x64xbf16>
    %cst_68 = arith.constant dense<0.000000e+00> : vector<64x32xf32>
    %163 = tpu.matmul %162, %150, %cst_68 {dimension_numbers = #tpu.dot_dimension_numbers<[1], [0], [0], [1], [0, 0, 1, 1], [], []>} : vector<64x64xbf16>, vector<64x32xbf16>, vector<64x32xf32> -> vector<64x32xf32>
    %cst_69 = arith.constant 0.000000e+00 : f32
    %cst_70 = arith.constant 6.000000e+00 : f32
    %164 = vector.broadcast %cst_69 : f32 to vector<64x32xf32>
    %165 = arith.maximumf %164, %163 : vector<64x32xf32>
    %166 = vector.broadcast %cst_70 : f32 to vector<64x32xf32>
    %167 = arith.minimumf %166, %165 : vector<64x32xf32>
    %168 = arith.truncf %167 : vector<64x32xf32> to vector<64x32xbf16>
    %c5 = arith.constant 5 : index
    %c0_71 = arith.constant 0 : index
    %c0_72 = arith.constant 0 : index
    %169 = vector.load %arg8[%c5, %c0_71, %c0_72] : memref<8x32x128xbf16, #tpu.memory_space<vmem>>, vector<1x32x128xbf16>
    %170 = vector.shape_cast %169 : vector<1x32x128xbf16> to vector<32x128xbf16>
    %cst_73 = arith.constant dense<0.000000e+00> : vector<64x128xf32>
    %171 = tpu.matmul %168, %170, %cst_73 {dimension_numbers = #tpu.dot_dimension_numbers<[1], [0], [0], [1], [0, 0, 1, 1], [], []>} : vector<64x32xbf16>, vector<32x128xbf16>, vector<64x128xf32> -> vector<64x128xf32>
    %172 = arith.addf %147, %171 : vector<64x128xf32>
    %173 = vector.extract_strided_slice %18 {offsets = [0, 96], sizes = [64, 16], strides = [1, 1]} : vector<64x128xbf16> to vector<64x16xbf16>
    %174 = vector.extract_strided_slice %19 {offsets = [0, 96], sizes = [64, 16], strides = [1, 1]} : vector<64x128xbf16> to vector<64x16xbf16>
    %175 = vector.extract_strided_slice %20 {offsets = [0, 192], sizes = [64, 32], strides = [1, 1]} : vector<64x256xbf16> to vector<64x32xbf16>
    %cst_74 = arith.constant dense<0.000000e+00> : vector<64x64xf32>
    %176 = tpu.matmul %173, %174, %cst_74 {dimension_numbers = #tpu.dot_dimension_numbers<[1], [1], [0], [0], [0, 0, 1, 0], [], []>} : vector<64x16xbf16>, vector<64x16xbf16>, vector<64x64xf32> -> vector<64x64xf32>
    %cst_75 = arith.constant dense<0xFF800000> : vector<64xf32>
    %177 = vector.multi_reduction <maximumf>, %176, %cst_75 [1] : vector<64x64xf32> to vector<64xf32>
    %178 = vector.shape_cast %177 : vector<64xf32> to vector<64x1xf32>
    %179 = vector.broadcast %178 : vector<64x1xf32> to vector<64x64xf32>
    %180 = arith.subf %176, %179 : vector<64x64xf32>
    %181 = math.exp %180 : vector<64x64xf32>
    %cst_76 = arith.constant dense<0.000000e+00> : vector<64xf32>
    %182 = vector.multi_reduction <add>, %181, %cst_76 [1] : vector<64x64xf32> to vector<64xf32>
    %183 = vector.shape_cast %182 : vector<64xf32> to vector<64x1xf32>
    %184 = tpu.reciprocal %183 {approx = true} : vector<64x1xf32> -> vector<64x1xf32>
    %185 = vector.broadcast %184 : vector<64x1xf32> to vector<64x64xf32>
    %186 = arith.mulf %181, %185 : vector<64x64xf32>
    %187 = arith.truncf %186 : vector<64x64xf32> to vector<64x64xbf16>
    %cst_77 = arith.constant dense<0.000000e+00> : vector<64x32xf32>
    %188 = tpu.matmul %187, %175, %cst_77 {dimension_numbers = #tpu.dot_dimension_numbers<[1], [0], [0], [1], [0, 0, 1, 1], [], []>} : vector<64x64xbf16>, vector<64x32xbf16>, vector<64x32xf32> -> vector<64x32xf32>
    %cst_78 = arith.constant 0.000000e+00 : f32
    %cst_79 = arith.constant 6.000000e+00 : f32
    %189 = vector.broadcast %cst_78 : f32 to vector<64x32xf32>
    %190 = arith.maximumf %189, %188 : vector<64x32xf32>
    %191 = vector.broadcast %cst_79 : f32 to vector<64x32xf32>
    %192 = arith.minimumf %191, %190 : vector<64x32xf32>
    %193 = arith.truncf %192 : vector<64x32xf32> to vector<64x32xbf16>
    %c6 = arith.constant 6 : index
    %c0_80 = arith.constant 0 : index
    %c0_81 = arith.constant 0 : index
    %194 = vector.load %arg8[%c6, %c0_80, %c0_81] : memref<8x32x128xbf16, #tpu.memory_space<vmem>>, vector<1x32x128xbf16>
    %195 = vector.shape_cast %194 : vector<1x32x128xbf16> to vector<32x128xbf16>
    %cst_82 = arith.constant dense<0.000000e+00> : vector<64x128xf32>
    %196 = tpu.matmul %193, %195, %cst_82 {dimension_numbers = #tpu.dot_dimension_numbers<[1], [0], [0], [1], [0, 0, 1, 1], [], []>} : vector<64x32xbf16>, vector<32x128xbf16>, vector<64x128xf32> -> vector<64x128xf32>
    %197 = arith.addf %172, %196 : vector<64x128xf32>
    %198 = vector.extract_strided_slice %18 {offsets = [0, 112], sizes = [64, 16], strides = [1, 1]} : vector<64x128xbf16> to vector<64x16xbf16>
    %199 = vector.extract_strided_slice %19 {offsets = [0, 112], sizes = [64, 16], strides = [1, 1]} : vector<64x128xbf16> to vector<64x16xbf16>
    %200 = vector.extract_strided_slice %20 {offsets = [0, 224], sizes = [64, 32], strides = [1, 1]} : vector<64x256xbf16> to vector<64x32xbf16>
    %cst_83 = arith.constant dense<0.000000e+00> : vector<64x64xf32>
    %201 = tpu.matmul %198, %199, %cst_83 {dimension_numbers = #tpu.dot_dimension_numbers<[1], [1], [0], [0], [0, 0, 1, 0], [], []>} : vector<64x16xbf16>, vector<64x16xbf16>, vector<64x64xf32> -> vector<64x64xf32>
    %cst_84 = arith.constant dense<0xFF800000> : vector<64xf32>
    %202 = vector.multi_reduction <maximumf>, %201, %cst_84 [1] : vector<64x64xf32> to vector<64xf32>
    %203 = vector.shape_cast %202 : vector<64xf32> to vector<64x1xf32>
    %204 = vector.broadcast %203 : vector<64x1xf32> to vector<64x64xf32>
    %205 = arith.subf %201, %204 : vector<64x64xf32>
    %206 = math.exp %205 : vector<64x64xf32>
    %cst_85 = arith.constant dense<0.000000e+00> : vector<64xf32>
    %207 = vector.multi_reduction <add>, %206, %cst_85 [1] : vector<64x64xf32> to vector<64xf32>
    %208 = vector.shape_cast %207 : vector<64xf32> to vector<64x1xf32>
    %209 = tpu.reciprocal %208 {approx = true} : vector<64x1xf32> -> vector<64x1xf32>
    %210 = vector.broadcast %209 : vector<64x1xf32> to vector<64x64xf32>
    %211 = arith.mulf %206, %210 : vector<64x64xf32>
    %212 = arith.truncf %211 : vector<64x64xf32> to vector<64x64xbf16>
    %cst_86 = arith.constant dense<0.000000e+00> : vector<64x32xf32>
    %213 = tpu.matmul %212, %200, %cst_86 {dimension_numbers = #tpu.dot_dimension_numbers<[1], [0], [0], [1], [0, 0, 1, 1], [], []>} : vector<64x64xbf16>, vector<64x32xbf16>, vector<64x32xf32> -> vector<64x32xf32>
    %cst_87 = arith.constant 0.000000e+00 : f32
    %cst_88 = arith.constant 6.000000e+00 : f32
    %214 = vector.broadcast %cst_87 : f32 to vector<64x32xf32>
    %215 = arith.maximumf %214, %213 : vector<64x32xf32>
    %216 = vector.broadcast %cst_88 : f32 to vector<64x32xf32>
    %217 = arith.minimumf %216, %215 : vector<64x32xf32>
    %218 = arith.truncf %217 : vector<64x32xf32> to vector<64x32xbf16>
    %c7 = arith.constant 7 : index
    %c0_89 = arith.constant 0 : index
    %c0_90 = arith.constant 0 : index
    %219 = vector.load %arg8[%c7, %c0_89, %c0_90] : memref<8x32x128xbf16, #tpu.memory_space<vmem>>, vector<1x32x128xbf16>
    %220 = vector.shape_cast %219 : vector<1x32x128xbf16> to vector<32x128xbf16>
    %cst_91 = arith.constant dense<0.000000e+00> : vector<64x128xf32>
    %221 = tpu.matmul %218, %220, %cst_91 {dimension_numbers = #tpu.dot_dimension_numbers<[1], [0], [0], [1], [0, 0, 1, 1], [], []>} : vector<64x32xbf16>, vector<32x128xbf16>, vector<64x128xf32> -> vector<64x128xf32>
    %222 = arith.addf %197, %221 : vector<64x128xf32>
    %223 = vector.broadcast %21 : vector<1x128xf32> to vector<64x128xf32>
    %224 = arith.addf %222, %223 : vector<64x128xf32>
    %225 = arith.addf %1, %224 : vector<64x128xf32>
    %226 = arith.truncf %225 : vector<64x128xf32> to vector<64x128xbf16>
    %c0_92 = arith.constant 0 : index
    %c0_93 = arith.constant 0 : index
    %227 = vector.load %arg10[%c0_92, %c0_93] : memref<128x256xbf16, #tpu.memory_space<vmem>>, vector<128x256xbf16>
    %cst_94 = arith.constant dense<0.000000e+00> : vector<64x256xf32>
    %228 = tpu.matmul %226, %227, %cst_94 {dimension_numbers = #tpu.dot_dimension_numbers<[1], [0], [0], [1], [0, 0, 1, 1], [], []>} : vector<64x128xbf16>, vector<128x256xbf16>, vector<64x256xf32> -> vector<64x256xf32>
    %c0_95 = arith.constant 0 : index
    %c0_96 = arith.constant 0 : index
    %229 = vector.load %arg11[%c0_95, %c0_96] : memref<1x256xf32, #tpu.memory_space<vmem>>, vector<1x256xf32>
    %230 = vector.broadcast %229 : vector<1x256xf32> to vector<64x256xf32>
    %231 = arith.addf %228, %230 : vector<64x256xf32>
    %c0_97 = arith.constant 0 : index
    %c0_98 = arith.constant 0 : index
    %232 = vector.load %arg12[%c0_97, %c0_98] : memref<9x256xf32, #tpu.memory_space<vmem>>, vector<9x256xf32>
    %c0_99 = arith.constant 0 : index
    %c0_100 = arith.constant 0 : index
    %233 = vector.load %arg13[%c0_99, %c0_100] : memref<1x256xf32, #tpu.memory_space<vmem>>, vector<1x256xf32>
    %234 = vector.shape_cast %231 : vector<64x256xf32> to vector<8x8x256xf32>
    %235 = vector.extract_strided_slice %234 {offsets = [0, 0, 0], sizes = [8, 8, 128], strides = [1, 1, 1]} : vector<8x8x256xf32> to vector<8x8x128xf32>
    %cst_101 = arith.constant 0.000000e+00 : f32
    %236 = vector.broadcast %cst_101 : f32 to vector<8x1x128xf32>
    %237 = vector.extract_strided_slice %235 {offsets = [0, 0, 0], sizes = [8, 7, 128], strides = [1, 1, 1]} : vector<8x8x128xf32> to vector<8x7x128xf32>
    %238 = tpu.concatenate %236, %237 in 1 : vector<8x1x128xf32>, vector<8x7x128xf32> -> vector<8x8x128xf32>
    %cst_102 = arith.constant 0.000000e+00 : f32
    %239 = vector.broadcast %cst_102 : f32 to vector<8x1x128xf32>
    %240 = vector.extract_strided_slice %235 {offsets = [0, 1, 0], sizes = [8, 7, 128], strides = [1, 1, 1]} : vector<8x8x128xf32> to vector<8x7x128xf32>
    %241 = tpu.concatenate %240, %239 in 1 : vector<8x7x128xf32>, vector<8x1x128xf32> -> vector<8x8x128xf32>
    %cst_103 = arith.constant 0.000000e+00 : f32
    %242 = vector.broadcast %cst_103 : f32 to vector<8x8x128xf32>
    %cst_104 = arith.constant 0.000000e+00 : f32
    %243 = vector.broadcast %cst_104 : f32 to vector<1x8x128xf32>
    %244 = vector.extract_strided_slice %238 {offsets = [0, 0, 0], sizes = [7, 8, 128], strides = [1, 1, 1]} : vector<8x8x128xf32> to vector<7x8x128xf32>
    %245 = tpu.concatenate %243, %244 in 0 : vector<1x8x128xf32>, vector<7x8x128xf32> -> vector<8x8x128xf32>
    %246 = vector.extract_strided_slice %232 {offsets = [0, 0], sizes = [1, 128], strides = [1, 1]} : vector<9x256xf32> to vector<1x128xf32>
    %247 = vector.shape_cast %246 : vector<1x128xf32> to vector<1x1x128xf32>
    %248 = vector.broadcast %247 : vector<1x1x128xf32> to vector<8x8x128xf32>
    %249 = arith.mulf %245, %248 : vector<8x8x128xf32>
    %250 = arith.addf %242, %249 : vector<8x8x128xf32>
    %cst_105 = arith.constant 0.000000e+00 : f32
    %251 = vector.broadcast %cst_105 : f32 to vector<1x8x128xf32>
    %252 = vector.extract_strided_slice %235 {offsets = [0, 0, 0], sizes = [7, 8, 128], strides = [1, 1, 1]} : vector<8x8x128xf32> to vector<7x8x128xf32>
    %253 = tpu.concatenate %251, %252 in 0 : vector<1x8x128xf32>, vector<7x8x128xf32> -> vector<8x8x128xf32>
    %254 = vector.extract_strided_slice %232 {offsets = [1, 0], sizes = [1, 128], strides = [1, 1]} : vector<9x256xf32> to vector<1x128xf32>
    %255 = vector.shape_cast %254 : vector<1x128xf32> to vector<1x1x128xf32>
    %256 = vector.broadcast %255 : vector<1x1x128xf32> to vector<8x8x128xf32>
    %257 = arith.mulf %253, %256 : vector<8x8x128xf32>
    %258 = arith.addf %250, %257 : vector<8x8x128xf32>
    %cst_106 = arith.constant 0.000000e+00 : f32
    %259 = vector.broadcast %cst_106 : f32 to vector<1x8x128xf32>
    %260 = vector.extract_strided_slice %241 {offsets = [0, 0, 0], sizes = [7, 8, 128], strides = [1, 1, 1]} : vector<8x8x128xf32> to vector<7x8x128xf32>
    %261 = tpu.concatenate %259, %260 in 0 : vector<1x8x128xf32>, vector<7x8x128xf32> -> vector<8x8x128xf32>
    %262 = vector.extract_strided_slice %232 {offsets = [2, 0], sizes = [1, 128], strides = [1, 1]} : vector<9x256xf32> to vector<1x128xf32>
    %263 = vector.shape_cast %262 : vector<1x128xf32> to vector<1x1x128xf32>
    %264 = vector.broadcast %263 : vector<1x1x128xf32> to vector<8x8x128xf32>
    %265 = arith.mulf %261, %264 : vector<8x8x128xf32>
    %266 = arith.addf %258, %265 : vector<8x8x128xf32>
    %267 = vector.extract_strided_slice %232 {offsets = [3, 0], sizes = [1, 128], strides = [1, 1]} : vector<9x256xf32> to vector<1x128xf32>
    %268 = vector.shape_cast %267 : vector<1x128xf32> to vector<1x1x128xf32>
    %269 = vector.broadcast %268 : vector<1x1x128xf32> to vector<8x8x128xf32>
    %270 = arith.mulf %238, %269 : vector<8x8x128xf32>
    %271 = arith.addf %266, %270 : vector<8x8x128xf32>
    %272 = vector.extract_strided_slice %232 {offsets = [4, 0], sizes = [1, 128], strides = [1, 1]} : vector<9x256xf32> to vector<1x128xf32>
    %273 = vector.shape_cast %272 : vector<1x128xf32> to vector<1x1x128xf32>
    %274 = vector.broadcast %273 : vector<1x1x128xf32> to vector<8x8x128xf32>
    %275 = arith.mulf %235, %274 : vector<8x8x128xf32>
    %276 = arith.addf %271, %275 : vector<8x8x128xf32>
    %277 = vector.extract_strided_slice %232 {offsets = [5, 0], sizes = [1, 128], strides = [1, 1]} : vector<9x256xf32> to vector<1x128xf32>
    %278 = vector.shape_cast %277 : vector<1x128xf32> to vector<1x1x128xf32>
    %279 = vector.broadcast %278 : vector<1x1x128xf32> to vector<8x8x128xf32>
    %280 = arith.mulf %241, %279 : vector<8x8x128xf32>
    %281 = arith.addf %276, %280 : vector<8x8x128xf32>
    %cst_107 = arith.constant 0.000000e+00 : f32
    %282 = vector.broadcast %cst_107 : f32 to vector<1x8x128xf32>
    %283 = vector.extract_strided_slice %238 {offsets = [1, 0, 0], sizes = [7, 8, 128], strides = [1, 1, 1]} : vector<8x8x128xf32> to vector<7x8x128xf32>
    %284 = tpu.concatenate %283, %282 in 0 : vector<7x8x128xf32>, vector<1x8x128xf32> -> vector<8x8x128xf32>
    %285 = vector.extract_strided_slice %232 {offsets = [6, 0], sizes = [1, 128], strides = [1, 1]} : vector<9x256xf32> to vector<1x128xf32>
    %286 = vector.shape_cast %285 : vector<1x128xf32> to vector<1x1x128xf32>
    %287 = vector.broadcast %286 : vector<1x1x128xf32> to vector<8x8x128xf32>
    %288 = arith.mulf %284, %287 : vector<8x8x128xf32>
    %289 = arith.addf %281, %288 : vector<8x8x128xf32>
    %cst_108 = arith.constant 0.000000e+00 : f32
    %290 = vector.broadcast %cst_108 : f32 to vector<1x8x128xf32>
    %291 = vector.extract_strided_slice %235 {offsets = [1, 0, 0], sizes = [7, 8, 128], strides = [1, 1, 1]} : vector<8x8x128xf32> to vector<7x8x128xf32>
    %292 = tpu.concatenate %291, %290 in 0 : vector<7x8x128xf32>, vector<1x8x128xf32> -> vector<8x8x128xf32>
    %293 = vector.extract_strided_slice %232 {offsets = [7, 0], sizes = [1, 128], strides = [1, 1]} : vector<9x256xf32> to vector<1x128xf32>
    %294 = vector.shape_cast %293 : vector<1x128xf32> to vector<1x1x128xf32>
    %295 = vector.broadcast %294 : vector<1x1x128xf32> to vector<8x8x128xf32>
    %296 = arith.mulf %292, %295 : vector<8x8x128xf32>
    %297 = arith.addf %289, %296 : vector<8x8x128xf32>
    %cst_109 = arith.constant 0.000000e+00 : f32
    %298 = vector.broadcast %cst_109 : f32 to vector<1x8x128xf32>
    %299 = vector.extract_strided_slice %241 {offsets = [1, 0, 0], sizes = [7, 8, 128], strides = [1, 1, 1]} : vector<8x8x128xf32> to vector<7x8x128xf32>
    %300 = tpu.concatenate %299, %298 in 0 : vector<7x8x128xf32>, vector<1x8x128xf32> -> vector<8x8x128xf32>
    %301 = vector.extract_strided_slice %232 {offsets = [8, 0], sizes = [1, 128], strides = [1, 1]} : vector<9x256xf32> to vector<1x128xf32>
    %302 = vector.shape_cast %301 : vector<1x128xf32> to vector<1x1x128xf32>
    %303 = vector.broadcast %302 : vector<1x1x128xf32> to vector<8x8x128xf32>
    %304 = arith.mulf %300, %303 : vector<8x8x128xf32>
    %305 = arith.addf %297, %304 : vector<8x8x128xf32>
    %306 = vector.extract_strided_slice %233 {offsets = [0, 0], sizes = [1, 128], strides = [1, 1]} : vector<1x256xf32> to vector<1x128xf32>
    %307 = vector.shape_cast %306 : vector<1x128xf32> to vector<1x1x128xf32>
    %308 = vector.broadcast %307 : vector<1x1x128xf32> to vector<8x8x128xf32>
    %309 = arith.addf %305, %308 : vector<8x8x128xf32>
    %cst_110 = arith.constant 0.000000e+00 : f32
    %cst_111 = arith.constant 6.000000e+00 : f32
    %310 = vector.broadcast %cst_110 : f32 to vector<8x8x128xf32>
    %311 = arith.maximumf %310, %309 : vector<8x8x128xf32>
    %312 = vector.broadcast %cst_111 : f32 to vector<8x8x128xf32>
    %313 = arith.minimumf %312, %311 : vector<8x8x128xf32>
    %314 = vector.extract_strided_slice %234 {offsets = [0, 0, 128], sizes = [8, 8, 128], strides = [1, 1, 1]} : vector<8x8x256xf32> to vector<8x8x128xf32>
    %cst_112 = arith.constant 0.000000e+00 : f32
    %315 = vector.broadcast %cst_112 : f32 to vector<8x1x128xf32>
    %316 = vector.extract_strided_slice %314 {offsets = [0, 0, 0], sizes = [8, 7, 128], strides = [1, 1, 1]} : vector<8x8x128xf32> to vector<8x7x128xf32>
    %317 = tpu.concatenate %315, %316 in 1 : vector<8x1x128xf32>, vector<8x7x128xf32> -> vector<8x8x128xf32>
    %cst_113 = arith.constant 0.000000e+00 : f32
    %318 = vector.broadcast %cst_113 : f32 to vector<8x1x128xf32>
    %319 = vector.extract_strided_slice %314 {offsets = [0, 1, 0], sizes = [8, 7, 128], strides = [1, 1, 1]} : vector<8x8x128xf32> to vector<8x7x128xf32>
    %320 = tpu.concatenate %319, %318 in 1 : vector<8x7x128xf32>, vector<8x1x128xf32> -> vector<8x8x128xf32>
    %cst_114 = arith.constant 0.000000e+00 : f32
    %321 = vector.broadcast %cst_114 : f32 to vector<8x8x128xf32>
    %cst_115 = arith.constant 0.000000e+00 : f32
    %322 = vector.broadcast %cst_115 : f32 to vector<1x8x128xf32>
    %323 = vector.extract_strided_slice %317 {offsets = [0, 0, 0], sizes = [7, 8, 128], strides = [1, 1, 1]} : vector<8x8x128xf32> to vector<7x8x128xf32>
    %324 = tpu.concatenate %322, %323 in 0 : vector<1x8x128xf32>, vector<7x8x128xf32> -> vector<8x8x128xf32>
    %325 = vector.extract_strided_slice %232 {offsets = [0, 128], sizes = [1, 128], strides = [1, 1]} : vector<9x256xf32> to vector<1x128xf32>
    %326 = vector.shape_cast %325 : vector<1x128xf32> to vector<1x1x128xf32>
    %327 = vector.broadcast %326 : vector<1x1x128xf32> to vector<8x8x128xf32>
    %328 = arith.mulf %324, %327 : vector<8x8x128xf32>
    %329 = arith.addf %321, %328 : vector<8x8x128xf32>
    %cst_116 = arith.constant 0.000000e+00 : f32
    %330 = vector.broadcast %cst_116 : f32 to vector<1x8x128xf32>
    %331 = vector.extract_strided_slice %314 {offsets = [0, 0, 0], sizes = [7, 8, 128], strides = [1, 1, 1]} : vector<8x8x128xf32> to vector<7x8x128xf32>
    %332 = tpu.concatenate %330, %331 in 0 : vector<1x8x128xf32>, vector<7x8x128xf32> -> vector<8x8x128xf32>
    %333 = vector.extract_strided_slice %232 {offsets = [1, 128], sizes = [1, 128], strides = [1, 1]} : vector<9x256xf32> to vector<1x128xf32>
    %334 = vector.shape_cast %333 : vector<1x128xf32> to vector<1x1x128xf32>
    %335 = vector.broadcast %334 : vector<1x1x128xf32> to vector<8x8x128xf32>
    %336 = arith.mulf %332, %335 : vector<8x8x128xf32>
    %337 = arith.addf %329, %336 : vector<8x8x128xf32>
    %cst_117 = arith.constant 0.000000e+00 : f32
    %338 = vector.broadcast %cst_117 : f32 to vector<1x8x128xf32>
    %339 = vector.extract_strided_slice %320 {offsets = [0, 0, 0], sizes = [7, 8, 128], strides = [1, 1, 1]} : vector<8x8x128xf32> to vector<7x8x128xf32>
    %340 = tpu.concatenate %338, %339 in 0 : vector<1x8x128xf32>, vector<7x8x128xf32> -> vector<8x8x128xf32>
    %341 = vector.extract_strided_slice %232 {offsets = [2, 128], sizes = [1, 128], strides = [1, 1]} : vector<9x256xf32> to vector<1x128xf32>
    %342 = vector.shape_cast %341 : vector<1x128xf32> to vector<1x1x128xf32>
    %343 = vector.broadcast %342 : vector<1x1x128xf32> to vector<8x8x128xf32>
    %344 = arith.mulf %340, %343 : vector<8x8x128xf32>
    %345 = arith.addf %337, %344 : vector<8x8x128xf32>
    %346 = vector.extract_strided_slice %232 {offsets = [3, 128], sizes = [1, 128], strides = [1, 1]} : vector<9x256xf32> to vector<1x128xf32>
    %347 = vector.shape_cast %346 : vector<1x128xf32> to vector<1x1x128xf32>
    %348 = vector.broadcast %347 : vector<1x1x128xf32> to vector<8x8x128xf32>
    %349 = arith.mulf %317, %348 : vector<8x8x128xf32>
    %350 = arith.addf %345, %349 : vector<8x8x128xf32>
    %351 = vector.extract_strided_slice %232 {offsets = [4, 128], sizes = [1, 128], strides = [1, 1]} : vector<9x256xf32> to vector<1x128xf32>
    %352 = vector.shape_cast %351 : vector<1x128xf32> to vector<1x1x128xf32>
    %353 = vector.broadcast %352 : vector<1x1x128xf32> to vector<8x8x128xf32>
    %354 = arith.mulf %314, %353 : vector<8x8x128xf32>
    %355 = arith.addf %350, %354 : vector<8x8x128xf32>
    %356 = vector.extract_strided_slice %232 {offsets = [5, 128], sizes = [1, 128], strides = [1, 1]} : vector<9x256xf32> to vector<1x128xf32>
    %357 = vector.shape_cast %356 : vector<1x128xf32> to vector<1x1x128xf32>
    %358 = vector.broadcast %357 : vector<1x1x128xf32> to vector<8x8x128xf32>
    %359 = arith.mulf %320, %358 : vector<8x8x128xf32>
    %360 = arith.addf %355, %359 : vector<8x8x128xf32>
    %cst_118 = arith.constant 0.000000e+00 : f32
    %361 = vector.broadcast %cst_118 : f32 to vector<1x8x128xf32>
    %362 = vector.extract_strided_slice %317 {offsets = [1, 0, 0], sizes = [7, 8, 128], strides = [1, 1, 1]} : vector<8x8x128xf32> to vector<7x8x128xf32>
    %363 = tpu.concatenate %362, %361 in 0 : vector<7x8x128xf32>, vector<1x8x128xf32> -> vector<8x8x128xf32>
    %364 = vector.extract_strided_slice %232 {offsets = [6, 128], sizes = [1, 128], strides = [1, 1]} : vector<9x256xf32> to vector<1x128xf32>
    %365 = vector.shape_cast %364 : vector<1x128xf32> to vector<1x1x128xf32>
    %366 = vector.broadcast %365 : vector<1x1x128xf32> to vector<8x8x128xf32>
    %367 = arith.mulf %363, %366 : vector<8x8x128xf32>
    %368 = arith.addf %360, %367 : vector<8x8x128xf32>
    %cst_119 = arith.constant 0.000000e+00 : f32
    %369 = vector.broadcast %cst_119 : f32 to vector<1x8x128xf32>
    %370 = vector.extract_strided_slice %314 {offsets = [1, 0, 0], sizes = [7, 8, 128], strides = [1, 1, 1]} : vector<8x8x128xf32> to vector<7x8x128xf32>
    %371 = tpu.concatenate %370, %369 in 0 : vector<7x8x128xf32>, vector<1x8x128xf32> -> vector<8x8x128xf32>
    %372 = vector.extract_strided_slice %232 {offsets = [7, 128], sizes = [1, 128], strides = [1, 1]} : vector<9x256xf32> to vector<1x128xf32>
    %373 = vector.shape_cast %372 : vector<1x128xf32> to vector<1x1x128xf32>
    %374 = vector.broadcast %373 : vector<1x1x128xf32> to vector<8x8x128xf32>
    %375 = arith.mulf %371, %374 : vector<8x8x128xf32>
    %376 = arith.addf %368, %375 : vector<8x8x128xf32>
    %cst_120 = arith.constant 0.000000e+00 : f32
    %377 = vector.broadcast %cst_120 : f32 to vector<1x8x128xf32>
    %378 = vector.extract_strided_slice %320 {offsets = [1, 0, 0], sizes = [7, 8, 128], strides = [1, 1, 1]} : vector<8x8x128xf32> to vector<7x8x128xf32>
    %379 = tpu.concatenate %378, %377 in 0 : vector<7x8x128xf32>, vector<1x8x128xf32> -> vector<8x8x128xf32>
    %380 = vector.extract_strided_slice %232 {offsets = [8, 128], sizes = [1, 128], strides = [1, 1]} : vector<9x256xf32> to vector<1x128xf32>
    %381 = vector.shape_cast %380 : vector<1x128xf32> to vector<1x1x128xf32>
    %382 = vector.broadcast %381 : vector<1x1x128xf32> to vector<8x8x128xf32>
    %383 = arith.mulf %379, %382 : vector<8x8x128xf32>
    %384 = arith.addf %376, %383 : vector<8x8x128xf32>
    %385 = vector.extract_strided_slice %233 {offsets = [0, 128], sizes = [1, 128], strides = [1, 1]} : vector<1x256xf32> to vector<1x128xf32>
    %386 = vector.shape_cast %385 : vector<1x128xf32> to vector<1x1x128xf32>
    %387 = vector.broadcast %386 : vector<1x1x128xf32> to vector<8x8x128xf32>
    %388 = arith.addf %384, %387 : vector<8x8x128xf32>
    %cst_121 = arith.constant 0.000000e+00 : f32
    %cst_122 = arith.constant 6.000000e+00 : f32
    %389 = vector.broadcast %cst_121 : f32 to vector<8x8x128xf32>
    %390 = arith.maximumf %389, %388 : vector<8x8x128xf32>
    %391 = vector.broadcast %cst_122 : f32 to vector<8x8x128xf32>
    %392 = arith.minimumf %391, %390 : vector<8x8x128xf32>
    %393 = tpu.concatenate %313, %392 in 2 : vector<8x8x128xf32>, vector<8x8x128xf32> -> vector<8x8x256xf32>
    %394 = vector.shape_cast %393 : vector<8x8x256xf32> to vector<64x256xf32>
    %395 = arith.truncf %394 : vector<64x256xf32> to vector<64x256xbf16>
    %c0_123 = arith.constant 0 : index
    %c0_124 = arith.constant 0 : index
    %396 = vector.load %arg14[%c0_123, %c0_124] : memref<256x128xbf16, #tpu.memory_space<vmem>>, vector<256x128xbf16>
    %cst_125 = arith.constant dense<0.000000e+00> : vector<64x128xf32>
    %397 = tpu.matmul %395, %396, %cst_125 {dimension_numbers = #tpu.dot_dimension_numbers<[1], [0], [0], [1], [0, 0, 1, 1], [], []>} : vector<64x256xbf16>, vector<256x128xbf16>, vector<64x128xf32> -> vector<64x128xf32>
    %c0_126 = arith.constant 0 : index
    %c0_127 = arith.constant 0 : index
    %398 = vector.load %arg15[%c0_126, %c0_127] : memref<1x128xf32, #tpu.memory_space<vmem>>, vector<1x128xf32>
    %399 = vector.broadcast %398 : vector<1x128xf32> to vector<64x128xf32>
    %400 = arith.addf %397, %399 : vector<64x128xf32>
    %401 = arith.addf %225, %400 : vector<64x128xf32>
    %402 = vector.shape_cast %401 : vector<64x128xf32> to vector<1x64x128xf32>
    %c0_128 = arith.constant 0 : index
    %c0_129 = arith.constant 0 : index
    %c0_130 = arith.constant 0 : index
    %403 = vector.load %arg16[%c0_128, %c0_129, %c0_130] : memref<1x64x128xf32, #tpu.memory_space<vmem>>, vector<1x64x128xf32>
    tpu.vector_store %arg16[%c0_128, %c0_129, %c0_130], %402 {strides = array<i32>} : memref<1x64x128xf32, #tpu.memory_space<vmem>>, vector<1x64x128xf32>,
    return
  }
  func.func @transform_0(%arg0: i32) -> (i32, i32, i32) {
    %c0_i32 = arith.constant 0 : i32
    %c0_i32_0 = arith.constant 0 : i32
    %c0_i32_1 = arith.constant 0 : i32
    return %arg0, %c0_i32, %c0_i32_0 : i32, i32, i32
  }
  func.func @transform_1(%arg0: i32) -> (i32, i32) {
    %c0_i32 = arith.constant 0 : i32
    %c0_i32_0 = arith.constant 0 : i32
    %c0_i32_1 = arith.constant 0 : i32
    return %c0_i32, %c0_i32_0 : i32, i32
  }
  func.func @transform_2(%arg0: i32) -> (i32, i32) {
    %c0_i32 = arith.constant 0 : i32
    %c0_i32_0 = arith.constant 0 : i32
    %c0_i32_1 = arith.constant 0 : i32
    return %c0_i32, %c0_i32_0 : i32, i32
  }
  func.func @transform_3(%arg0: i32) -> (i32, i32) {
    %c0_i32 = arith.constant 0 : i32
    %c0_i32_0 = arith.constant 0 : i32
    %c0_i32_1 = arith.constant 0 : i32
    return %c0_i32, %c0_i32_0 : i32, i32
  }
  func.func @transform_4(%arg0: i32) -> (i32, i32) {
    %c0_i32 = arith.constant 0 : i32
    %c0_i32_0 = arith.constant 0 : i32
    %c0_i32_1 = arith.constant 0 : i32
    return %c0_i32, %c0_i32_0 : i32, i32
  }
  func.func @transform_5(%arg0: i32) -> (i32, i32) {
    %c0_i32 = arith.constant 0 : i32
    %c0_i32_0 = arith.constant 0 : i32
    %c0_i32_1 = arith.constant 0 : i32
    return %c0_i32, %c0_i32_0 : i32, i32
  }
  func.func @transform_6(%arg0: i32) -> (i32, i32) {
    %c0_i32 = arith.constant 0 : i32
    %c0_i32_0 = arith.constant 0 : i32
    %c0_i32_1 = arith.constant 0 : i32
    return %c0_i32, %c0_i32_0 : i32, i32
  }
  func.func @transform_7(%arg0: i32) -> (i32, i32, i32) {
    %c0_i32 = arith.constant 0 : i32
    %c0_i32_0 = arith.constant 0 : i32
    %c0_i32_1 = arith.constant 0 : i32
    %c0_i32_2 = arith.constant 0 : i32
    return %c0_i32, %c0_i32_0, %c0_i32_1 : i32, i32, i32
  }
  func.func @transform_8(%arg0: i32) -> (i32, i32) {
    %c0_i32 = arith.constant 0 : i32
    %c0_i32_0 = arith.constant 0 : i32
    %c0_i32_1 = arith.constant 0 : i32
    return %c0_i32, %c0_i32_0 : i32, i32
  }
  func.func @transform_9(%arg0: i32) -> (i32, i32) {
    %c0_i32 = arith.constant 0 : i32
    %c0_i32_0 = arith.constant 0 : i32
    %c0_i32_1 = arith.constant 0 : i32
    return %c0_i32, %c0_i32_0 : i32, i32
  }
  func.func @transform_10(%arg0: i32) -> (i32, i32) {
    %c0_i32 = arith.constant 0 : i32
    %c0_i32_0 = arith.constant 0 : i32
    %c0_i32_1 = arith.constant 0 : i32
    return %c0_i32, %c0_i32_0 : i32, i32
  }
  func.func @transform_11(%arg0: i32) -> (i32, i32) {
    %c0_i32 = arith.constant 0 : i32
    %c0_i32_0 = arith.constant 0 : i32
    %c0_i32_1 = arith.constant 0 : i32
    return %c0_i32, %c0_i32_0 : i32, i32
  }
  func.func @transform_12(%arg0: i32) -> (i32, i32) {
    %c0_i32 = arith.constant 0 : i32
    %c0_i32_0 = arith.constant 0 : i32
    %c0_i32_1 = arith.constant 0 : i32
    return %c0_i32, %c0_i32_0 : i32, i32
  }
  func.func @transform_13(%arg0: i32) -> (i32, i32) {
    %c0_i32 = arith.constant 0 : i32
    %c0_i32_0 = arith.constant 0 : i32
    %c0_i32_1 = arith.constant 0 : i32
    return %c0_i32, %c0_i32_0 : i32, i32
  }
  func.func @transform_14(%arg0: i32) -> (i32, i32) {
    %c0_i32 = arith.constant 0 : i32
    %c0_i32_0 = arith.constant 0 : i32
    %c0_i32_1 = arith.constant 0 : i32
    return %c0_i32, %c0_i32_0 : i32, i32
  }
  func.func @transform_15(%arg0: i32) -> (i32, i32, i32) {
    %c0_i32 = arith.constant 0 : i32
    %c0_i32_0 = arith.constant 0 : i32
    %c0_i32_1 = arith.constant 0 : i32
    return %arg0, %c0_i32, %c0_i32_0 : i32, i32, i32
  }
}

</mosaic_0001>

<llo_original>
// kernel: top_block_pallas.1
$region0: #{top_block_pallas.1}
  #allocation0 [shape = 'u32[]', space=smem, size = 0x4, offset = 0x4, fixed_abs, tag = 'smem constant byte address 0x4 - core index']
  #allocation1 [shape = 'u32[144,128]{1,0:T(1,128)}', space=vmem, size = 0x12000, scoped, tag = 'internal scratch']
  %s0 = inlined_call_operand.vmem [shape: f32[2,64,128], index: 0, kind: input, shape index: {}]
  %s1 = inlined_call_operand.vmem [shape: bf16[128,128], index: 1, kind: input, shape index: {}]
  %s2 = inlined_call_operand.vmem [shape: f32[1,128], index: 2, kind: input, shape index: {}]
  %s3 = inlined_call_operand.vmem [shape: bf16[128,128], index: 3, kind: input, shape index: {}]
  %s4 = inlined_call_operand.vmem [shape: f32[1,128], index: 4, kind: input, shape index: {}]
  %s5 = inlined_call_operand.vmem [shape: bf16[128,256], index: 5, kind: input, shape index: {}]
  %s6 = inlined_call_operand.vmem [shape: f32[1,256], index: 6, kind: input, shape index: {}]
  %s7 = inlined_call_operand.vmem [shape: bf16[8,32,128], index: 7, kind: input, shape index: {}]
  %s8 = inlined_call_operand.vmem [shape: f32[1,128], index: 8, kind: input, shape index: {}]
  %s9 = inlined_call_operand.vmem [shape: bf16[128,256], index: 9, kind: input, shape index: {}]
  %s10 = inlined_call_operand.vmem [shape: f32[1,256], index: 10, kind: input, shape index: {}]
  %s11 = inlined_call_operand.vmem [shape: f32[9,256], index: 11, kind: input, shape index: {}]
  %s12 = inlined_call_operand.vmem [shape: f32[1,256], index: 12, kind: input, shape index: {}]
  %s13 = inlined_call_operand.vmem [shape: bf16[256,128], index: 13, kind: input, shape index: {}]
  %s14 = inlined_call_operand.vmem [shape: f32[1,128], index: 14, kind: input, shape index: {}]
  %s15 = inlined_call_operand.hbm [shape: f32[2,64,128], index: 15, kind: output, shape index: {}]
  %s16 = sld [smem:[#allocation0]]
  $region93: #{top_block_pallas.1} parent=0
    _
  %s18 = ssub.s32 1, %s16
  %s19 = scalar_select 0, %s18, %s16
  $region1: #{top_block_pallas.1} parent=0
    #allocation2 [shape = 'u8[65536]{0}', space=vmem, size = 0x10000, scoped, tag = 'output window, operand 0']
    #allocation3 [shape = 's32[2]{0}', space=sflag, size = 0x8, scoped, tag = 'scoped memory for top_block_pallas.1']
    %20 = vsyncpa [#allocation3], 0
    %s21 = scalar_lea.sflag [#allocation3], 1
    %22 = vsyncpa %s21, 0
    loop: start=0, step=1, limit=4
    $region2: #{top_block_pallas.1} parent=1 // loop_pre_header
      _
    $region3: #{top_block_pallas.1} parent=1 // loop_header
      %s24 = sphi 0, %s28
      %p25 = scmp.ge.s32.totalorder %s24, 4
      %s34 = sphi 0, %s36
      %s37 = sphi 0, %s34
      %s38 = sphi 0, %s37
      %s54 = sphi 0, %s38
      %s58 = sphi 0, %s58
      %s60 = sphi 0, %s58
      %s61 = sphi 0, %s60
      %s75 = sphi 0, %s61
      %s79 = sphi 0, %s79
      %s81 = sphi 0, %s79
      %s82 = sphi 0, %s81
      %s96 = sphi 0, %s82
      %s100 = sphi 0, %s100
      %s102 = sphi 0, %s100
      %s103 = sphi 0, %s102
      %s117 = sphi 0, %s103
      %s121 = sphi 0, %s121
      %s123 = sphi 0, %s121
      %s124 = sphi 0, %s123
      %s138 = sphi 0, %s124
      %s142 = sphi 0, %s142
      %s144 = sphi 0, %s142
      %s145 = sphi 0, %s144
      %s159 = sphi 0, %s145
      %s163 = sphi 0, %s163
      %s165 = sphi 0, %s163
      %s166 = sphi 0, %s165
      %s180 = sphi 0, %s166
      %s184 = sphi 0, %s184
      %s186 = sphi 0, %s184
      %s187 = sphi 0, %s186
      %s201 = sphi 0, %s187
      %s205 = sphi 0, %s205
      %s207 = sphi 0, %s205
      %s208 = sphi 0, %s207
      %s222 = sphi 0, %s208
      %s226 = sphi 0, %s226
      %s228 = sphi 0, %s226
      %s229 = sphi 0, %s228
      %s243 = sphi 0, %s229
      %s247 = sphi 0, %s247
      %s249 = sphi 0, %s247
      %s250 = sphi 0, %s249
      %s264 = sphi 0, %s250
      %s268 = sphi 0, %s268
      %s270 = sphi 0, %s268
      %s271 = sphi 0, %s270
      %s285 = sphi 0, %s271
      %s289 = sphi 0, %s289
      %s291 = sphi 0, %s289
      %s292 = sphi 0, %s291
      %s306 = sphi 0, %s292
      %s310 = sphi 0, %s310
      %s312 = sphi 0, %s310
      %s313 = sphi 0, %s312
      %s327 = sphi 0, %s313
      %s331 = sphi 0, %s331
      %s333 = sphi 0, %s331
      %s334 = sphi 0, %s333
      %s348 = sphi 0, %s334
      %s354 = sphi 0, %s356
      %s357 = sphi 0, %s354
      %s358 = sphi 0, %s357
      %s374 = sphi 0, %s358
    $region4: #{top_block_pallas.1} parent=1 // loop_header_branch
      %27 = sbr.rel (%p25) target = $region8
    $region5: #{top_block_pallas.1} parent=1 // loop_body
      %s29 = ssub.s32 %s24, 1
      %s30 = ssub.s32 %s24, 2
      %s31 = sadd.s32 %s24, 1
      %s32 = ssub.s32 %s24, %s31
      %p33 = scmp.eq.s32.totalorder %s32, 0
      %s35 = sadd.s32 %s34, 1
      %s36 = scalar_select %p33, %s34, %s35
      %p39 = pneg %p33
      %p40 = scmp.eq.s32.totalorder %s24, 1
      %p41 = por %p39, %p40
      %p42 = scmp.ne.s32.totalorder %s34, %s37
      %p43 = scmp.eq.s32.totalorder %s24, 0
      %p44 = por %p42, %p43
      %p45 = scmp.ne.s32.totalorder %s34, %s37
      %p46 = scmp.eq.s32.totalorder %s29, 1
      %p47 = por %p45, %p46
      %p48 = scmp.ne.s32.totalorder %s37, %s38
      %p49 = scmp.eq.s32.totalorder %s29, 0
      %p50 = por %p48, %p49
      %p51 = scmp.ne.s32.totalorder %s37, %s38
      %p52 = scmp.eq.s32.totalorder %s30, 1
      %p53 = por %p51, %p52
      %p55 = scmp.ne.s32.totalorder %s38, %s54
      %p56 = scmp.eq.s32.totalorder %s30, 0
      %p57 = por %p55, %p56
      %s59 = sadd.s32 %s58, 1
      %p62 = scmp.eq.s32.totalorder %s24, 1
      %p63 = scmp.ne.s32.totalorder %s58, %s60
      %p64 = scmp.eq.s32.totalorder %s24, 0
      %p65 = por %p63, %p64
      %p66 = scmp.ne.s32.totalorder %s58, %s60
      %p67 = scmp.eq.s32.totalorder %s29, 1
      %p68 = por %p66, %p67
      %p69 = scmp.ne.s32.totalorder %s60, %s61
      %p70 = scmp.eq.s32.totalorder %s29, 0
      %p71 = por %p69, %p70
      %p72 = scmp.ne.s32.totalorder %s60, %s61
      %p73 = scmp.eq.s32.totalorder %s30, 1
      %p74 = por %p72, %p73
      %p76 = scmp.ne.s32.totalorder %s61, %s75
      %p77 = scmp.eq.s32.totalorder %s30, 0
      %p78 = por %p76, %p77
      %s80 = sadd.s32 %s79, 1
      %p83 = scmp.eq.s32.totalorder %s24, 1
      %p84 = scmp.ne.s32.totalorder %s79, %s81
      %p85 = scmp.eq.s32.totalorder %s24, 0
      %p86 = por %p84, %p85
      %p87 = scmp.ne.s32.totalorder %s79, %s81
      %p88 = scmp.eq.s32.totalorder %s29, 1
      %p89 = por %p87, %p88
      %p90 = scmp.ne.s32.totalorder %s81, %s82
      %p91 = scmp.eq.s32.totalorder %s29, 0
      %p92 = por %p90, %p91
      %p93 = scmp.ne.s32.totalorder %s81, %s82
      %p94 = scmp.eq.s32.totalorder %s30, 1
      %p95 = por %p93, %p94
      %p97 = scmp.ne.s32.totalorder %s82, %s96
      %p98 = scmp.eq.s32.totalorder %s30, 0
      %p99 = por %p97, %p98
      %s101 = sadd.s32 %s100, 1
      %p104 = scmp.eq.s32.totalorder %s24, 1
      %p105 = scmp.ne.s32.totalorder %s100, %s102
      %p106 = scmp.eq.s32.totalorder %s24, 0
      %p107 = por %p105, %p106
      %p108 = scmp.ne.s32.totalorder %s100, %s102
      %p109 = scmp.eq.s32.totalorder %s29, 1
      %p110 = por %p108, %p109
      %p111 = scmp.ne.s32.totalorder %s102, %s103
      %p112 = scmp.eq.s32.totalorder %s29, 0
      %p113 = por %p111, %p112
      %p114 = scmp.ne.s32.totalorder %s102, %s103
      %p115 = scmp.eq.s32.totalorder %s30, 1
      %p116 = por %p114, %p115
      %p118 = scmp.ne.s32.totalorder %s103, %s117
      %p119 = scmp.eq.s32.totalorder %s30, 0
      %p120 = por %p118, %p119
      %s122 = sadd.s32 %s121, 1
      %p125 = scmp.eq.s32.totalorder %s24, 1
      %p126 = scmp.ne.s32.totalorder %s121, %s123
      %p127 = scmp.eq.s32.totalorder %s24, 0
      %p128 = por %p126, %p127
      %p129 = scmp.ne.s32.totalorder %s121, %s123
      %p130 = scmp.eq.s32.totalorder %s29, 1
      %p131 = por %p129, %p130
      %p132 = scmp.ne.s32.totalorder %s123, %s124
      %p133 = scmp.eq.s32.totalorder %s29, 0
      %p134 = por %p132, %p133
      %p135 = scmp.ne.s32.totalorder %s123, %s124
      %p136 = scmp.eq.s32.totalorder %s30, 1
      %p137 = por %p135, %p136
      %p139 = scmp.ne.s32.totalorder %s124, %s138
      %p140 = scmp.eq.s32.totalorder %s30, 0
      %p141 = por %p139, %p140
      %s143 = sadd.s32 %s142, 1
      %p146 = scmp.eq.s32.totalorder %s24, 1
      %p147 = scmp.ne.s32.totalorder %s142, %s144
      %p148 = scmp.eq.s32.totalorder %s24, 0
      %p149 = por %p147, %p148
      %p150 = scmp.ne.s32.totalorder %s142, %s144
      %p151 = scmp.eq.s32.totalorder %s29, 1
      %p152 = por %p150, %p151
      %p153 = scmp.ne.s32.totalorder %s144, %s145
      %p154 = scmp.eq.s32.totalorder %s29, 0
      %p155 = por %p153, %p154
      %p156 = scmp.ne.s32.totalorder %s144, %s145
      %p157 = scmp.eq.s32.totalorder %s30, 1
      %p158 = por %p156, %p157
      %p160 = scmp.ne.s32.totalorder %s145, %s159
      %p161 = scmp.eq.s32.totalorder %s30, 0
      %p162 = por %p160, %p161
      %s164 = sadd.s32 %s163, 1
      %p167 = scmp.eq.s32.totalorder %s24, 1
      %p168 = scmp.ne.s32.totalorder %s163, %s165
      %p169 = scmp.eq.s32.totalorder %s24, 0
      %p170 = por %p168, %p169
      %p171 = scmp.ne.s32.totalorder %s163, %s165
      %p172 = scmp.eq.s32.totalorder %s29, 1
      %p173 = por %p171, %p172
      %p174 = scmp.ne.s32.totalorder %s165, %s166
      %p175 = scmp.eq.s32.totalorder %s29, 0
      %p176 = por %p174, %p175
      %p177 = scmp.ne.s32.totalorder %s165, %s166
      %p178 = scmp.eq.s32.totalorder %s30, 1
      %p179 = por %p177, %p178
      %p181 = scmp.ne.s32.totalorder %s166, %s180
      %p182 = scmp.eq.s32.totalorder %s30, 0
      %p183 = por %p181, %p182
      %s185 = sadd.s32 %s184, 1
      %p188 = scmp.eq.s32.totalorder %s24, 1
      %p189 = scmp.ne.s32.totalorder %s184, %s186
      %p190 = scmp.eq.s32.totalorder %s24, 0
      %p191 = por %p189, %p190
      %p192 = scmp.ne.s32.totalorder %s184, %s186
      %p193 = scmp.eq.s32.totalorder %s29, 1
      %p194 = por %p192, %p193
      %p195 = scmp.ne.s32.totalorder %s186, %s187
      %p196 = scmp.eq.s32.totalorder %s29, 0
      %p197 = por %p195, %p196
      %p198 = scmp.ne.s32.totalorder %s186, %s187
      %p199 = scmp.eq.s32.totalorder %s30, 1
      %p200 = por %p198, %p199
      %p202 = scmp.ne.s32.totalorder %s187, %s201
      %p203 = scmp.eq.s32.totalorder %s30, 0
      %p204 = por %p202, %p203
      %s206 = sadd.s32 %s205, 1
      %p209 = scmp.eq.s32.totalorder %s24, 1
      %p210 = scmp.ne.s32.totalorder %s205, %s207
      %p211 = scmp.eq.s32.totalorder %s24, 0
      %p212 = por %p210, %p211
      %p213 = scmp.ne.s32.totalorder %s205, %s207
      %p214 = scmp.eq.s32.totalorder %s29, 1
      %p215 = por %p213, %p214
      %p216 = scmp.ne.s32.totalorder %s207, %s208
      %p217 = scmp.eq.s32.totalorder %s29, 0
      %p218 = por %p216, %p217
      %p219 = scmp.ne.s32.totalorder %s207, %s208
      %p220 = scmp.eq.s32.totalorder %s30, 1
      %p221 = por %p219, %p220
      %p223 = scmp.ne.s32.totalorder %s208, %s222
      %p224 = scmp.eq.s32.totalorder %s30, 0
      %p225 = por %p223, %p224
      %s227 = sadd.s32 %s226, 1
      %p230 = scmp.eq.s32.totalorder %s24, 1
      %p231 = scmp.ne.s32.totalorder %s226, %s228
      %p232 = scmp.eq.s32.totalorder %s24, 0
      %p233 = por %p231, %p232
      %p234 = scmp.ne.s32.totalorder %s226, %s228
      %p235 = scmp.eq.s32.totalorder %s29, 1
      %p236 = por %p234, %p235
      %p237 = scmp.ne.s32.totalorder %s228, %s229
      %p238 = scmp.eq.s32.totalorder %s29, 0
      %p239 = por %p237, %p238
      %p240 = scmp.ne.s32.totalorder %s228, %s229
      %p241 = scmp.eq.s32.totalorder %s30, 1
      %p242 = por %p240, %p241
      %p244 = scmp.ne.s32.totalorder %s229, %s243
      %p245 = scmp.eq.s32.totalorder %s30, 0
      %p246 = por %p244, %p245
      %s248 = sadd.s32 %s247, 1
      %p251 = scmp.eq.s32.totalorder %s24, 1
      %p252 = scmp.ne.s32.totalorder %s247, %s249
      %p253 = scmp.eq.s32.totalorder %s24, 0
      %p254 = por %p252, %p253
      %p255 = scmp.ne.s32.totalorder %s247, %s249
      %p256 = scmp.eq.s32.totalorder %s29, 1
      %p257 = por %p255, %p256
      %p258 = scmp.ne.s32.totalorder %s249, %s250
      %p259 = scmp.eq.s32.totalorder %s29, 0
      %p260 = por %p258, %p259
      %p261 = scmp.ne.s32.totalorder %s249, %s250
      %p262 = scmp.eq.s32.totalorder %s30, 1
      %p263 = por %p261, %p262
      %p265 = scmp.ne.s32.totalorder %s250, %s264
      %p266 = scmp.eq.s32.totalorder %s30, 0
      %p267 = por %p265, %p266
      %s269 = sadd.s32 %s268, 1
      %p272 = scmp.eq.s32.totalorder %s24, 1
      %p273 = scmp.ne.s32.totalorder %s268, %s270
      %p274 = scmp.eq.s32.totalorder %s24, 0
      %p275 = por %p273, %p274
      %p276 = scmp.ne.s32.totalorder %s268, %s270
      %p277 = scmp.eq.s32.totalorder %s29, 1
      %p278 = por %p276, %p277
      %p279 = scmp.ne.s32.totalorder %s270, %s271
      %p280 = scmp.eq.s32.totalorder %s29, 0
      %p281 = por %p279, %p280
      %p282 = scmp.ne.s32.totalorder %s270, %s271
      %p283 = scmp.eq.s32.totalorder %s30, 1
      %p284 = por %p282, %p283
      %p286 = scmp.ne.s32.totalorder %s271, %s285
      %p287 = scmp.eq.s32.totalorder %s30, 0
      %p288 = por %p286, %p287
      %s290 = sadd.s32 %s289, 1
      %p293 = scmp.eq.s32.totalorder %s24, 1
      %p294 = scmp.ne.s32.totalorder %s289, %s291
      %p295 = scmp.eq.s32.totalorder %s24, 0
      %p296 = por %p294, %p295
      %p297 = scmp.ne.s32.totalorder %s289, %s291
      %p298 = scmp.eq.s32.totalorder %s29, 1
      %p299 = por %p297, %p298
      %p300 = scmp.ne.s32.totalorder %s291, %s292
      %p301 = scmp.eq.s32.totalorder %s29, 0
      %p302 = por %p300, %p301
      %p303 = scmp.ne.s32.totalorder %s291, %s292
      %p304 = scmp.eq.s32.totalorder %s30, 1
      %p305 = por %p303, %p304
      %p307 = scmp.ne.s32.totalorder %s292, %s306
      %p308 = scmp.eq.s32.totalorder %s30, 0
      %p309 = por %p307, %p308
      %s311 = sadd.s32 %s310, 1
      %p314 = scmp.eq.s32.totalorder %s24, 1
      %p315 = scmp.ne.s32.totalorder %s310, %s312
      %p316 = scmp.eq.s32.totalorder %s24, 0
      %p317 = por %p315, %p316
      %p318 = scmp.ne.s32.totalorder %s310, %s312
      %p319 = scmp.eq.s32.totalorder %s29, 1
      %p320 = por %p318, %p319
      %p321 = scmp.ne.s32.totalorder %s312, %s313
      %p322 = scmp.eq.s32.totalorder %s29, 0
      %p323 = por %p321, %p322
      %p324 = scmp.ne.s32.totalorder %s312, %s313
      %p325 = scmp.eq.s32.totalorder %s30, 1
      %p326 = por %p324, %p325
      %p328 = scmp.ne.s32.totalorder %s313, %s327
      %p329 = scmp.eq.s32.totalorder %s30, 0
      %p330 = por %p328, %p329
      %s332 = sadd.s32 %s331, 1
      %p335 = scmp.eq.s32.totalorder %s24, 1
      %p336 = scmp.ne.s32.totalorder %s331, %s333
      %p337 = scmp.eq.s32.totalorder %s24, 0
      %p338 = por %p336, %p337
      %p339 = scmp.ne.s32.totalorder %s331, %s333
      %p340 = scmp.eq.s32.totalorder %s29, 1
      %p341 = por %p339, %p340
      %p342 = scmp.ne.s32.totalorder %s333, %s334
      %p343 = scmp.eq.s32.totalorder %s29, 0
      %p344 = por %p342, %p343
      %p345 = scmp.ne.s32.totalorder %s333, %s334
      %p346 = scmp.eq.s32.totalorder %s30, 1
      %p347 = por %p345, %p346
      %p349 = scmp.ne.s32.totalorder %s334, %s348
      %p350 = scmp.eq.s32.totalorder %s30, 0
      %p351 = por %p349, %p350
      %s352 = ssub.s32 %s24, %s31
      %p353 = scmp.eq.s32.totalorder %s352, 0
      %s355 = sadd.s32 %s354, 1
      %s356 = scalar_select %p353, %s354, %s355
      %p359 = pneg %p353
      %p360 = scmp.eq.s32.totalorder %s24, 1
      %p361 = por %p359, %p360
      %p362 = scmp.ne.s32.totalorder %s354, %s357
      %p363 = scmp.eq.s32.totalorder %s24, 0
      %p364 = por %p362, %p363
      %p365 = scmp.ne.s32.totalorder %s354, %s357
      %p366 = scmp.eq.s32.totalorder %s29, 1
      %p367 = por %p365, %p366
      %p368 = scmp.ne.s32.totalorder %s357, %s358
      %p369 = scmp.eq.s32.totalorder %s29, 0
      %p370 = por %p368, %p369
      %p371 = scmp.ne.s32.totalorder %s357, %s358
      %p372 = scmp.eq.s32.totalorder %s30, 1
      %p373 = por %p371, %p372
      %p375 = scmp.ne.s32.totalorder %s358, %s374
      %p376 = scmp.eq.s32.totalorder %s30, 0
      %p377 = por %p375, %p376
      %p378 = scmp.le.s32.totalorder 1, %s24
      %p379 = scmp.lt.s32.totalorder %s24, 3
      %p380 = pnand %p378, %p379
      %p381 = pneg %p380
      // Predicated region
      $region9: #{top_block_pallas.1} parent=5 // pred_check
        _
      $region10: #{top_block_pallas.1} parent=5 // pred_check_branch
        %383 = sbr.rel (%p380) target = $region12
      $region11: #{top_block_pallas.1} parent=5 // pred_region
        %s384 = ssub.s32 %s24, 1
        // Predicated region
        $region13: #{top_block_pallas.1} parent=11 // pred_check
          %p385 = pneg %p71
        $region14: #{top_block_pallas.1} parent=11 // pred_check_branch
          %387 = sbr.rel (%p385) target = $region16
        $region15: #{top_block_pallas.1} parent=11 // pred_region
          _
        $region16: #{top_block_pallas.1} parent=11 // pred_fallthru
          _
        // Predicated region
        $region17: #{top_block_pallas.1} parent=11 // pred_check
          %p388 = pneg %p92
        $region18: #{top_block_pallas.1} parent=11 // pred_check_branch
          %390 = sbr.rel (%p388) target = $region20
        $region19: #{top_block_pallas.1} parent=11 // pred_region
          _
        $region20: #{top_block_pallas.1} parent=11 // pred_fallthru
          _
        // Predicated region
        $region21: #{top_block_pallas.1} parent=11 // pred_check
          %p391 = pneg %p113
        $region22: #{top_block_pallas.1} parent=11 // pred_check_branch
          %393 = sbr.rel (%p391) target = $region24
        $region23: #{top_block_pallas.1} parent=11 // pred_region
          _
        $region24: #{top_block_pallas.1} parent=11 // pred_fallthru
          _
        // Predicated region
        $region25: #{top_block_pallas.1} parent=11 // pred_check
          %p394 = pneg %p134
        $region26: #{top_block_pallas.1} parent=11 // pred_check_branch
          %396 = sbr.rel (%p394) target = $region28
        $region27: #{top_block_pallas.1} parent=11 // pred_region
          _
        $region28: #{top_block_pallas.1} parent=11 // pred_fallthru
          _
        // Predicated region
        $region29: #{top_block_pallas.1} parent=11 // pred_check
          %p397 = pneg %p155
        $region30: #{top_block_pallas.1} parent=11 // pred_check_branch
          %399 = sbr.rel (%p397) target = $region32
        $region31: #{top_block_pallas.1} parent=11 // pred_region
          _
        $region32: #{top_block_pallas.1} parent=11 // pred_fallthru
          _
        // Predicated region
        $region33: #{top_block_pallas.1} parent=11 // pred_check
          %p400 = pneg %p176
        $region34: #{top_block_pallas.1} parent=11 // pred_check_branch
          %402 = sbr.rel (%p400) target = $region36
        $region35: #{top_block_pallas.1} parent=11 // pred_region
          _
        $region36: #{top_block_pallas.1} parent=11 // pred_fallthru
          _
        // Predicated region
        $region37: #{top_block_pallas.1} parent=11 // pred_check
          %p403 = pneg %p197
        $region38: #{top_block_pallas.1} parent=11 // pred_check_branch
          %405 = sbr.rel (%p403) target = $region40
        $region39: #{top_block_pallas.1} parent=11 // pred_region
          _
        $region40: #{top_block_pallas.1} parent=11 // pred_fallthru
          _
        // Predicated region
        $region41: #{top_block_pallas.1} parent=11 // pred_check
          %p406 = pneg %p218
        $region42: #{top_block_pallas.1} parent=11 // pred_check_branch
          %408 = sbr.rel (%p406) target = $region44
        $region43: #{top_block_pallas.1} parent=11 // pred_region
          _
        $region44: #{top_block_pallas.1} parent=11 // pred_fallthru
          _
        // Predicated region
        $region45: #{top_block_pallas.1} parent=11 // pred_check
          %p409 = pneg %p239
        $region46: #{top_block_pallas.1} parent=11 // pred_check_branch
          %411 = sbr.rel (%p409) target = $region48
        $region47: #{top_block_pallas.1} parent=11 // pred_region
          _
        $region48: #{top_block_pallas.1} parent=11 // pred_fallthru
          _
        // Predicated region
        $region49: #{top_block_pallas.1} parent=11 // pred_check
          %p412 = pneg %p260
        $region50: #{top_block_pallas.1} parent=11 // pred_check_branch
          %414 = sbr.rel (%p412) target = $region52
        $region51: #{top_block_pallas.1} parent=11 // pred_region
          _
        $region52: #{top_block_pallas.1} parent=11 // pred_fallthru
          _
        // Predicated region
        $region53: #{top_block_pallas.1} parent=11 // pred_check
          %p415 = pneg %p281
        $region54: #{top_block_pallas.1} parent=11 // pred_check_branch
          %417 = sbr.rel (%p415) target = $region56
        $region55: #{top_block_pallas.1} parent=11 // pred_region
          _
        $region56: #{top_block_pallas.1} parent=11 // pred_fallthru
          _
        // Predicated region
        $region57: #{top_block_pallas.1} parent=11 // pred_check
          %p418 = pneg %p302
        $region58: #{top_block_pallas.1} parent=11 // pred_check_branch
          %420 = sbr.rel (%p418) target = $region60
        $region59: #{top_block_pallas.1} parent=11 // pred_region
          _
        $region60: #{top_block_pallas.1} parent=11 // pred_fallthru
          _
        // Predicated region
        $region61: #{top_block_pallas.1} parent=11 // pred_check
          %p421 = pneg %p323
        $region62: #{top_block_pallas.1} parent=11 // pred_check_branch
          %423 = sbr.rel (%p421) target = $region64
        $region63: #{top_block_pallas.1} parent=11 // pred_region
          _
        $region64: #{top_block_pallas.1} parent=11 // pred_fallthru
          _
        // Predicated region
        $region65: #{top_block_pallas.1} parent=11 // pred_check
          %p424 = pneg %p344
        $region66: #{top_block_pallas.1} parent=11 // pred_check_branch
          %426 = sbr.rel (%p424) target = $region68
        $region67: #{top_block_pallas.1} parent=11 // pred_region
          _
        $region68: #{top_block_pallas.1} parent=11 // pred_fallthru
          _
      $region12: #{top_block_pallas.1} parent=5 // pred_fallthru
        _
      %p427 = scmp.lt.s32.totalorder %s24, 2
      // Predicated region
      $region69: #{top_block_pallas.1} parent=5 // pred_check
        %p428 = pneg %p427
      $region70: #{top_block_pallas.1} parent=5 // pred_check_branch
        %430 = sbr.rel (%p428) target = $region72
      $region71: #{top_block_pallas.1} parent=5 // pred_region
        // Predicated region
        $region73: #{top_block_pallas.1} parent=71 // pred_check
          %p431 = pneg %p44
        $region74: #{top_block_pallas.1} parent=71 // pred_check_branch
          %433 = sbr.rel (%p431) target = $region76
        $region75: #{top_block_pallas.1} parent=71 // pred_region
          %p434 = scmp.lt.s32.totalorder %s24, 1
          %s435 = scalar_select %p434, %s24, 1
          %s436 = smul.addr %s435, 8
          %s437 = smul.addr %s436, 8
          %s438 = scalar_lea.vmem %s0, %s437
        $region76: #{top_block_pallas.1} parent=71 // pred_fallthru
          _
      $region72: #{top_block_pallas.1} parent=5 // pred_fallthru
        _
      %p439 = scmp.le.s32.totalorder 1, %s24
      %p440 = scmp.lt.s32.totalorder %s24, 3
      %p441 = pnand %p439, %p440
      %p442 = pneg %p441
      // Predicated region
      $region77: #{top_block_pallas.1} parent=5 // pred_check
        _
      $region78: #{top_block_pallas.1} parent=5 // pred_check_branch
        %444 = sbr.rel (%p441) target = $region80
      $region79: #{top_block_pallas.1} parent=5 // pred_region
        %s445 = ssub.s32 %s24, 1
        %p446 = scmp.lt.s32.totalorder %s29, 1
        %s447 = scalar_select %p446, %s29, 1
        %s448 = smul.addr %s447, 8
        %s449 = smul.addr %s448, 8
        %s450 = scalar_lea.vmem %s0, %s449
        %p451 = pneg %p50
        %p452 = pneg %p47
        %p453 = pneg %p71
        %p454 = pneg %p68
        %p455 = pneg %p92
        %p456 = pneg %p89
        %p457 = pneg %p113
        %p458 = pneg %p110
        %p459 = pneg %p134
        %p460 = pneg %p131
        %p461 = pneg %p155
        %p462 = pneg %p152
        %p463 = pneg %p176
        %p464 = pneg %p173
        %p465 = pneg %p197
        %p466 = pneg %p194
        %p467 = pneg %p218
        %p468 = pneg %p215
        %p469 = pneg %p239
        %p470 = pneg %p236
        %p471 = pneg %p260
        %p472 = pneg %p257
        %p473 = pneg %p281
        %p474 = pneg %p278
        %p475 = pneg %p302
        %p476 = pneg %p299
        %p477 = pneg %p323
        %p478 = pneg %p320
        %p479 = pneg %p344
        %p480 = pneg %p341
        %p481 = pneg %p370
        %p482 = pneg %p367
        %s483 = sand.u32 %s357, 1
        %s484 = scalar_lea.sflag [#allocation3], %s483
        %s485 = sand.u32 %s357, 1
        %s486 = smul.addr %s485, 64
        %s487 = scalar_lea.vmem [#allocation2], %s486
        %p488 = scmp.lt.s32.totalorder %s29, 1
        %s489 = scalar_select %p488, %s29, 1
        %s490 = smul.addr %s489, 8
        %s491 = smul.addr %s490, 8
        %s492 = scalar_lea.vmem %s0, %s491
        %v494 = vld [vmem:[%s492] sm:$0xff]
        %v495 = vld [vmem:[%s492 + $0x8] sm:$0xff]
        %v496 = vld [vmem:[%s492 + $0x10] sm:$0xff]
        %v497 = vld [vmem:[%s492 + $0x18] sm:$0xff]
        %v498 = vld [vmem:[%s492 + $0x20] sm:$0xff]
        %v499 = vld [vmem:[%s492 + $0x28] sm:$0xff]
        %v500 = vld [vmem:[%s492 + $0x30] sm:$0xff]
        %v501 = vld [vmem:[%s492 + $0x38] sm:$0xff]
        %v502 = vpack.c.bf16 %v495, %v494
        %v503 = vpack.c.bf16 %v497, %v496
        %v504 = vpack.c.bf16 %v499, %v498
        %v505 = vpack.c.bf16 %v501, %v500
        %v506 = vld [vmem:[%s1] sm:$0xf]
        %v507 = vld [vmem:[%s1 + $0x4] sm:$0xf]
        %v508 = vld [vmem:[%s1 + $0x8] sm:$0xf]
        %v509 = vld [vmem:[%s1 + $0xc] sm:$0xf]
        %v510 = vld [vmem:[%s1 + $0x10] sm:$0xf]
        %v511 = vld [vmem:[%s1 + $0x14] sm:$0xf]
        %v512 = vld [vmem:[%s1 + $0x18] sm:$0xf]
        %v513 = vld [vmem:[%s1 + $0x1c] sm:$0xf]
        %v514 = vld [vmem:[%s1 + $0x20] sm:$0xf]
        %v515 = vld [vmem:[%s1 + $0x24] sm:$0xf]
        %v516 = vld [vmem:[%s1 + $0x28] sm:$0xf]
        %v517 = vld [vmem:[%s1 + $0x2c] sm:$0xf]
        %v518 = vld [vmem:[%s1 + $0x30] sm:$0xf]
        %v519 = vld [vmem:[%s1 + $0x34] sm:$0xf]
        %v520 = vld [vmem:[%s1 + $0x38] sm:$0xf]
        %v521 = vld [vmem:[%s1 + $0x3c] sm:$0xf]
        %v522 = vld [vmem:[%s2] sm:$0x1]
        %v524 = vlaneseq
        %v525 = vshrl.u32 %v524, 7
        %v526 = vsub.s32 0, %v525
        %v527 = vrot.slane %v522, %v526
        %v545 = vunpack.c.l.b16 %v506
        %v546 = vunpack.c.l.b16 %v507
        %v547 = vunpack.c.l.b16 %v508
        %v548 = vunpack.c.l.b16 %v509
        %v549 = vunpack.c.l.b16 %v510
        %v550 = vunpack.c.l.b16 %v511
        %v551 = vunpack.c.l.b16 %v512
        %v552 = vunpack.c.l.b16 %v513
        %v553 = vunpack.c.l.b16 %v514
        %v554 = vunpack.c.l.b16 %v515
        %v555 = vunpack.c.l.b16 %v516
        %v556 = vunpack.c.l.b16 %v517
        %v557 = vunpack.c.l.b16 %v518
        %v558 = vunpack.c.l.b16 %v519
        %v559 = vunpack.c.l.b16 %v520
        %v560 = vunpack.c.l.b16 %v521
        %v561 = vpack.c.b16 %v546, %v545
        %v562 = vpack.c.b16 %v548, %v547
        %v563 = vpack.c.b16 %v550, %v549
        %v564 = vpack.c.b16 %v552, %v551
        %v565 = vpack.c.b16 %v554, %v553
        %v566 = vpack.c.b16 %v556, %v555
        %v567 = vpack.c.b16 %v558, %v557
        %v568 = vpack.c.b16 %v560, %v559
        %577 = vmatprep.subr.bf16.mxu0 0
        %578 = vmatpush1.bf16.msra.mxu0 %v561
        %579 = vmatprep.subr.bf16.mxu0 0
        %580 = vmatpush1.bf16.msra.mxu0 %v562
        %581 = vmatprep.subr.bf16.mxu0 0
        %582 = vmatpush1.bf16.msra.mxu0 %v563
        %583 = vmatprep.subr.bf16.mxu0 0
        %584 = vmatpush1.bf16.msra.mxu0 %v564
        %585 = vmatprep.subr.bf16.mxu0 0
        %586 = vmatpush1.bf16.msra.mxu0 %v565
        %587 = vmatprep.subr.bf16.mxu0 0
        %588 = vmatpush1.bf16.msra.mxu0 %v566
        %589 = vmatprep.subr.bf16.mxu0 0
        %590 = vmatpush1.bf16.msra.mxu0 %v567
        %591 = vmatprep.subr.bf16.mxu0 0
        %592 = vmatpush1.bf16.msra.mxu0 %v568
        %593 = vmatprep.subr.bf16.mxu0 0
        %594 = vmatpush1.bf16.msra.mxu0 0
        %595 = vmatprep.subr.bf16.mxu0 0
        %596 = vmatpush1.bf16.msra.mxu0 0
        %597 = vmatprep.subr.bf16.mxu0 0
        %598 = vmatpush1.bf16.msra.mxu0 0
        %599 = vmatprep.subr.bf16.mxu0 0
        %600 = vmatpush1.bf16.msra.mxu0 0
        %601 = vmatprep.subr.bf16.mxu0 0
        %602 = vmatpush1.bf16.msra.mxu0 0
        %603 = vmatprep.subr.bf16.mxu0 0
        %604 = vmatpush1.bf16.msra.mxu0 0
        %605 = vmatprep.subr.bf16.mxu0 0
        %606 = vmatpush1.bf16.msra.mxu0 0
        %607 = vmatprep.subr.bf16.mxu0 0
        %608 = vmatpush1.bf16.msra.mxu0 0
        %609 = vmatprep.mubr.bf16.mxu0 0
        %610 = vmatmul.mubr.bf16.gmra.mrb[0].mxu0 %v502
        %v611 = vpop.f32.mrb[0].mxu0
        %v612 = vadd.f32 %v527, %v611
        %v613 = vpop.f32.mrb[0].mxu0
        %v614 = vpop.f32.mrb[0].mxu0
        %v615 = vadd.f32 %v527, %v614
        %v616 = vpop.f32.mrb[0].mxu0
        %617 = vmatprep.mubr.bf16.mxu0 0
        %618 = vmatmul.mubr.bf16.gmra.mrb[0].mxu0 %v503
        %v619 = vpop.f32.mrb[0].mxu0
        %v620 = vadd.f32 %v527, %v619
        %v621 = vpop.f32.mrb[0].mxu0
        %v622 = vpop.f32.mrb[0].mxu0
        %v623 = vadd.f32 %v527, %v622
        %v624 = vpop.f32.mrb[0].mxu0
        %625 = vmatprep.mubr.bf16.mxu0 0
        %626 = vmatmul.mubr.bf16.gmra.mrb[0].mxu0 %v504
        %v627 = vpop.f32.mrb[0].mxu0
        %v628 = vadd.f32 %v527, %v627
        %v629 = vpop.f32.mrb[0].mxu0
        %v630 = vpop.f32.mrb[0].mxu0
        %v631 = vadd.f32 %v527, %v630
        %v632 = vpop.f32.mrb[0].mxu0
        %633 = vmatprep.mubr.bf16.mxu0 0
        %634 = vmatmul.mubr.bf16.gmra.mrb[0].mxu0 %v505
        %v635 = vpop.f32.mrb[0].mxu0
        %v636 = vadd.f32 %v527, %v635
        %v637 = vpop.f32.mrb[0].mxu0
        %v638 = vpop.f32.mrb[0].mxu0
        %v639 = vadd.f32 %v527, %v638
        %v640 = vpop.f32.mrb[0].mxu0
        %641 = vdwg.mxu0
        %v642 = vld [vmem:[%s3] sm:$0xf]
        %v643 = vld [vmem:[%s3 + $0x4] sm:$0xf]
        %v644 = vld [vmem:[%s3 + $0x8] sm:$0xf]
        %v645 = vld [vmem:[%s3 + $0xc] sm:$0xf]
        %v646 = vld [vmem:[%s3 + $0x10] sm:$0xf]
        %v647 = vld [vmem:[%s3 + $0x14] sm:$0xf]
        %v648 = vld [vmem:[%s3 + $0x18] sm:$0xf]
        %v649 = vld [vmem:[%s3 + $0x1c] sm:$0xf]
        %v650 = vld [vmem:[%s3 + $0x20] sm:$0xf]
        %v651 = vld [vmem:[%s3 + $0x24] sm:$0xf]
        %v652 = vld [vmem:[%s3 + $0x28] sm:$0xf]
        %v653 = vld [vmem:[%s3 + $0x2c] sm:$0xf]
        %v654 = vld [vmem:[%s3 + $0x30] sm:$0xf]
        %v655 = vld [vmem:[%s3 + $0x34] sm:$0xf]
        %v656 = vld [vmem:[%s3 + $0x38] sm:$0xf]
        %v657 = vld [vmem:[%s3 + $0x3c] sm:$0xf]
        %v658 = vld [vmem:[%s4] sm:$0x1]
        %v660 = vlaneseq
        %v661 = vshrl.u32 %v660, 7
        %v662 = vsub.s32 0, %v661
        %v663 = vrot.slane %v658, %v662
        %v681 = vunpack.c.l.b16 %v642
        %v682 = vunpack.c.l.b16 %v643
        %v683 = vunpack.c.l.b16 %v644
        %v684 = vunpack.c.l.b16 %v645
        %v685 = vunpack.c.l.b16 %v646
        %v686 = vunpack.c.l.b16 %v647
        %v687 = vunpack.c.l.b16 %v648
        %v688 = vunpack.c.l.b16 %v649
        %v689 = vunpack.c.l.b16 %v650
        %v690 = vunpack.c.l.b16 %v651
        %v691 = vunpack.c.l.b16 %v652
        %v692 = vunpack.c.l.b16 %v653
        %v693 = vunpack.c.l.b16 %v654
        %v694 = vunpack.c.l.b16 %v655
        %v695 = vunpack.c.l.b16 %v656
        %v696 = vunpack.c.l.b16 %v657
        %v697 = vpack.c.b16 %v682, %v681
        %v698 = vpack.c.b16 %v684, %v683
        %v699 = vpack.c.b16 %v686, %v685
        %v700 = vpack.c.b16 %v688, %v687
        %v701 = vpack.c.b16 %v690, %v689
        %v702 = vpack.c.b16 %v692, %v691
        %v703 = vpack.c.b16 %v694, %v693
        %v704 = vpack.c.b16 %v696, %v695
        %713 = vmatprep.subr.bf16.mxu0 0
        %714 = vmatpush1.bf16.msra.mxu0 %v697
        %715 = vmatprep.subr.bf16.mxu0 0
        %716 = vmatpush1.bf16.msra.mxu0 %v698
        %717 = vmatprep.subr.bf16.mxu0 0
        %718 = vmatpush1.bf16.msra.mxu0 %v699
        %719 = vmatprep.subr.bf16.mxu0 0
        %720 = vmatpush1.bf16.msra.mxu0 %v700
        %721 = vmatprep.subr.bf16.mxu0 0
        %722 = vmatpush1.bf16.msra.mxu0 %v701
        %723 = vmatprep.subr.bf16.mxu0 0
        %724 = vmatpush1.bf16.msra.mxu0 %v702
        %725 = vmatprep.subr.bf16.mxu0 0
        %726 = vmatpush1.bf16.msra.mxu0 %v703
        %727 = vmatprep.subr.bf16.mxu0 0
        %728 = vmatpush1.bf16.msra.mxu0 %v704
        %729 = vmatprep.subr.bf16.mxu0 0
        %730 = vmatpush1.bf16.msra.mxu0 0
        %731 = vmatprep.subr.bf16.mxu0 0
        %732 = vmatpush1.bf16.msra.mxu0 0
        %733 = vmatprep.subr.bf16.mxu0 0
        %734 = vmatpush1.bf16.msra.mxu0 0
        %735 = vmatprep.subr.bf16.mxu0 0
        %736 = vmatpush1.bf16.msra.mxu0 0
        %737 = vmatprep.subr.bf16.mxu0 0
        %738 = vmatpush1.bf16.msra.mxu0 0
        %739 = vmatprep.subr.bf16.mxu0 0
        %740 = vmatpush1.bf16.msra.mxu0 0
        %741 = vmatprep.subr.bf16.mxu0 0
        %742 = vmatpush1.bf16.msra.mxu0 0
        %743 = vmatprep.subr.bf16.mxu0 0
        %744 = vmatpush1.bf16.msra.mxu0 0
        %745 = vmatprep.mubr.bf16.mxu0 0
        %746 = vmatmul.mubr.bf16.gmra.mrb[0].mxu0 %v502
        %v747 = vpop.f32.mrb[0].mxu0
        %v748 = vadd.f32 %v663, %v747
        %v749 = vpop.f32.mrb[0].mxu0
        %v750 = vpop.f32.mrb[0].mxu0
        %v751 = vadd.f32 %v663, %v750
        %v752 = vpop.f32.mrb[0].mxu0
        %753 = vmatprep.mubr.bf16.mxu0 0
        %754 = vmatmul.mubr.bf16.gmra.mrb[0].mxu0 %v503
        %v755 = vpop.f32.mrb[0].mxu0
        %v756 = vadd.f32 %v663, %v755
        %v757 = vpop.f32.mrb[0].mxu0
        %v758 = vpop.f32.mrb[0].mxu0
        %v759 = vadd.f32 %v663, %v758
        %v760 = vpop.f32.mrb[0].mxu0
        %761 = vmatprep.mubr.bf16.mxu0 0
        %762 = vmatmul.mubr.bf16.gmra.mrb[0].mxu0 %v504
        %v763 = vpop.f32.mrb[0].mxu0
        %v764 = vadd.f32 %v663, %v763
        %v765 = vpop.f32.mrb[0].mxu0
        %v766 = vpop.f32.mrb[0].mxu0
        %v767 = vadd.f32 %v663, %v766
        %v768 = vpop.f32.mrb[0].mxu0
        %769 = vmatprep.mubr.bf16.mxu0 0
        %770 = vmatmul.mubr.bf16.gmra.mrb[0].mxu0 %v505
        %v771 = vpop.f32.mrb[0].mxu0
        %v772 = vadd.f32 %v663, %v771
        %v773 = vpop.f32.mrb[0].mxu0
        %v774 = vpop.f32.mrb[0].mxu0
        %v775 = vadd.f32 %v663, %v774
        %v776 = vpop.f32.mrb[0].mxu0
        %777 = vdwg.mxu0
        %v778 = vld [vmem:[%s5] sm:$0xff]
        %v779 = vld [vmem:[%s5 + $0x8] sm:$0xff]
        %v780 = vld [vmem:[%s5 + $0x10] sm:$0xff]
        %v781 = vld [vmem:[%s5 + $0x18] sm:$0xff]
        %v782 = vld [vmem:[%s5 + $0x20] sm:$0xff]
        %v783 = vld [vmem:[%s5 + $0x28] sm:$0xff]
        %v784 = vld [vmem:[%s5 + $0x30] sm:$0xff]
        %v785 = vld [vmem:[%s5 + $0x38] sm:$0xff]
        %v786 = vld [vmem:[%s5 + $0x40] sm:$0xff]
        %v787 = vld [vmem:[%s5 + $0x48] sm:$0xff]
        %v788 = vld [vmem:[%s5 + $0x50] sm:$0xff]
        %v789 = vld [vmem:[%s5 + $0x58] sm:$0xff]
        %v790 = vld [vmem:[%s5 + $0x60] sm:$0xff]
        %v791 = vld [vmem:[%s5 + $0x68] sm:$0xff]
        %v792 = vld [vmem:[%s5 + $0x70] sm:$0xff]
        %v793 = vld [vmem:[%s5 + $0x78] sm:$0xff]
        %v794 = vld [vmem:[%s6] sm:$0x3]
        %v796 = vlaneseq
        %v797 = vshrl.u32 %v796, 7
        %v798 = vsub.s32 0, %v797
        %v799 = vrot.slane %v794, %v798
        %v800 = vlaneseq
        %v801 = vshrl.u32 %v800, 7
        %v802 = vsub.s32 1, %v801
        %v803 = vrot.slane %v794, %v802
        %v822 = vunpack.c.l.b16 %v778
        %v823 = vunpack.c.h.b16 %v778
        %v824 = vunpack.c.l.b16 %v779
        %v825 = vunpack.c.h.b16 %v779
        %v826 = vunpack.c.l.b16 %v780
        %v827 = vunpack.c.h.b16 %v780
        %v828 = vunpack.c.l.b16 %v781
        %v829 = vunpack.c.h.b16 %v781
        %v830 = vunpack.c.l.b16 %v782
        %v831 = vunpack.c.h.b16 %v782
        %v832 = vunpack.c.l.b16 %v783
        %v833 = vunpack.c.h.b16 %v783
        %v834 = vunpack.c.l.b16 %v784
        %v835 = vunpack.c.h.b16 %v784
        %v836 = vunpack.c.l.b16 %v785
        %v837 = vunpack.c.h.b16 %v785
        %v838 = vunpack.c.l.b16 %v786
        %v839 = vunpack.c.h.b16 %v786
        %v840 = vunpack.c.l.b16 %v787
        %v841 = vunpack.c.h.b16 %v787
        %v842 = vunpack.c.l.b16 %v788
        %v843 = vunpack.c.h.b16 %v788
        %v844 = vunpack.c.l.b16 %v789
        %v845 = vunpack.c.h.b16 %v789
        %v846 = vunpack.c.l.b16 %v790
        %v847 = vunpack.c.h.b16 %v790
        %v848 = vunpack.c.l.b16 %v791
        %v849 = vunpack.c.h.b16 %v791
        %v850 = vunpack.c.l.b16 %v792
        %v851 = vunpack.c.h.b16 %v792
        %v852 = vunpack.c.l.b16 %v793
        %v853 = vunpack.c.h.b16 %v793
        %v854 = vpack.c.b16 %v824, %v822
        %v855 = vpack.c.b16 %v825, %v823
        %v856 = vpack.c.b16 %v828, %v826
        %v857 = vpack.c.b16 %v829, %v827
        %v858 = vpack.c.b16 %v832, %v830
        %v859 = vpack.c.b16 %v833, %v831
        %v860 = vpack.c.b16 %v836, %v834
        %v861 = vpack.c.b16 %v837, %v835
        %v862 = vpack.c.b16 %v840, %v838
        %v863 = vpack.c.b16 %v841, %v839
        %v864 = vpack.c.b16 %v844, %v842
        %v865 = vpack.c.b16 %v845, %v843
        %v866 = vpack.c.b16 %v848, %v846
        %v867 = vpack.c.b16 %v849, %v847
        %v868 = vpack.c.b16 %v852, %v850
        %v869 = vpack.c.b16 %v853, %v851
        %886 = vmatprep.subr.bf16.mxu0 %v855
        %887 = vmatpush1.bf16.msra.mxu0 %v854
        %888 = vmatprep.subr.bf16.mxu0 %v857
        %889 = vmatpush1.bf16.msra.mxu0 %v856
        %890 = vmatprep.subr.bf16.mxu0 %v859
        %891 = vmatpush1.bf16.msra.mxu0 %v858
        %892 = vmatprep.subr.bf16.mxu0 %v861
        %893 = vmatpush1.bf16.msra.mxu0 %v860
        %894 = vmatprep.subr.bf16.mxu0 %v863
        %895 = vmatpush1.bf16.msra.mxu0 %v862
        %896 = vmatprep.subr.bf16.mxu0 %v865
        %897 = vmatpush1.bf16.msra.mxu0 %v864
        %898 = vmatprep.subr.bf16.mxu0 %v867
        %899 = vmatpush1.bf16.msra.mxu0 %v866
        %900 = vmatprep.subr.bf16.mxu0 %v869
        %901 = vmatpush1.bf16.msra.mxu0 %v868
        %902 = vmatprep.subr.bf16.mxu0 0
        %903 = vmatpush1.bf16.msra.mxu0 0
        %904 = vmatprep.subr.bf16.mxu0 0
        %905 = vmatpush1.bf16.msra.mxu0 0
        %906 = vmatprep.subr.bf16.mxu0 0
        %907 = vmatpush1.bf16.msra.mxu0 0
        %908 = vmatprep.subr.bf16.mxu0 0
        %909 = vmatpush1.bf16.msra.mxu0 0
        %910 = vmatprep.subr.bf16.mxu0 0
        %911 = vmatpush1.bf16.msra.mxu0 0
        %912 = vmatprep.subr.bf16.mxu0 0
        %913 = vmatpush1.bf16.msra.mxu0 0
        %914 = vmatprep.subr.bf16.mxu0 0
        %915 = vmatpush1.bf16.msra.mxu0 0
        %916 = vmatprep.subr.bf16.mxu0 0
        %917 = vmatpush1.bf16.msra.mxu0 0
        %918 = vmatprep.mubr.bf16.mxu0 0
        %919 = vmatmul.mubr.bf16.gmra.mrb[0].mxu0 %v502
        %v920 = vpop.f32.mrb[0].mxu0
        %v921 = vadd.f32 %v799, %v920
        %v922 = vpop.f32.mrb[0].mxu0
        %v923 = vadd.f32 %v803, %v922
        %v924 = vpop.f32.mrb[0].mxu0
        %v925 = vadd.f32 %v799, %v924
        %v926 = vpop.f32.mrb[0].mxu0
        %v927 = vadd.f32 %v803, %v926
        %928 = vmatprep.mubr.bf16.mxu0 0
        %929 = vmatmul.mubr.bf16.gmra.mrb[0].mxu0 %v503
        %v930 = vpop.f32.mrb[0].mxu0
        %v931 = vadd.f32 %v799, %v930
        %v932 = vpop.f32.mrb[0].mxu0
        %v933 = vadd.f32 %v803, %v932
        %v934 = vpop.f32.mrb[0].mxu0
        %v935 = vadd.f32 %v799, %v934
        %v936 = vpop.f32.mrb[0].mxu0
        %v937 = vadd.f32 %v803, %v936
        %938 = vmatprep.mubr.bf16.mxu0 0
        %939 = vmatmul.mubr.bf16.gmra.mrb[0].mxu0 %v504
        %v940 = vpop.f32.mrb[0].mxu0
        %v941 = vadd.f32 %v799, %v940
        %v942 = vpop.f32.mrb[0].mxu0
        %v943 = vadd.f32 %v803, %v942
        %v944 = vpop.f32.mrb[0].mxu0
        %v945 = vadd.f32 %v799, %v944
        %v946 = vpop.f32.mrb[0].mxu0
        %v947 = vadd.f32 %v803, %v946
        %948 = vmatprep.mubr.bf16.mxu0 0
        %949 = vmatmul.mubr.bf16.gmra.mrb[0].mxu0 %v505
        %v950 = vpop.f32.mrb[0].mxu0
        %v951 = vadd.f32 %v799, %v950
        %v952 = vpop.f32.mrb[0].mxu0
        %v953 = vadd.f32 %v803, %v952
        %v954 = vpop.f32.mrb[0].mxu0
        %v955 = vadd.f32 %v799, %v954
        %v956 = vpop.f32.mrb[0].mxu0
        %v957 = vadd.f32 %v803, %v956
        %958 = vdwg.mxu0
        %v959 = vpack.c.bf16 %v615, %v612
        %v960 = vpack.c.bf16 %v623, %v620
        %v961 = vpack.c.bf16 %v631, %v628
        %v962 = vpack.c.bf16 %v639, %v636
        %v963 = vpack.c.bf16 %v751, %v748
        %v964 = vpack.c.bf16 %v759, %v756
        %v965 = vpack.c.bf16 %v767, %v764
        %v966 = vpack.c.bf16 %v775, %v772
        %v967 = vpack.c.bf16 %v925, %v921
        %v968 = vpack.c.bf16 %v927, %v923
        %v969 = vpack.c.bf16 %v935, %v931
        %v970 = vpack.c.bf16 %v937, %v933
        %v971 = vpack.c.bf16 %v945, %v941
        %v972 = vpack.c.bf16 %v947, %v943
        %v973 = vpack.c.bf16 %v955, %v951
        %v974 = vpack.c.bf16 %v957, %v953
        %v975 = vld [vmem:[%s8] sm:$0x1]
        %vm976 = vcmask 130048
        %v978 = vsel %vm976, %v959, 0
        %v981 = vsel %vm976, %v960, 0
        %v984 = vsel %vm976, %v961, 0
        %v987 = vsel %vm976, %v962, 0
        %v990 = vsel %vm976, %v963, 0
        %v993 = vsel %vm976, %v964, 0
        %v996 = vsel %vm976, %v965, 0
        %v999 = vsel %vm976, %v966, 0
        %1001 = vmatprep.subr.bf16.mxu0 0
        %1002 = vmatpush1.bf16.xpose.msra.mxu0 %v990
        %1003 = vmatprep.subr.bf16.mxu0 0
        %1004 = vmatpush1.bf16.xpose.msra.mxu0 %v993
        %1005 = vmatprep.subr.bf16.mxu0 0
        %1006 = vmatpush1.bf16.xpose.msra.mxu0 %v996
        %1007 = vmatprep.subr.bf16.mxu0 0
        %1008 = vmatpush1.bf16.xpose.msra.mxu0 %v999
        %1009 = vmatprep.subr.bf16.mxu0 0
        %1010 = vmatpush1.bf16.xpose.msra.mxu0 0
        %1011 = vmatprep.subr.bf16.mxu0 0
        %1012 = vmatpush1.bf16.xpose.msra.mxu0 0
        %1013 = vmatprep.subr.bf16.mxu0 0
        %1014 = vmatpush1.bf16.xpose.msra.mxu0 0
        %1015 = vmatprep.subr.bf16.mxu0 0
        %1016 = vmatpush1.bf16.xpose.msra.mxu0 0
        %1017 = vmatprep.subr.bf16.mxu0 0
        %1018 = vmatpush1.bf16.xpose.msra.mxu0 0
        %1019 = vmatprep.subr.bf16.mxu0 0
        %1020 = vmatpush1.bf16.xpose.msra.mxu0 0
        %1021 = vmatprep.subr.bf16.mxu0 0
        %1022 = vmatpush1.bf16.xpose.msra.mxu0 0
        %1023 = vmatprep.subr.bf16.mxu0 0
        %1024 = vmatpush1.bf16.xpose.msra.mxu0 0
        %1025 = vmatprep.subr.bf16.mxu0 0
        %1026 = vmatpush1.bf16.xpose.msra.mxu0 0
        %1027 = vmatprep.subr.bf16.mxu0 0
        %1028 = vmatpush1.bf16.xpose.msra.mxu0 0
        %1029 = vmatprep.subr.bf16.mxu0 0
        %1030 = vmatpush1.bf16.xpose.msra.mxu0 0
        %1031 = vmatprep.subr.bf16.mxu0 0
        %1032 = vmatpush1.bf16.xpose.msra.mxu0 0
        %1033 = vmatprep.mubr.bf16.mxu0 0
        %1034 = vmatmul.mubr.bf16.gmra.mrb[0].mxu0 %v978
        %v1035 = vpop.f32.mrb[0].mxu0
        %v1036 = vadd.f32 0.0, %v1035
        %v1037 = vpop.f32.mrb[0].mxu0
        %v1038 = vpop.f32.mrb[0].mxu0
        %v1039 = vadd.f32 0.0, %v1038
        %v1040 = vpop.f32.mrb[0].mxu0
        %1041 = vmatprep.mubr.bf16.mxu0 0
        %1042 = vmatmul.mubr.bf16.gmra.mrb[0].mxu0 %v981
        %v1043 = vpop.f32.mrb[0].mxu0
        %v1044 = vadd.f32 0.0, %v1043
        %v1045 = vpop.f32.mrb[0].mxu0
        %v1046 = vpop.f32.mrb[0].mxu0
        %v1047 = vadd.f32 0.0, %v1046
        %v1048 = vpop.f32.mrb[0].mxu0
        %1049 = vmatprep.mubr.bf16.mxu0 0
        %1050 = vmatmul.mubr.bf16.gmra.mrb[0].mxu0 %v984
        %v1051 = vpop.f32.mrb[0].mxu0
        %v1052 = vadd.f32 0.0, %v1051
        %v1053 = vpop.f32.mrb[0].mxu0
        %v1054 = vpop.f32.mrb[0].mxu0
        %v1055 = vadd.f32 0.0, %v1054
        %v1056 = vpop.f32.mrb[0].mxu0
        %1057 = vmatprep.mubr.bf16.mxu0 0
        %1058 = vmatmul.mubr.bf16.gmra.mrb[0].mxu0 %v987
        %v1059 = vpop.f32.mrb[0].mxu0
        %v1060 = vadd.f32 0.0, %v1059
        %v1061 = vpop.f32.mrb[0].mxu0
        %v1062 = vpop.f32.mrb[0].mxu0
        %v1063 = vadd.f32 0.0, %v1062
        %v1064 = vpop.f32.mrb[0].mxu0
        %1065 = vdwg.mxu0
        %vm1066 = vcmask 523264
        %v1067 = vsel %vm1066, %v1036, -inf
        %1068 = vmax.xlane.f32.xlu0 %v1067
        %v1069 = vpop.xlane.xlu0 %1068
        %v1070 = vsel %vm1066, %v1039, -inf
        %1071 = vmax.xlane.f32.xlu0 %v1070
        %v1072 = vpop.xlane.xlu0 %1071
        %v1073 = vsel %vm1066, %v1044, -inf
        %1074 = vmax.xlane.f32.xlu0 %v1073
        %v1075 = vpop.xlane.xlu0 %1074
        %v1076 = vsel %vm1066, %v1047, -inf
        %1077 = vmax.xlane.f32.xlu0 %v1076
        %v1078 = vpop.xlane.xlu0 %1077
        %v1079 = vsel %vm1066, %v1052, -inf
        %1080 = vmax.xlane.f32.xlu0 %v1079
        %v1081 = vpop.xlane.xlu0 %1080
        %v1082 = vsel %vm1066, %v1055, -inf
        %1083 = vmax.xlane.f32.xlu0 %v1082
        %v1084 = vpop.xlane.xlu0 %1083
        %v1085 = vsel %vm1066, %v1060, -inf
        %1086 = vmax.xlane.f32.xlu0 %v1085
        %v1087 = vpop.xlane.xlu0 %1086
        %v1088 = vsel %vm1066, %v1063, -inf
        %1089 = vmax.xlane.f32.xlu0 %v1088
        %v1090 = vpop.xlane.xlu0 %1089
        %v1091 = vsub.f32 %v1036, %v1069
        %v1092 = vsub.f32 %v1039, %v1072
        %v1093 = vsub.f32 %v1044, %v1075
        %v1094 = vsub.f32 %v1047, %v1078
        %v1095 = vsub.f32 %v1052, %v1081
        %v1096 = vsub.f32 %v1055, %v1084
        %v1097 = vsub.f32 %v1060, %v1087
        %v1098 = vsub.f32 %v1063, %v1090
        %v1099 = vmul.f32 %v1091, 1.442695
        %v1100 = vpow.pop %v1099
        %v1101 = vmul.f32 %v1092, 1.442695
        %v1102 = vpow.pop %v1101
        %v1103 = vmul.f32 %v1093, 1.442695
        %v1104 = vpow.pop %v1103
        %v1105 = vmul.f32 %v1094, 1.442695
        %v1106 = vpow.pop %v1105
        %v1107 = vmul.f32 %v1095, 1.442695
        %v1108 = vpow.pop %v1107
        %v1109 = vmul.f32 %v1096, 1.442695
        %v1110 = vpow.pop %v1109
        %v1111 = vmul.f32 %v1097, 1.442695
        %v1112 = vpow.pop %v1111
        %v1113 = vmul.f32 %v1098, 1.442695
        %v1114 = vpow.pop %v1113
        %v1115 = vsel %vm1066, %v1100, 0.0
        %1116 = vadd.xlane.f32.xlu0 %v1115
        %v1117 = vpop.xlane.xlu0 %1116
        %v1118 = vsel %vm1066, %v1102, 0.0
        %1119 = vadd.xlane.f32.xlu0 %v1118
        %v1120 = vpop.xlane.xlu0 %1119
        %v1121 = vsel %vm1066, %v1104, 0.0
        %1122 = vadd.xlane.f32.xlu0 %v1121
        %v1123 = vpop.xlane.xlu0 %1122
        %v1124 = vsel %vm1066, %v1106, 0.0
        %1125 = vadd.xlane.f32.xlu0 %v1124
        %v1126 = vpop.xlane.xlu0 %1125
        %v1127 = vsel %vm1066, %v1108, 0.0
        %1128 = vadd.xlane.f32.xlu0 %v1127
        %v1129 = vpop.xlane.xlu0 %1128
        %v1130 = vsel %vm1066, %v1110, 0.0
        %1131 = vadd.xlane.f32.xlu0 %v1130
        %v1132 = vpop.xlane.xlu0 %1131
        %v1133 = vsel %vm1066, %v1112, 0.0
        %1134 = vadd.xlane.f32.xlu0 %v1133
        %v1135 = vpop.xlane.xlu0 %1134
        %v1136 = vsel %vm1066, %v1114, 0.0
        %1137 = vadd.xlane.f32.xlu0 %v1136
        %v1138 = vpop.xlane.xlu0 %1137
        %v1139 = vrcp.pop %v1117
        %v1140 = vrcp.pop %v1120
        %v1141 = vrcp.pop %v1123
        %v1142 = vrcp.pop %v1126
        %v1143 = vrcp.pop %v1129
        %v1144 = vrcp.pop %v1132
        %v1145 = vrcp.pop %v1135
        %v1146 = vrcp.pop %v1138
        %v1147 = vmul.f32 %v1100, %v1139
        %v1148 = vmul.f32 %v1102, %v1140
        %v1149 = vmul.f32 %v1104, %v1141
        %v1150 = vmul.f32 %v1106, %v1142
        %v1151 = vmul.f32 %v1108, %v1143
        %v1152 = vmul.f32 %v1110, %v1144
        %v1153 = vmul.f32 %v1112, %v1145
        %v1154 = vmul.f32 %v1114, %v1146
        %v1155 = vpack.c.bf16 %v1148, %v1147
        %v1156 = vpack.c.bf16 %v1150, %v1149
        %v1157 = vpack.c.bf16 %v1152, %v1151
        %v1158 = vpack.c.bf16 %v1154, %v1153
        %v1160 = vsel %vm1066, %v1155, 0
        %v1163 = vsel %vm1066, %v1156, 0
        %v1166 = vsel %vm1066, %v1157, 0
        %v1169 = vsel %vm1066, %v1158, 0
        %1171 = vmatprep.subr.bf16.mxu0 0
        %1172 = vmatpush1.bf16.msra.mxu0 %v967
        %1173 = vmatprep.subr.bf16.mxu0 0
        %1174 = vmatpush1.bf16.msra.mxu0 %v969
        %1175 = vmatprep.subr.bf16.mxu0 0
        %1176 = vmatpush1.bf16.msra.mxu0 %v971
        %1177 = vmatprep.subr.bf16.mxu0 0
        %1178 = vmatpush1.bf16.msra.mxu0 %v973
        %1179 = vmatprep.subr.bf16.mxu0 0
        %1180 = vmatpush1.bf16.msra.mxu0 0
        %1181 = vmatprep.subr.bf16.mxu0 0
        %1182 = vmatpush1.bf16.msra.mxu0 0
        %1183 = vmatprep.subr.bf16.mxu0 0
        %1184 = vmatpush1.bf16.msra.mxu0 0
        %1185 = vmatprep.subr.bf16.mxu0 0
        %1186 = vmatpush1.bf16.msra.mxu0 0
        %1187 = vmatprep.subr.bf16.mxu0 0
        %1188 = vmatpush1.bf16.msra.mxu0 0
        %1189 = vmatprep.subr.bf16.mxu0 0
        %1190 = vmatpush1.bf16.msra.mxu0 0
        %1191 = vmatprep.subr.bf16.mxu0 0
        %1192 = vmatpush1.bf16.msra.mxu0 0
        %1193 = vmatprep.subr.bf16.mxu0 0
        %1194 = vmatpush1.bf16.msra.mxu0 0
        %1195 = vmatprep.subr.bf16.mxu0 0
        %1196 = vmatpush1.bf16.msra.mxu0 0
        %1197 = vmatprep.subr.bf16.mxu0 0
        %1198 = vmatpush1.bf16.msra.mxu0 0
        %1199 = vmatprep.subr.bf16.mxu0 0
        %1200 = vmatpush1.bf16.msra.mxu0 0
        %1201 = vmatprep.subr.bf16.mxu0 0
        %1202 = vmatpush1.bf16.msra.mxu0 0
        %1203 = vmatprep.mubr.bf16.mxu0 0
        %1204 = vmatmul.mubr.bf16.gmra.mrb[0].mxu0 %v1160
        %v1205 = vpop.f32.mrb[0].mxu0
        %v1206 = vadd.f32 0.0, %v1205
        %v1207 = vpop.f32.mrb[0].mxu0
        %v1208 = vpop.f32.mrb[0].mxu0
        %v1209 = vadd.f32 0.0, %v1208
        %v1210 = vpop.f32.mrb[0].mxu0
        %1211 = vmatprep.mubr.bf16.mxu0 0
        %1212 = vmatmul.mubr.bf16.gmra.mrb[0].mxu0 %v1163
        %v1213 = vpop.f32.mrb[0].mxu0
        %v1214 = vadd.f32 0.0, %v1213
        %v1215 = vpop.f32.mrb[0].mxu0
        %v1216 = vpop.f32.mrb[0].mxu0
        %v1217 = vadd.f32 0.0, %v1216
        %v1218 = vpop.f32.mrb[0].mxu0
        %1219 = vmatprep.mubr.bf16.mxu0 0
        %1220 = vmatmul.mubr.bf16.gmra.mrb[0].mxu0 %v1166
        %v1221 = vpop.f32.mrb[0].mxu0
        %v1222 = vadd.f32 0.0, %v1221
        %v1223 = vpop.f32.mrb[0].mxu0
        %v1224 = vpop.f32.mrb[0].mxu0
        %v1225 = vadd.f32 0.0, %v1224
        %v1226 = vpop.f32.mrb[0].mxu0
        %1227 = vmatprep.mubr.bf16.mxu0 0
        %1228 = vmatmul.mubr.bf16.gmra.mrb[0].mxu0 %v1169
        %v1229 = vpop.f32.mrb[0].mxu0
        %v1230 = vadd.f32 0.0, %v1229
        %v1231 = vpop.f32.mrb[0].mxu0
        %v1232 = vpop.f32.mrb[0].mxu0
        %v1233 = vadd.f32 0.0, %v1232
        %v1234 = vpop.f32.mrb[0].mxu0
        %1235 = vdwg.mxu0
        %v1236 = vmax.f32 %v1206, 0.0
        %v1237 = vmax.f32 %v1209, 0.0
        %v1238 = vmax.f32 %v1214, 0.0
        %v1239 = vmax.f32 %v1217, 0.0
        %v1240 = vmax.f32 %v1222, 0.0
        %v1241 = vmax.f32 %v1225, 0.0
        %v1242 = vmax.f32 %v1230, 0.0
        %v1243 = vmax.f32 %v1233, 0.0
        %v1244 = vmin.f32 %v1236, 6.0
        %v1245 = vmin.f32 %v1237, 6.0
        %v1246 = vmin.f32 %v1238, 6.0
        %v1247 = vmin.f32 %v1239, 6.0
        %v1248 = vmin.f32 %v1240, 6.0
        %v1249 = vmin.f32 %v1241, 6.0
        %v1250 = vmin.f32 %v1242, 6.0
        %v1251 = vmin.f32 %v1243, 6.0
        %v1252 = vpack.c.bf16 %v1245, %v1244
        %v1253 = vpack.c.bf16 %v1247, %v1246
        %v1254 = vpack.c.bf16 %v1249, %v1248
        %v1255 = vpack.c.bf16 %v1251, %v1250
        %v1256 = vld [vmem:[%s7] sm:$0xf]
        %v1257 = vld [vmem:[%s7 + $0x4] sm:$0xf]
        %v1258 = vld [vmem:[%s7 + $0x8] sm:$0xf]
        %v1259 = vld [vmem:[%s7 + $0xc] sm:$0xf]
        %1264 = vrot.lane.b32.xlu0 %v959, 112
        %v1265 = vpop.permute.xlu0 %1264
        %1266 = vrot.lane.b32.xlu0 %v960, 112
        %v1267 = vpop.permute.xlu0 %1266
        %1268 = vrot.lane.b32.xlu0 %v961, 112
        %v1269 = vpop.permute.xlu0 %1268
        %1270 = vrot.lane.b32.xlu0 %v962, 112
        %v1271 = vpop.permute.xlu0 %1270
        %1276 = vrot.lane.b32.xlu0 %v963, 112
        %v1277 = vpop.permute.xlu0 %1276
        %1278 = vrot.lane.b32.xlu0 %v964, 112
        %v1279 = vpop.permute.xlu0 %1278
        %1280 = vrot.lane.b32.xlu0 %v965, 112
        %v1281 = vpop.permute.xlu0 %1280
        %1282 = vrot.lane.b32.xlu0 %v966, 112
        %v1283 = vpop.permute.xlu0 %1282
        %v1285 = vsel %vm976, %v1265, 0
        %v1288 = vsel %vm976, %v1267, 0
        %v1291 = vsel %vm976, %v1269, 0
        %v1294 = vsel %vm976, %v1271, 0
        %v1297 = vsel %vm976, %v1277, 0
        %v1300 = vsel %vm976, %v1279, 0
        %v1303 = vsel %vm976, %v1281, 0
        %v1306 = vsel %vm976, %v1283, 0
        %1308 = vmatprep.subr.bf16.mxu0 0
        %1309 = vmatpush1.bf16.xpose.msra.mxu0 %v1297
        %1310 = vmatprep.subr.bf16.mxu0 0
        %1311 = vmatpush1.bf16.xpose.msra.mxu0 %v1300
        %1312 = vmatprep.subr.bf16.mxu0 0
        %1313 = vmatpush1.bf16.xpose.msra.mxu0 %v1303
        %1314 = vmatprep.subr.bf16.mxu0 0
        %1315 = vmatpush1.bf16.xpose.msra.mxu0 %v1306
        %1316 = vmatprep.subr.bf16.mxu0 0
        %1317 = vmatpush1.bf16.xpose.msra.mxu0 0
        %1318 = vmatprep.subr.bf16.mxu0 0
        %1319 = vmatpush1.bf16.xpose.msra.mxu0 0
        %1320 = vmatprep.subr.bf16.mxu0 0
        %1321 = vmatpush1.bf16.xpose.msra.mxu0 0
        %1322 = vmatprep.subr.bf16.mxu0 0
        %1323 = vmatpush1.bf16.xpose.msra.mxu0 0
        %1324 = vmatprep.subr.bf16.mxu0 0
        %1325 = vmatpush1.bf16.xpose.msra.mxu0 0
        %1326 = vmatprep.subr.bf16.mxu0 0
        %1327 = vmatpush1.bf16.xpose.msra.mxu0 0
        %1328 = vmatprep.subr.bf16.mxu0 0
        %1329 = vmatpush1.bf16.xpose.msra.mxu0 0
        %1330 = vmatprep.subr.bf16.mxu0 0
        %1331 = vmatpush1.bf16.xpose.msra.mxu0 0
        %1332 = vmatprep.subr.bf16.mxu0 0
        %1333 = vmatpush1.bf16.xpose.msra.mxu0 0
        %1334 = vmatprep.subr.bf16.mxu0 0
        %1335 = vmatpush1.bf16.xpose.msra.mxu0 0
        %1336 = vmatprep.subr.bf16.mxu0 0
        %1337 = vmatpush1.bf16.xpose.msra.mxu0 0
        %1338 = vmatprep.subr.bf16.mxu0 0
        %1339 = vmatpush1.bf16.xpose.msra.mxu0 0
        %1340 = vmatprep.mubr.bf16.mxu0 0
        %1341 = vmatmul.mubr.bf16.gmra.mrb[0].mxu0 %v1285
        %v1342 = vpop.f32.mrb[0].mxu0
        %v1343 = vadd.f32 0.0, %v1342
        %v1344 = vpop.f32.mrb[0].mxu0
        %v1345 = vpop.f32.mrb[0].mxu0
        %v1346 = vadd.f32 0.0, %v1345
        %v1347 = vpop.f32.mrb[0].mxu0
        %1348 = vmatprep.mubr.bf16.mxu0 0
        %1349 = vmatmul.mubr.bf16.gmra.mrb[0].mxu0 %v1288
        %v1350 = vpop.f32.mrb[0].mxu0
        %v1351 = vadd.f32 0.0, %v1350
        %v1352 = vpop.f32.mrb[0].mxu0
        %v1353 = vpop.f32.mrb[0].mxu0
        %v1354 = vadd.f32 0.0, %v1353
        %v1355 = vpop.f32.mrb[0].mxu0
        %1356 = vmatprep.mubr.bf16.mxu0 0
        %1357 = vmatmul.mubr.bf16.gmra.mrb[0].mxu0 %v1291
        %v1358 = vpop.f32.mrb[0].mxu0
        %v1359 = vadd.f32 0.0, %v1358
        %v1360 = vpop.f32.mrb[0].mxu0
        %v1361 = vpop.f32.mrb[0].mxu0
        %v1362 = vadd.f32 0.0, %v1361
        %v1363 = vpop.f32.mrb[0].mxu0
        %1364 = vmatprep.mubr.bf16.mxu0 0
        %1365 = vmatmul.mubr.bf16.gmra.mrb[0].mxu0 %v1294
        %v1366 = vpop.f32.mrb[0].mxu0
        %v1367 = vadd.f32 0.0, %v1366
        %v1368 = vpop.f32.mrb[0].mxu0
        %v1369 = vpop.f32.mrb[0].mxu0
        %v1370 = vadd.f32 0.0, %v1369
        %v1371 = vpop.f32.mrb[0].mxu0
        %1372 = vdwg.mxu0
        %v1373 = vsel %vm1066, %v1343, -inf
        %1374 = vmax.xlane.f32.xlu0 %v1373
        %v1375 = vpop.xlane.xlu0 %1374
        %v1376 = vsel %vm1066, %v1346, -inf
        %1377 = vmax.xlane.f32.xlu0 %v1376
        %v1378 = vpop.xlane.xlu0 %1377
        %v1379 = vsel %vm1066, %v1351, -inf
        %1380 = vmax.xlane.f32.xlu0 %v1379
        %v1381 = vpop.xlane.xlu0 %1380
        %v1382 = vsel %vm1066, %v1354, -inf
        %1383 = vmax.xlane.f32.xlu0 %v1382
        %v1384 = vpop.xlane.xlu0 %1383
        %v1385 = vsel %vm1066, %v1359, -inf
        %1386 = vmax.xlane.f32.xlu0 %v1385
        %v1387 = vpop.xlane.xlu0 %1386
        %v1388 = vsel %vm1066, %v1362, -inf
        %1389 = vmax.xlane.f32.xlu0 %v1388
        %v1390 = vpop.xlane.xlu0 %1389
        %v1391 = vsel %vm1066, %v1367, -inf
        %1392 = vmax.xlane.f32.xlu0 %v1391
        %v1393 = vpop.xlane.xlu0 %1392
        %v1394 = vsel %vm1066, %v1370, -inf
        %1395 = vmax.xlane.f32.xlu0 %v1394
        %v1396 = vpop.xlane.xlu0 %1395
        %v1397 = vsub.f32 %v1343, %v1375
        %v1398 = vsub.f32 %v1346, %v1378
        %v1399 = vsub.f32 %v1351, %v1381
        %v1400 = vsub.f32 %v1354, %v1384
        %v1401 = vsub.f32 %v1359, %v1387
        %v1402 = vsub.f32 %v1362, %v1390
        %v1403 = vsub.f32 %v1367, %v1393
        %v1404 = vsub.f32 %v1370, %v1396
        %v1405 = vmul.f32 %v1397, 1.442695
        %v1406 = vpow.pop %v1405
        %v1407 = vmul.f32 %v1398, 1.442695
        %v1408 = vpow.pop %v1407
        %v1409 = vmul.f32 %v1399, 1.442695
        %v1410 = vpow.pop %v1409
        %v1411 = vmul.f32 %v1400, 1.442695
        %v1412 = vpow.pop %v1411
        %v1413 = vmul.f32 %v1401, 1.442695
        %v1414 = vpow.pop %v1413
        %v1415 = vmul.f32 %v1402, 1.442695
        %v1416 = vpow.pop %v1415
        %v1417 = vmul.f32 %v1403, 1.442695
        %v1418 = vpow.pop %v1417
        %v1419 = vmul.f32 %v1404, 1.442695
        %v1420 = vpow.pop %v1419
        %v1421 = vsel %vm1066, %v1406, 0.0
        %1422 = vadd.xlane.f32.xlu0 %v1421
        %v1423 = vpop.xlane.xlu0 %1422
        %v1424 = vsel %vm1066, %v1408, 0.0
        %1425 = vadd.xlane.f32.xlu0 %v1424
        %v1426 = vpop.xlane.xlu0 %1425
        %v1427 = vsel %vm1066, %v1410, 0.0
        %1428 = vadd.xlane.f32.xlu0 %v1427
        %v1429 = vpop.xlane.xlu0 %1428
        %v1430 = vsel %vm1066, %v1412, 0.0
        %1431 = vadd.xlane.f32.xlu0 %v1430
        %v1432 = vpop.xlane.xlu0 %1431
        %v1433 = vsel %vm1066, %v1414, 0.0
        %1434 = vadd.xlane.f32.xlu0 %v1433
        %v1435 = vpop.xlane.xlu0 %1434
        %v1436 = vsel %vm1066, %v1416, 0.0
        %1437 = vadd.xlane.f32.xlu0 %v1436
        %v1438 = vpop.xlane.xlu0 %1437
        %v1439 = vsel %vm1066, %v1418, 0.0
        %1440 = vadd.xlane.f32.xlu0 %v1439
        %v1441 = vpop.xlane.xlu0 %1440
        %v1442 = vsel %vm1066, %v1420, 0.0
        %1443 = vadd.xlane.f32.xlu0 %v1442
        %v1444 = vpop.xlane.xlu0 %1443
        %v1445 = vrcp.pop %v1423
        %v1446 = vrcp.pop %v1426
        %v1447 = vrcp.pop %v1429
        %v1448 = vrcp.pop %v1432
        %v1449 = vrcp.pop %v1435
        %v1450 = vrcp.pop %v1438
        %v1451 = vrcp.pop %v1441
        %v1452 = vrcp.pop %v1444
        %v1453 = vmul.f32 %v1406, %v1445
        %v1454 = vmul.f32 %v1408, %v1446
        %v1455 = vmul.f32 %v1410, %v1447
        %v1456 = vmul.f32 %v1412, %v1448
        %v1457 = vmul.f32 %v1414, %v1449
        %v1458 = vmul.f32 %v1416, %v1450
        %v1459 = vmul.f32 %v1418, %v1451
        %v1460 = vmul.f32 %v1420, %v1452
        %v1461 = vpack.c.bf16 %v1454, %v1453
        %v1462 = vpack.c.bf16 %v1456, %v1455
        %v1463 = vpack.c.bf16 %v1458, %v1457
        %v1464 = vpack.c.bf16 %v1460, %v1459
        %1469 = vrot.lane.b32.xlu0 %v967, 96
        %v1470 = vpop.permute.xlu0 %1469
        %1471 = vrot.lane.b32.xlu0 %v969, 96
        %v1472 = vpop.permute.xlu0 %1471
        %1473 = vrot.lane.b32.xlu0 %v971, 96
        %v1474 = vpop.permute.xlu0 %1473
        %1475 = vrot.lane.b32.xlu0 %v973, 96
        %v1476 = vpop.permute.xlu0 %1475
        %v1482 = vsel %vm1066, %v1461, 0
        %v1485 = vsel %vm1066, %v1462, 0
        %v1488 = vsel %vm1066, %v1463, 0
        %v1491 = vsel %vm1066, %v1464, 0
        %1493 = vmatprep.subr.bf16.mxu0 0
        %1494 = vmatpush1.bf16.msra.mxu0 %v1470
        %1495 = vmatprep.subr.bf16.mxu0 0
        %1496 = vmatpush1.bf16.msra.mxu0 %v1472
        %1497 = vmatprep.subr.bf16.mxu0 0
        %1498 = vmatpush1.bf16.msra.mxu0 %v1474
        %1499 = vmatprep.subr.bf16.mxu0 0
        %1500 = vmatpush1.bf16.msra.mxu0 %v1476
        %1501 = vmatprep.subr.bf16.mxu0 0
        %1502 = vmatpush1.bf16.msra.mxu0 0
        %1503 = vmatprep.subr.bf16.mxu0 0
        %1504 = vmatpush1.bf16.msra.mxu0 0
        %1505 = vmatprep.subr.bf16.mxu0 0
        %1506 = vmatpush1.bf16.msra.mxu0 0
        %1507 = vmatprep.subr.bf16.mxu0 0
        %1508 = vmatpush1.bf16.msra.mxu0 0
        %1509 = vmatprep.subr.bf16.mxu0 0
        %1510 = vmatpush1.bf16.msra.mxu0 0
        %1511 = vmatprep.subr.bf16.mxu0 0
        %1512 = vmatpush1.bf16.msra.mxu0 0
        %1513 = vmatprep.subr.bf16.mxu0 0
        %1514 = vmatpush1.bf16.msra.mxu0 0
        %1515 = vmatprep.subr.bf16.mxu0 0
        %1516 = vmatpush1.bf16.msra.mxu0 0
        %1517 = vmatprep.subr.bf16.mxu0 0
        %1518 = vmatpush1.bf16.msra.mxu0 0
        %1519 = vmatprep.subr.bf16.mxu0 0
        %1520 = vmatpush1.bf16.msra.mxu0 0
        %1521 = vmatprep.subr.bf16.mxu0 0
        %1522 = vmatpush1.bf16.msra.mxu0 0
        %1523 = vmatprep.subr.bf16.mxu0 0
        %1524 = vmatpush1.bf16.msra.mxu0 0
        %1525 = vmatprep.mubr.bf16.mxu0 0
        %1526 = vmatmul.mubr.bf16.gmra.mrb[0].mxu0 %v1482
        %v1527 = vpop.f32.mrb[0].mxu0
        %v1528 = vadd.f32 0.0, %v1527
        %v1529 = vpop.f32.mrb[0].mxu0
        %v1530 = vpop.f32.mrb[0].mxu0
        %v1531 = vadd.f32 0.0, %v1530
        %v1532 = vpop.f32.mrb[0].mxu0
        %1533 = vmatprep.mubr.bf16.mxu0 0
        %1534 = vmatmul.mubr.bf16.gmra.mrb[0].mxu0 %v1485
        %v1535 = vpop.f32.mrb[0].mxu0
        %v1536 = vadd.f32 0.0, %v1535
        %v1537 = vpop.f32.mrb[0].mxu0
        %v1538 = vpop.f32.mrb[0].mxu0
        %v1539 = vadd.f32 0.0, %v1538
        %v1540 = vpop.f32.mrb[0].mxu0
        %1541 = vmatprep.mubr.bf16.mxu0 0
        %1542 = vmatmul.mubr.bf16.gmra.mrb[0].mxu0 %v1488
        %v1543 = vpop.f32.mrb[0].mxu0
        %v1544 = vadd.f32 0.0, %v1543
        %v1545 = vpop.f32.mrb[0].mxu0
        %v1546 = vpop.f32.mrb[0].mxu0
        %v1547 = vadd.f32 0.0, %v1546
        %v1548 = vpop.f32.mrb[0].mxu0
        %1549 = vmatprep.mubr.bf16.mxu0 0
        %1550 = vmatmul.mubr.bf16.gmra.mrb[0].mxu0 %v1491
        %v1551 = vpop.f32.mrb[0].mxu0
        %v1552 = vadd.f32 0.0, %v1551
        %v1553 = vpop.f32.mrb[0].mxu0
        %v1554 = vpop.f32.mrb[0].mxu0
        %v1555 = vadd.f32 0.0, %v1554
        %v1556 = vpop.f32.mrb[0].mxu0
        %1557 = vdwg.mxu0
        %v1558 = vmax.f32 %v1528, 0.0
        %v1559 = vmax.f32 %v1531, 0.0
        %v1560 = vmax.f32 %v1536, 0.0
        %v1561 = vmax.f32 %v1539, 0.0
        %v1562 = vmax.f32 %v1544, 0.0
        %v1563 = vmax.f32 %v1547, 0.0
        %v1564 = vmax.f32 %v1552, 0.0
        %v1565 = vmax.f32 %v1555, 0.0
        %v1566 = vmin.f32 %v1558, 6.0
        %v1567 = vmin.f32 %v1559, 6.0
        %v1568 = vmin.f32 %v1560, 6.0
        %v1569 = vmin.f32 %v1561, 6.0
        %v1570 = vmin.f32 %v1562, 6.0
        %v1571 = vmin.f32 %v1563, 6.0
        %v1572 = vmin.f32 %v1564, 6.0
        %v1573 = vmin.f32 %v1565, 6.0
        %v1574 = vpack.c.bf16 %v1567, %v1566
        %v1575 = vpack.c.bf16 %v1569, %v1568
        %v1576 = vpack.c.bf16 %v1571, %v1570
        %v1577 = vpack.c.bf16 %v1573, %v1572
        %s1578 = scalar_lea.vmem %s7, 16
        %v1579 = vld [vmem:[%s1578] sm:$0xf]
        %v1580 = vld [vmem:[%s1578 + $0x4] sm:$0xf]
        %v1581 = vld [vmem:[%s1578 + $0x8] sm:$0xf]
        %v1582 = vld [vmem:[%s1578 + $0xc] sm:$0xf]
        %v1587 = vunpack.c.l.b16 %v1579
        %v1588 = vunpack.c.l.b16 %v1580
        %v1589 = vunpack.c.l.b16 %v1581
        %v1590 = vunpack.c.l.b16 %v1582
        %v1591 = vpack.c.b16 %v1588, %v1587
        %v1592 = vpack.c.b16 %v1590, %v1589
        %vm1595 = vcmask 261120
        %v1597 = vsel %vm1595, %v1574, 0
        %v1600 = vsel %vm1595, %v1575, 0
        %v1603 = vsel %vm1595, %v1576, 0
        %v1606 = vsel %vm1595, %v1577, 0
        %1608 = vmatprep.subr.bf16.mxu0 0
        %1609 = vmatpush1.bf16.msra.mxu0 %v1591
        %1610 = vmatprep.subr.bf16.mxu0 0
        %1611 = vmatpush1.bf16.msra.mxu0 %v1592
        %1612 = vmatprep.subr.bf16.mxu0 0
        %1613 = vmatpush1.bf16.msra.mxu0 0
        %1614 = vmatprep.subr.bf16.mxu0 0
        %1615 = vmatpush1.bf16.msra.mxu0 0
        %1616 = vmatprep.subr.bf16.mxu0 0
        %1617 = vmatpush1.bf16.msra.mxu0 0
        %1618 = vmatprep.subr.bf16.mxu0 0
        %1619 = vmatpush1.bf16.msra.mxu0 0
        %1620 = vmatprep.subr.bf16.mxu0 0
        %1621 = vmatpush1.bf16.msra.mxu0 0
        %1622 = vmatprep.subr.bf16.mxu0 0
        %1623 = vmatpush1.bf16.msra.mxu0 0
        %1624 = vmatprep.subr.bf16.mxu0 0
        %1625 = vmatpush1.bf16.msra.mxu0 0
        %1626 = vmatprep.subr.bf16.mxu0 0
        %1627 = vmatpush1.bf16.msra.mxu0 0
        %1628 = vmatprep.subr.bf16.mxu0 0
        %1629 = vmatpush1.bf16.msra.mxu0 0
        %1630 = vmatprep.subr.bf16.mxu0 0
        %1631 = vmatpush1.bf16.msra.mxu0 0
        %1632 = vmatprep.subr.bf16.mxu0 0
        %1633 = vmatpush1.bf16.msra.mxu0 0
        %1634 = vmatprep.subr.bf16.mxu0 0
        %1635 = vmatpush1.bf16.msra.mxu0 0
        %1636 = vmatprep.subr.bf16.mxu0 0
        %1637 = vmatpush1.bf16.msra.mxu0 0
        %1638 = vmatprep.subr.bf16.mxu0 0
        %1639 = vmatpush1.bf16.msra.mxu0 0
        %1640 = vmatprep.mubr.bf16.mxu0 0
        %1641 = vmatmul.mubr.bf16.gmra.mrb[0].mxu0 %v1597
        %v1642 = vpop.f32.mrb[0].mxu0
        %v1643 = vadd.f32 0.0, %v1642
        %v1644 = vpop.f32.mrb[0].mxu0
        %v1645 = vpop.f32.mrb[0].mxu0
        %v1646 = vadd.f32 0.0, %v1645
        %v1647 = vpop.f32.mrb[0].mxu0
        %1648 = vmatprep.mubr.bf16.mxu0 0
        %1649 = vmatmul.mubr.bf16.gmra.mrb[0].mxu0 %v1600
        %v1650 = vpop.f32.mrb[0].mxu0
        %v1651 = vadd.f32 0.0, %v1650
        %v1652 = vpop.f32.mrb[0].mxu0
        %v1653 = vpop.f32.mrb[0].mxu0
        %v1654 = vadd.f32 0.0, %v1653
        %v1655 = vpop.f32.mrb[0].mxu0
        %1656 = vmatprep.mubr.bf16.mxu0 0
        %1657 = vmatmul.mubr.bf16.gmra.mrb[0].mxu0 %v1603
        %v1658 = vpop.f32.mrb[0].mxu0
        %v1659 = vadd.f32 0.0, %v1658
        %v1660 = vpop.f32.mrb[0].mxu0
        %v1661 = vpop.f32.mrb[0].mxu0
        %v1662 = vadd.f32 0.0, %v1661
        %v1663 = vpop.f32.mrb[0].mxu0
        %1664 = vmatprep.mubr.bf16.mxu0 0
        %1665 = vmatmul.mubr.bf16.gmra.mrb[0].mxu0 %v1606
        %v1666 = vpop.f32.mrb[0].mxu0
        %v1667 = vadd.f32 0.0, %v1666
        %v1668 = vpop.f32.mrb[0].mxu0
        %v1669 = vpop.f32.mrb[0].mxu0
        %v1670 = vadd.f32 0.0, %v1669
        %v1671 = vpop.f32.mrb[0].mxu0
        %1672 = vdwg.mxu0
        %v1677 = vunpack.c.l.b16 %v1256
        %v1678 = vunpack.c.l.b16 %v1257
        %v1679 = vunpack.c.l.b16 %v1258
        %v1680 = vunpack.c.l.b16 %v1259
        %v1681 = vpack.c.b16 %v1678, %v1677
        %v1682 = vpack.c.b16 %v1680, %v1679
        %v1686 = vsel %vm1595, %v1252, 0
        %v1689 = vsel %vm1595, %v1253, 0
        %v1692 = vsel %vm1595, %v1254, 0
        %v1695 = vsel %vm1595, %v1255, 0
        %1697 = vmatprep.subr.bf16.mxu0 0
        %1698 = vmatpush1.bf16.msra.mxu0 %v1681
        %1699 = vmatprep.subr.bf16.mxu0 0
        %1700 = vmatpush1.bf16.msra.mxu0 %v1682
        %1701 = vmatprep.subr.bf16.mxu0 0
        %1702 = vmatpush1.bf16.msra.mxu0 0
        %1703 = vmatprep.subr.bf16.mxu0 0
        %1704 = vmatpush1.bf16.msra.mxu0 0
        %1705 = vmatprep.subr.bf16.mxu0 0
        %1706 = vmatpush1.bf16.msra.mxu0 0
        %1707 = vmatprep.subr.bf16.mxu0 0
        %1708 = vmatpush1.bf16.msra.mxu0 0
        %1709 = vmatprep.subr.bf16.mxu0 0
        %1710 = vmatpush1.bf16.msra.mxu0 0
        %1711 = vmatprep.subr.bf16.mxu0 0
        %1712 = vmatpush1.bf16.msra.mxu0 0
        %1713 = vmatprep.subr.bf16.mxu0 0
        %1714 = vmatpush1.bf16.msra.mxu0 0
        %1715 = vmatprep.subr.bf16.mxu0 0
        %1716 = vmatpush1.bf16.msra.mxu0 0
        %1717 = vmatprep.subr.bf16.mxu0 0
        %1718 = vmatpush1.bf16.msra.mxu0 0
        %1719 = vmatprep.subr.bf16.mxu0 0
        %1720 = vmatpush1.bf16.msra.mxu0 0
        %1721 = vmatprep.subr.bf16.mxu0 0
        %1722 = vmatpush1.bf16.msra.mxu0 0
        %1723 = vmatprep.subr.bf16.mxu0 0
        %1724 = vmatpush1.bf16.msra.mxu0 0
        %1725 = vmatprep.subr.bf16.mxu0 0
        %1726 = vmatpush1.bf16.msra.mxu0 0
        %1727 = vmatprep.subr.bf16.mxu0 0
        %1728 = vmatpush1.bf16.msra.mxu0 0
        %1729 = vmatprep.mubr.bf16.mxu0 0
        %1730 = vmatmul.mubr.bf16.gmra.mrb[0].mxu0 %v1686
        %v1731 = vpop.f32.mrb[0].mxu0
        %v1732 = vadd.f32 %v1643, %v1731
        %v1733 = vpop.f32.mrb[0].mxu0
        %v1734 = vpop.f32.mrb[0].mxu0
        %v1735 = vadd.f32 %v1646, %v1734
        %v1736 = vpop.f32.mrb[0].mxu0
        %1737 = vmatprep.mubr.bf16.mxu0 0
        %1738 = vmatmul.mubr.bf16.gmra.mrb[0].mxu0 %v1689
        %v1739 = vpop.f32.mrb[0].mxu0
        %v1740 = vadd.f32 %v1651, %v1739
        %v1741 = vpop.f32.mrb[0].mxu0
        %v1742 = vpop.f32.mrb[0].mxu0
        %v1743 = vadd.f32 %v1654, %v1742
        %v1744 = vpop.f32.mrb[0].mxu0
        %1745 = vmatprep.mubr.bf16.mxu0 0
        %1746 = vmatmul.mubr.bf16.gmra.mrb[0].mxu0 %v1692
        %v1747 = vpop.f32.mrb[0].mxu0
        %v1748 = vadd.f32 %v1659, %v1747
        %v1749 = vpop.f32.mrb[0].mxu0
        %v1750 = vpop.f32.mrb[0].mxu0
        %v1751 = vadd.f32 %v1662, %v1750
        %v1752 = vpop.f32.mrb[0].mxu0
        %1753 = vmatprep.mubr.bf16.mxu0 0
        %1754 = vmatmul.mubr.bf16.gmra.mrb[0].mxu0 %v1695
        %v1755 = vpop.f32.mrb[0].mxu0
        %v1756 = vadd.f32 %v1667, %v1755
        %v1757 = vpop.f32.mrb[0].mxu0
        %v1758 = vpop.f32.mrb[0].mxu0
        %v1759 = vadd.f32 %v1670, %v1758
        %v1760 = vpop.f32.mrb[0].mxu0
        %1761 = vdwg.mxu0
        %1762 = vrot.lane.b32.xlu0 %v959, 96
        %v1763 = vpop.permute.xlu0 %1762
        %1764 = vrot.lane.b32.xlu0 %v960, 96
        %v1765 = vpop.permute.xlu0 %1764
        %1766 = vrot.lane.b32.xlu0 %v961, 96
        %v1767 = vpop.permute.xlu0 %1766
        %1768 = vrot.lane.b32.xlu0 %v962, 96
        %v1769 = vpop.permute.xlu0 %1768
        %1770 = vrot.lane.b32.xlu0 %v963, 96
        %v1771 = vpop.permute.xlu0 %1770
        %1772 = vrot.lane.b32.xlu0 %v964, 96
        %v1773 = vpop.permute.xlu0 %1772
        %1774 = vrot.lane.b32.xlu0 %v965, 96
        %v1775 = vpop.permute.xlu0 %1774
        %1776 = vrot.lane.b32.xlu0 %v966, 96
        %v1777 = vpop.permute.xlu0 %1776
        %v1779 = vsel %vm976, %v1763, 0
        %v1782 = vsel %vm976, %v1765, 0
        %v1785 = vsel %vm976, %v1767, 0
        %v1788 = vsel %vm976, %v1769, 0
        %v1791 = vsel %vm976, %v1771, 0
        %v1794 = vsel %vm976, %v1773, 0
        %v1797 = vsel %vm976, %v1775, 0
        %v1800 = vsel %vm976, %v1777, 0
        %1802 = vmatprep.subr.bf16.mxu0 0
        %1803 = vmatpush1.bf16.xpose.msra.mxu0 %v1791
        %1804 = vmatprep.subr.bf16.mxu0 0
        %1805 = vmatpush1.bf16.xpose.msra.mxu0 %v1794
        %1806 = vmatprep.subr.bf16.mxu0 0
        %1807 = vmatpush1.bf16.xpose.msra.mxu0 %v1797
        %1808 = vmatprep.subr.bf16.mxu0 0
        %1809 = vmatpush1.bf16.xpose.msra.mxu0 %v1800
        %1810 = vmatprep.subr.bf16.mxu0 0
        %1811 = vmatpush1.bf16.xpose.msra.mxu0 0
        %1812 = vmatprep.subr.bf16.mxu0 0
        %1813 = vmatpush1.bf16.xpose.msra.mxu0 0
        %1814 = vmatprep.subr.bf16.mxu0 0
        %1815 = vmatpush1.bf16.xpose.msra.mxu0 0
        %1816 = vmatprep.subr.bf16.mxu0 0
        %1817 = vmatpush1.bf16.xpose.msra.mxu0 0
        %1818 = vmatprep.subr.bf16.mxu0 0
        %1819 = vmatpush1.bf16.xpose.msra.mxu0 0
        %1820 = vmatprep.subr.bf16.mxu0 0
        %1821 = vmatpush1.bf16.xpose.msra.mxu0 0
        %1822 = vmatprep.subr.bf16.mxu0 0
        %1823 = vmatpush1.bf16.xpose.msra.mxu0 0
        %1824 = vmatprep.subr.bf16.mxu0 0
        %1825 = vmatpush1.bf16.xpose.msra.mxu0 0
        %1826 = vmatprep.subr.bf16.mxu0 0
        %1827 = vmatpush1.bf16.xpose.msra.mxu0 0
        %1828 = vmatprep.subr.bf16.mxu0 0
        %1829 = vmatpush1.bf16.xpose.msra.mxu0 0
        %1830 = vmatprep.subr.bf16.mxu0 0
        %1831 = vmatpush1.bf16.xpose.msra.mxu0 0
        %1832 = vmatprep.subr.bf16.mxu0 0
        %1833 = vmatpush1.bf16.xpose.msra.mxu0 0
        %1834 = vmatprep.mubr.bf16.mxu0 0
        %1835 = vmatmul.mubr.bf16.gmra.mrb[0].mxu0 %v1779
        %v1836 = vpop.f32.mrb[0].mxu0
        %v1837 = vadd.f32 0.0, %v1836
        %v1838 = vpop.f32.mrb[0].mxu0
        %v1839 = vpop.f32.mrb[0].mxu0
        %v1840 = vadd.f32 0.0, %v1839
        %v1841 = vpop.f32.mrb[0].mxu0
        %1842 = vmatprep.mubr.bf16.mxu0 0
        %1843 = vmatmul.mubr.bf16.gmra.mrb[0].mxu0 %v1782
        %v1844 = vpop.f32.mrb[0].mxu0
        %v1845 = vadd.f32 0.0, %v1844
        %v1846 = vpop.f32.mrb[0].mxu0
        %v1847 = vpop.f32.mrb[0].mxu0
        %v1848 = vadd.f32 0.0, %v1847
        %v1849 = vpop.f32.mrb[0].mxu0
        %1850 = vmatprep.mubr.bf16.mxu0 0
        %1851 = vmatmul.mubr.bf16.gmra.mrb[0].mxu0 %v1785
        %v1852 = vpop.f32.mrb[0].mxu0
        %v1853 = vadd.f32 0.0, %v1852
        %v1854 = vpop.f32.mrb[0].mxu0
        %v1855 = vpop.f32.mrb[0].mxu0
        %v1856 = vadd.f32 0.0, %v1855
        %v1857 = vpop.f32.mrb[0].mxu0
        %1858 = vmatprep.mubr.bf16.mxu0 0
        %1859 = vmatmul.mubr.bf16.gmra.mrb[0].mxu0 %v1788
        %v1860 = vpop.f32.mrb[0].mxu0
        %v1861 = vadd.f32 0.0, %v1860
        %v1862 = vpop.f32.mrb[0].mxu0
        %v1863 = vpop.f32.mrb[0].mxu0
        %v1864 = vadd.f32 0.0, %v1863
        %v1865 = vpop.f32.mrb[0].mxu0
        %1866 = vdwg.mxu0
        %v1867 = vsel %vm1066, %v1837, -inf
        %1868 = vmax.xlane.f32.xlu0 %v1867
        %v1869 = vpop.xlane.xlu0 %1868
        %v1870 = vsel %vm1066, %v1840, -inf
        %1871 = vmax.xlane.f32.xlu0 %v1870
        %v1872 = vpop.xlane.xlu0 %1871
        %v1873 = vsel %vm1066, %v1845, -inf
        %1874 = vmax.xlane.f32.xlu0 %v1873
        %v1875 = vpop.xlane.xlu0 %1874
        %v1876 = vsel %vm1066, %v1848, -inf
        %1877 = vmax.xlane.f32.xlu0 %v1876
        %v1878 = vpop.xlane.xlu0 %1877
        %v1879 = vsel %vm1066, %v1853, -inf
        %1880 = vmax.xlane.f32.xlu0 %v1879
        %v1881 = vpop.xlane.xlu0 %1880
        %v1882 = vsel %vm1066, %v1856, -inf
        %1883 = vmax.xlane.f32.xlu0 %v1882
        %v1884 = vpop.xlane.xlu0 %1883
        %v1885 = vsel %vm1066, %v1861, -inf
        %1886 = vmax.xlane.f32.xlu0 %v1885
        %v1887 = vpop.xlane.xlu0 %1886
        %v1888 = vsel %vm1066, %v1864, -inf
        %1889 = vmax.xlane.f32.xlu0 %v1888
        %v1890 = vpop.xlane.xlu0 %1889
        %v1891 = vsub.f32 %v1837, %v1869
        %v1892 = vsub.f32 %v1840, %v1872
        %v1893 = vsub.f32 %v1845, %v1875
        %v1894 = vsub.f32 %v1848, %v1878
        %v1895 = vsub.f32 %v1853, %v1881
        %v1896 = vsub.f32 %v1856, %v1884
        %v1897 = vsub.f32 %v1861, %v1887
        %v1898 = vsub.f32 %v1864, %v1890
        %v1899 = vmul.f32 %v1891, 1.442695
        %v1900 = vpow.pop %v1899
        %v1901 = vmul.f32 %v1892, 1.442695
        %v1902 = vpow.pop %v1901
        %v1903 = vmul.f32 %v1893, 1.442695
        %v1904 = vpow.pop %v1903
        %v1905 = vmul.f32 %v1894, 1.442695
        %v1906 = vpow.pop %v1905
        %v1907 = vmul.f32 %v1895, 1.442695
        %v1908 = vpow.pop %v1907
        %v1909 = vmul.f32 %v1896, 1.442695
        %v1910 = vpow.pop %v1909
        %v1911 = vmul.f32 %v1897, 1.442695
        %v1912 = vpow.pop %v1911
        %v1913 = vmul.f32 %v1898, 1.442695
        %v1914 = vpow.pop %v1913
        %v1915 = vsel %vm1066, %v1900, 0.0
        %1916 = vadd.xlane.f32.xlu0 %v1915
        %v1917 = vpop.xlane.xlu0 %1916
        %v1918 = vsel %vm1066, %v1902, 0.0
        %1919 = vadd.xlane.f32.xlu0 %v1918
        %v1920 = vpop.xlane.xlu0 %1919
        %v1921 = vsel %vm1066, %v1904, 0.0
        %1922 = vadd.xlane.f32.xlu0 %v1921
        %v1923 = vpop.xlane.xlu0 %1922
        %v1924 = vsel %vm1066, %v1906, 0.0
        %1925 = vadd.xlane.f32.xlu0 %v1924
        %v1926 = vpop.xlane.xlu0 %1925
        %v1927 = vsel %vm1066, %v1908, 0.0
        %1928 = vadd.xlane.f32.xlu0 %v1927
        %v1929 = vpop.xlane.xlu0 %1928
        %v1930 = vsel %vm1066, %v1910, 0.0
        %1931 = vadd.xlane.f32.xlu0 %v1930
        %v1932 = vpop.xlane.xlu0 %1931
        %v1933 = vsel %vm1066, %v1912, 0.0
        %1934 = vadd.xlane.f32.xlu0 %v1933
        %v1935 = vpop.xlane.xlu0 %1934
        %v1936 = vsel %vm1066, %v1914, 0.0
        %1937 = vadd.xlane.f32.xlu0 %v1936
        %v1938 = vpop.xlane.xlu0 %1937
        %v1939 = vrcp.pop %v1917
        %v1940 = vrcp.pop %v1920
        %v1941 = vrcp.pop %v1923
        %v1942 = vrcp.pop %v1926
        %v1943 = vrcp.pop %v1929
        %v1944 = vrcp.pop %v1932
        %v1945 = vrcp.pop %v1935
        %v1946 = vrcp.pop %v1938
        %v1947 = vmul.f32 %v1900, %v1939
        %v1948 = vmul.f32 %v1902, %v1940
        %v1949 = vmul.f32 %v1904, %v1941
        %v1950 = vmul.f32 %v1906, %v1942
        %v1951 = vmul.f32 %v1908, %v1943
        %v1952 = vmul.f32 %v1910, %v1944
        %v1953 = vmul.f32 %v1912, %v1945
        %v1954 = vmul.f32 %v1914, %v1946
        %v1955 = vpack.c.bf16 %v1948, %v1947
        %v1956 = vpack.c.bf16 %v1950, %v1949
        %v1957 = vpack.c.bf16 %v1952, %v1951
        %v1958 = vpack.c.bf16 %v1954, %v1953
        %1959 = vrot.lane.b32.xlu0 %v967, 64
        %v1960 = vpop.permute.xlu0 %1959
        %1961 = vrot.lane.b32.xlu0 %v969, 64
        %v1962 = vpop.permute.xlu0 %1961
        %1963 = vrot.lane.b32.xlu0 %v971, 64
        %v1964 = vpop.permute.xlu0 %1963
        %1965 = vrot.lane.b32.xlu0 %v973, 64
        %v1966 = vpop.permute.xlu0 %1965
        %v1972 = vsel %vm1066, %v1955, 0
        %v1975 = vsel %vm1066, %v1956, 0
        %v1978 = vsel %vm1066, %v1957, 0
        %v1981 = vsel %vm1066, %v1958, 0
        %1983 = vmatprep.subr.bf16.mxu0 0
        %1984 = vmatpush1.bf16.msra.mxu0 %v1960
        %1985 = vmatprep.subr.bf16.mxu0 0
        %1986 = vmatpush1.bf16.msra.mxu0 %v1962
        %1987 = vmatprep.subr.bf16.mxu0 0
        %1988 = vmatpush1.bf16.msra.mxu0 %v1964
        %1989 = vmatprep.subr.bf16.mxu0 0
        %1990 = vmatpush1.bf16.msra.mxu0 %v1966
        %1991 = vmatprep.subr.bf16.mxu0 0
        %1992 = vmatpush1.bf16.msra.mxu0 0
        %1993 = vmatprep.subr.bf16.mxu0 0
        %1994 = vmatpush1.bf16.msra.mxu0 0
        %1995 = vmatprep.subr.bf16.mxu0 0
        %1996 = vmatpush1.bf16.msra.mxu0 0
        %1997 = vmatprep.subr.bf16.mxu0 0
        %1998 = vmatpush1.bf16.msra.mxu0 0
        %1999 = vmatprep.subr.bf16.mxu0 0
        %2000 = vmatpush1.bf16.msra.mxu0 0
        %2001 = vmatprep.subr.bf16.mxu0 0
        %2002 = vmatpush1.bf16.msra.mxu0 0
        %2003 = vmatprep.subr.bf16.mxu0 0
        %2004 = vmatpush1.bf16.msra.mxu0 0
        %2005 = vmatprep.subr.bf16.mxu0 0
        %2006 = vmatpush1.bf16.msra.mxu0 0
        %2007 = vmatprep.subr.bf16.mxu0 0
        %2008 = vmatpush1.bf16.msra.mxu0 0
        %2009 = vmatprep.subr.bf16.mxu0 0
        %2010 = vmatpush1.bf16.msra.mxu0 0
        %2011 = vmatprep.subr.bf16.mxu0 0
        %2012 = vmatpush1.bf16.msra.mxu0 0
        %2013 = vmatprep.subr.bf16.mxu0 0
        %2014 = vmatpush1.bf16.msra.mxu0 0
        %2015 = vmatprep.mubr.bf16.mxu0 0
        %2016 = vmatmul.mubr.bf16.gmra.mrb[0].mxu0 %v1972
        %v2017 = vpop.f32.mrb[0].mxu0
        %v2018 = vadd.f32 0.0, %v2017
        %v2019 = vpop.f32.mrb[0].mxu0
        %v2020 = vpop.f32.mrb[0].mxu0
        %v2021 = vadd.f32 0.0, %v2020
        %v2022 = vpop.f32.mrb[0].mxu0
        %2023 = vmatprep.mubr.bf16.mxu0 0
        %2024 = vmatmul.mubr.bf16.gmra.mrb[0].mxu0 %v1975
        %v2025 = vpop.f32.mrb[0].mxu0
        %v2026 = vadd.f32 0.0, %v2025
        %v2027 = vpop.f32.mrb[0].mxu0
        %v2028 = vpop.f32.mrb[0].mxu0
        %v2029 = vadd.f32 0.0, %v2028
        %v2030 = vpop.f32.mrb[0].mxu0
        %2031 = vmatprep.mubr.bf16.mxu0 0
        %2032 = vmatmul.mubr.bf16.gmra.mrb[0].mxu0 %v1978
        %v2033 = vpop.f32.mrb[0].mxu0
        %v2034 = vadd.f32 0.0, %v2033
        %v2035 = vpop.f32.mrb[0].mxu0
        %v2036 = vpop.f32.mrb[0].mxu0
        %v2037 = vadd.f32 0.0, %v2036
        %v2038 = vpop.f32.mrb[0].mxu0
        %2039 = vmatprep.mubr.bf16.mxu0 0
        %2040 = vmatmul.mubr.bf16.gmra.mrb[0].mxu0 %v1981
        %v2041 = vpop.f32.mrb[0].mxu0
        %v2042 = vadd.f32 0.0, %v2041
        %v2043 = vpop.f32.mrb[0].mxu0
        %v2044 = vpop.f32.mrb[0].mxu0
        %v2045 = vadd.f32 0.0, %v2044
        %v2046 = vpop.f32.mrb[0].mxu0
        %2047 = vdwg.mxu0
        %v2048 = vmax.f32 %v2018, 0.0
        %v2049 = vmax.f32 %v2021, 0.0
        %v2050 = vmax.f32 %v2026, 0.0
        %v2051 = vmax.f32 %v2029, 0.0
        %v2052 = vmax.f32 %v2034, 0.0
        %v2053 = vmax.f32 %v2037, 0.0
        %v2054 = vmax.f32 %v2042, 0.0
        %v2055 = vmax.f32 %v2045, 0.0
        %v2056 = vmin.f32 %v2048, 6.0
        %v2057 = vmin.f32 %v2049, 6.0
        %v2058 = vmin.f32 %v2050, 6.0
        %v2059 = vmin.f32 %v2051, 6.0
        %v2060 = vmin.f32 %v2052, 6.0
        %v2061 = vmin.f32 %v2053, 6.0
        %v2062 = vmin.f32 %v2054, 6.0
        %v2063 = vmin.f32 %v2055, 6.0
        %v2064 = vpack.c.bf16 %v2057, %v2056
        %v2065 = vpack.c.bf16 %v2059, %v2058
        %v2066 = vpack.c.bf16 %v2061, %v2060
        %v2067 = vpack.c.bf16 %v2063, %v2062
        %s2068 = scalar_lea.vmem %s7, 32
        %v2069 = vld [vmem:[%s2068] sm:$0xf]
        %v2070 = vld [vmem:[%s2068 + $0x4] sm:$0xf]
        %v2071 = vld [vmem:[%s2068 + $0x8] sm:$0xf]
        %v2072 = vld [vmem:[%s2068 + $0xc] sm:$0xf]
        %v2077 = vunpack.c.l.b16 %v2069
        %v2078 = vunpack.c.l.b16 %v2070
        %v2079 = vunpack.c.l.b16 %v2071
        %v2080 = vunpack.c.l.b16 %v2072
        %v2081 = vpack.c.b16 %v2078, %v2077
        %v2082 = vpack.c.b16 %v2080, %v2079
        %v2086 = vsel %vm1595, %v2064, 0
        %v2089 = vsel %vm1595, %v2065, 0
        %v2092 = vsel %vm1595, %v2066, 0
        %v2095 = vsel %vm1595, %v2067, 0
        %2097 = vmatprep.subr.bf16.mxu0 0
        %2098 = vmatpush1.bf16.msra.mxu0 %v2081
        %2099 = vmatprep.subr.bf16.mxu0 0
        %2100 = vmatpush1.bf16.msra.mxu0 %v2082
        %2101 = vmatprep.subr.bf16.mxu0 0
        %2102 = vmatpush1.bf16.msra.mxu0 0
        %2103 = vmatprep.subr.bf16.mxu0 0
        %2104 = vmatpush1.bf16.msra.mxu0 0
        %2105 = vmatprep.subr.bf16.mxu0 0
        %2106 = vmatpush1.bf16.msra.mxu0 0
        %2107 = vmatprep.subr.bf16.mxu0 0
        %2108 = vmatpush1.bf16.msra.mxu0 0
        %2109 = vmatprep.subr.bf16.mxu0 0
        %2110 = vmatpush1.bf16.msra.mxu0 0
        %2111 = vmatprep.subr.bf16.mxu0 0
        %2112 = vmatpush1.bf16.msra.mxu0 0
        %2113 = vmatprep.subr.bf16.mxu0 0
        %2114 = vmatpush1.bf16.msra.mxu0 0
        %2115 = vmatprep.subr.bf16.mxu0 0
        %2116 = vmatpush1.bf16.msra.mxu0 0
        %2117 = vmatprep.subr.bf16.mxu0 0
        %2118 = vmatpush1.bf16.msra.mxu0 0
        %2119 = vmatprep.subr.bf16.mxu0 0
        %2120 = vmatpush1.bf16.msra.mxu0 0
        %2121 = vmatprep.subr.bf16.mxu0 0
        %2122 = vmatpush1.bf16.msra.mxu0 0
        %2123 = vmatprep.subr.bf16.mxu0 0
        %2124 = vmatpush1.bf16.msra.mxu0 0
        %2125 = vmatprep.subr.bf16.mxu0 0
        %2126 = vmatpush1.bf16.msra.mxu0 0
        %2127 = vmatprep.subr.bf16.mxu0 0
        %2128 = vmatpush1.bf16.msra.mxu0 0
        %2129 = vmatprep.mubr.bf16.mxu0 0
        %2130 = vmatmul.mubr.bf16.gmra.mrb[0].mxu0 %v2086
        %v2131 = vpop.f32.mrb[0].mxu0
        %v2132 = vadd.f32 0.0, %v2131
        %v2133 = vpop.f32.mrb[0].mxu0
        %v2134 = vpop.f32.mrb[0].mxu0
        %v2135 = vadd.f32 0.0, %v2134
        %v2136 = vpop.f32.mrb[0].mxu0
        %2137 = vmatprep.mubr.bf16.mxu0 0
        %2138 = vmatmul.mubr.bf16.gmra.mrb[0].mxu0 %v2089
        %v2139 = vpop.f32.mrb[0].mxu0
        %v2140 = vadd.f32 0.0, %v2139
        %v2141 = vpop.f32.mrb[0].mxu0
        %v2142 = vpop.f32.mrb[0].mxu0
        %v2143 = vadd.f32 0.0, %v2142
        %v2144 = vpop.f32.mrb[0].mxu0
        %2145 = vmatprep.mubr.bf16.mxu0 0
        %2146 = vmatmul.mubr.bf16.gmra.mrb[0].mxu0 %v2092
        %v2147 = vpop.f32.mrb[0].mxu0
        %v2148 = vadd.f32 0.0, %v2147
        %v2149 = vpop.f32.mrb[0].mxu0
        %v2150 = vpop.f32.mrb[0].mxu0
        %v2151 = vadd.f32 0.0, %v2150
        %v2152 = vpop.f32.mrb[0].mxu0
        %2153 = vmatprep.mubr.bf16.mxu0 0
        %2154 = vmatmul.mubr.bf16.gmra.mrb[0].mxu0 %v2095
        %v2155 = vpop.f32.mrb[0].mxu0
        %v2156 = vadd.f32 0.0, %v2155
        %v2157 = vpop.f32.mrb[0].mxu0
        %v2158 = vpop.f32.mrb[0].mxu0
        %v2159 = vadd.f32 0.0, %v2158
        %v2160 = vpop.f32.mrb[0].mxu0
        %2161 = vdwg.mxu0
        %v2162 = vadd.f32 %v1732, %v2132
        %v2163 = vadd.f32 %v1735, %v2135
        %v2164 = vadd.f32 %v1740, %v2140
        %v2165 = vadd.f32 %v1743, %v2143
        %v2166 = vadd.f32 %v1748, %v2148
        %v2167 = vadd.f32 %v1751, %v2151
        %v2168 = vadd.f32 %v1756, %v2156
        %v2169 = vadd.f32 %v1759, %v2159
        %2170 = vrot.lane.b32.xlu0 %v959, 80
        %v2171 = vpop.permute.xlu0 %2170
        %2172 = vrot.lane.b32.xlu0 %v960, 80
        %v2173 = vpop.permute.xlu0 %2172
        %2174 = vrot.lane.b32.xlu0 %v961, 80
        %v2175 = vpop.permute.xlu0 %2174
        %2176 = vrot.lane.b32.xlu0 %v962, 80
        %v2177 = vpop.permute.xlu0 %2176
        %2178 = vrot.lane.b32.xlu0 %v963, 80
        %v2179 = vpop.permute.xlu0 %2178
        %2180 = vrot.lane.b32.xlu0 %v964, 80
        %v2181 = vpop.permute.xlu0 %2180
        %2182 = vrot.lane.b32.xlu0 %v965, 80
        %v2183 = vpop.permute.xlu0 %2182
        %2184 = vrot.lane.b32.xlu0 %v966, 80
        %v2185 = vpop.permute.xlu0 %2184
        %v2187 = vsel %vm976, %v2171, 0
        %v2190 = vsel %vm976, %v2173, 0
        %v2193 = vsel %vm976, %v2175, 0
        %v2196 = vsel %vm976, %v2177, 0
        %v2199 = vsel %vm976, %v2179, 0
        %v2202 = vsel %vm976, %v2181, 0
        %v2205 = vsel %vm976, %v2183, 0
        %v2208 = vsel %vm976, %v2185, 0
        %2210 = vmatprep.subr.bf16.mxu0 0
        %2211 = vmatpush1.bf16.xpose.msra.mxu0 %v2199
        %2212 = vmatprep.subr.bf16.mxu0 0
        %2213 = vmatpush1.bf16.xpose.msra.mxu0 %v2202
        %2214 = vmatprep.subr.bf16.mxu0 0
        %2215 = vmatpush1.bf16.xpose.msra.mxu0 %v2205
        %2216 = vmatprep.subr.bf16.mxu0 0
        %2217 = vmatpush1.bf16.xpose.msra.mxu0 %v2208
        %2218 = vmatprep.subr.bf16.mxu0 0
        %2219 = vmatpush1.bf16.xpose.msra.mxu0 0
        %2220 = vmatprep.subr.bf16.mxu0 0
        %2221 = vmatpush1.bf16.xpose.msra.mxu0 0
        %2222 = vmatprep.subr.bf16.mxu0 0
        %2223 = vmatpush1.bf16.xpose.msra.mxu0 0
        %2224 = vmatprep.subr.bf16.mxu0 0
        %2225 = vmatpush1.bf16.xpose.msra.mxu0 0
        %2226 = vmatprep.subr.bf16.mxu0 0
        %2227 = vmatpush1.bf16.xpose.msra.mxu0 0
        %2228 = vmatprep.subr.bf16.mxu0 0
        %2229 = vmatpush1.bf16.xpose.msra.mxu0 0
        %2230 = vmatprep.subr.bf16.mxu0 0
        %2231 = vmatpush1.bf16.xpose.msra.mxu0 0
        %2232 = vmatprep.subr.bf16.mxu0 0
        %2233 = vmatpush1.bf16.xpose.msra.mxu0 0
        %2234 = vmatprep.subr.bf16.mxu0 0
        %2235 = vmatpush1.bf16.xpose.msra.mxu0 0
        %2236 = vmatprep.subr.bf16.mxu0 0
        %2237 = vmatpush1.bf16.xpose.msra.mxu0 0
        %2238 = vmatprep.subr.bf16.mxu0 0
        %2239 = vmatpush1.bf16.xpose.msra.mxu0 0
        %2240 = vmatprep.subr.bf16.mxu0 0
        %2241 = vmatpush1.bf16.xpose.msra.mxu0 0
        %2242 = vmatprep.mubr.bf16.mxu0 0
        %2243 = vmatmul.mubr.bf16.gmra.mrb[0].mxu0 %v2187
        %v2244 = vpop.f32.mrb[0].mxu0
        %v2245 = vadd.f32 0.0, %v2244
        %v2246 = vpop.f32.mrb[0].mxu0
        %v2247 = vpop.f32.mrb[0].mxu0
        %v2248 = vadd.f32 0.0, %v2247
        %v2249 = vpop.f32.mrb[0].mxu0
        %2250 = vmatprep.mubr.bf16.mxu0 0
        %2251 = vmatmul.mubr.bf16.gmra.mrb[0].mxu0 %v2190
        %v2252 = vpop.f32.mrb[0].mxu0
        %v2253 = vadd.f32 0.0, %v2252
        %v2254 = vpop.f32.mrb[0].mxu0
        %v2255 = vpop.f32.mrb[0].mxu0
        %v2256 = vadd.f32 0.0, %v2255
        %v2257 = vpop.f32.mrb[0].mxu0
        %2258 = vmatprep.mubr.bf16.mxu0 0
        %2259 = vmatmul.mubr.bf16.gmra.mrb[0].mxu0 %v2193
        %v2260 = vpop.f32.mrb[0].mxu0
        %v2261 = vadd.f32 0.0, %v2260
        %v2262 = vpop.f32.mrb[0].mxu0
        %v2263 = vpop.f32.mrb[0].mxu0
        %v2264 = vadd.f32 0.0, %v2263
        %v2265 = vpop.f32.mrb[0].mxu0
        %2266 = vmatprep.mubr.bf16.mxu0 0
        %2267 = vmatmul.mubr.bf16.gmra.mrb[0].mxu0 %v2196
        %v2268 = vpop.f32.mrb[0].mxu0
        %v2269 = vadd.f32 0.0, %v2268
        %v2270 = vpop.f32.mrb[0].mxu0
        %v2271 = vpop.f32.mrb[0].mxu0
        %v2272 = vadd.f32 0.0, %v2271
        %v2273 = vpop.f32.mrb[0].mxu0
        %2274 = vdwg.mxu0
        %v2275 = vsel %vm1066, %v2245, -inf
        %2276 = vmax.xlane.f32.xlu0 %v2275
        %v2277 = vpop.xlane.xlu0 %2276
        %v2278 = vsel %vm1066, %v2248, -inf
        %2279 = vmax.xlane.f32.xlu0 %v2278
        %v2280 = vpop.xlane.xlu0 %2279
        %v2281 = vsel %vm1066, %v2253, -inf
        %2282 = vmax.xlane.f32.xlu0 %v2281
        %v2283 = vpop.xlane.xlu0 %2282
        %v2284 = vsel %vm1066, %v2256, -inf
        %2285 = vmax.xlane.f32.xlu0 %v2284
        %v2286 = vpop.xlane.xlu0 %2285
        %v2287 = vsel %vm1066, %v2261, -inf
        %2288 = vmax.xlane.f32.xlu0 %v2287
        %v2289 = vpop.xlane.xlu0 %2288
        %v2290 = vsel %vm1066, %v2264, -inf
        %2291 = vmax.xlane.f32.xlu0 %v2290
        %v2292 = vpop.xlane.xlu0 %2291
        %v2293 = vsel %vm1066, %v2269, -inf
        %2294 = vmax.xlane.f32.xlu0 %v2293
        %v2295 = vpop.xlane.xlu0 %2294
        %v2296 = vsel %vm1066, %v2272, -inf
        %2297 = vmax.xlane.f32.xlu0 %v2296
        %v2298 = vpop.xlane.xlu0 %2297
        %v2299 = vsub.f32 %v2245, %v2277
        %v2300 = vsub.f32 %v2248, %v2280
        %v2301 = vsub.f32 %v2253, %v2283
        %v2302 = vsub.f32 %v2256, %v2286
        %v2303 = vsub.f32 %v2261, %v2289
        %v2304 = vsub.f32 %v2264, %v2292
        %v2305 = vsub.f32 %v2269, %v2295
        %v2306 = vsub.f32 %v2272, %v2298
        %v2307 = vmul.f32 %v2299, 1.442695
        %v2308 = vpow.pop %v2307
        %v2309 = vmul.f32 %v2300, 1.442695
        %v2310 = vpow.pop %v2309
        %v2311 = vmul.f32 %v2301, 1.442695
        %v2312 = vpow.pop %v2311
        %v2313 = vmul.f32 %v2302, 1.442695
        %v2314 = vpow.pop %v2313
        %v2315 = vmul.f32 %v2303, 1.442695
        %v2316 = vpow.pop %v2315
        %v2317 = vmul.f32 %v2304, 1.442695
        %v2318 = vpow.pop %v2317
        %v2319 = vmul.f32 %v2305, 1.442695
        %v2320 = vpow.pop %v2319
        %v2321 = vmul.f32 %v2306, 1.442695
        %v2322 = vpow.pop %v2321
        %v2323 = vsel %vm1066, %v2308, 0.0
        %2324 = vadd.xlane.f32.xlu0 %v2323
        %v2325 = vpop.xlane.xlu0 %2324
        %v2326 = vsel %vm1066, %v2310, 0.0
        %2327 = vadd.xlane.f32.xlu0 %v2326
        %v2328 = vpop.xlane.xlu0 %2327
        %v2329 = vsel %vm1066, %v2312, 0.0
        %2330 = vadd.xlane.f32.xlu0 %v2329
        %v2331 = vpop.xlane.xlu0 %2330
        %v2332 = vsel %vm1066, %v2314, 0.0
        %2333 = vadd.xlane.f32.xlu0 %v2332
        %v2334 = vpop.xlane.xlu0 %2333
        %v2335 = vsel %vm1066, %v2316, 0.0
        %2336 = vadd.xlane.f32.xlu0 %v2335
        %v2337 = vpop.xlane.xlu0 %2336
        %v2338 = vsel %vm1066, %v2318, 0.0
        %2339 = vadd.xlane.f32.xlu0 %v2338
        %v2340 = vpop.xlane.xlu0 %2339
        %v2341 = vsel %vm1066, %v2320, 0.0
        %2342 = vadd.xlane.f32.xlu0 %v2341
        %v2343 = vpop.xlane.xlu0 %2342
        %v2344 = vsel %vm1066, %v2322, 0.0
        %2345 = vadd.xlane.f32.xlu0 %v2344
        %v2346 = vpop.xlane.xlu0 %2345
        %v2347 = vrcp.pop %v2325
        %v2348 = vrcp.pop %v2328
        %v2349 = vrcp.pop %v2331
        %v2350 = vrcp.pop %v2334
        %v2351 = vrcp.pop %v2337
        %v2352 = vrcp.pop %v2340
        %v2353 = vrcp.pop %v2343
        %v2354 = vrcp.pop %v2346
        %v2355 = vmul.f32 %v2308, %v2347
        %v2356 = vmul.f32 %v2310, %v2348
        %v2357 = vmul.f32 %v2312, %v2349
        %v2358 = vmul.f32 %v2314, %v2350
        %v2359 = vmul.f32 %v2316, %v2351
        %v2360 = vmul.f32 %v2318, %v2352
        %v2361 = vmul.f32 %v2320, %v2353
        %v2362 = vmul.f32 %v2322, %v2354
        %v2363 = vpack.c.bf16 %v2356, %v2355
        %v2364 = vpack.c.bf16 %v2358, %v2357
        %v2365 = vpack.c.bf16 %v2360, %v2359
        %v2366 = vpack.c.bf16 %v2362, %v2361
        %2367 = vrot.lane.b32.xlu0 %v967, 32
        %v2368 = vpop.permute.xlu0 %2367
        %2369 = vrot.lane.b32.xlu0 %v969, 32
        %v2370 = vpop.permute.xlu0 %2369
        %2371 = vrot.lane.b32.xlu0 %v971, 32
        %v2372 = vpop.permute.xlu0 %2371
        %2373 = vrot.lane.b32.xlu0 %v973, 32
        %v2374 = vpop.permute.xlu0 %2373
        %v2380 = vsel %vm1066, %v2363, 0
        %v2383 = vsel %vm1066, %v2364, 0
        %v2386 = vsel %vm1066, %v2365, 0
        %v2389 = vsel %vm1066, %v2366, 0
        %2391 = vmatprep.subr.bf16.mxu0 0
        %2392 = vmatpush1.bf16.msra.mxu0 %v2368
        %2393 = vmatprep.subr.bf16.mxu0 0
        %2394 = vmatpush1.bf16.msra.mxu0 %v2370
        %2395 = vmatprep.subr.bf16.mxu0 0
        %2396 = vmatpush1.bf16.msra.mxu0 %v2372
        %2397 = vmatprep.subr.bf16.mxu0 0
        %2398 = vmatpush1.bf16.msra.mxu0 %v2374
        %2399 = vmatprep.subr.bf16.mxu0 0
        %2400 = vmatpush1.bf16.msra.mxu0 0
        %2401 = vmatprep.subr.bf16.mxu0 0
        %2402 = vmatpush1.bf16.msra.mxu0 0
        %2403 = vmatprep.subr.bf16.mxu0 0
        %2404 = vmatpush1.bf16.msra.mxu0 0
        %2405 = vmatprep.subr.bf16.mxu0 0
        %2406 = vmatpush1.bf16.msra.mxu0 0
        %2407 = vmatprep.subr.bf16.mxu0 0
        %2408 = vmatpush1.bf16.msra.mxu0 0
        %2409 = vmatprep.subr.bf16.mxu0 0
        %2410 = vmatpush1.bf16.msra.mxu0 0
        %2411 = vmatprep.subr.bf16.mxu0 0
        %2412 = vmatpush1.bf16.msra.mxu0 0
        %2413 = vmatprep.subr.bf16.mxu0 0
        %2414 = vmatpush1.bf16.msra.mxu0 0
        %2415 = vmatprep.subr.bf16.mxu0 0
        %2416 = vmatpush1.bf16.msra.mxu0 0
        %2417 = vmatprep.subr.bf16.mxu0 0
        %2418 = vmatpush1.bf16.msra.mxu0 0
        %2419 = vmatprep.subr.bf16.mxu0 0
        %2420 = vmatpush1.bf16.msra.mxu0 0
        %2421 = vmatprep.subr.bf16.mxu0 0
        %2422 = vmatpush1.bf16.msra.mxu0 0
        %2423 = vmatprep.mubr.bf16.mxu0 0
        %2424 = vmatmul.mubr.bf16.gmra.mrb[0].mxu0 %v2380
        %v2425 = vpop.f32.mrb[0].mxu0
        %v2426 = vadd.f32 0.0, %v2425
        %v2427 = vpop.f32.mrb[0].mxu0
        %v2428 = vpop.f32.mrb[0].mxu0
        %v2429 = vadd.f32 0.0, %v2428
        %v2430 = vpop.f32.mrb[0].mxu0
        %2431 = vmatprep.mubr.bf16.mxu0 0
        %2432 = vmatmul.mubr.bf16.gmra.mrb[0].mxu0 %v2383
        %v2433 = vpop.f32.mrb[0].mxu0
        %v2434 = vadd.f32 0.0, %v2433
        %v2435 = vpop.f32.mrb[0].mxu0
        %v2436 = vpop.f32.mrb[0].mxu0
        %v2437 = vadd.f32 0.0, %v2436
        %v2438 = vpop.f32.mrb[0].mxu0
        %2439 = vmatprep.mubr.bf16.mxu0 0
        %2440 = vmatmul.mubr.bf16.gmra.mrb[0].mxu0 %v2386
        %v2441 = vpop.f32.mrb[0].mxu0
        %v2442 = vadd.f32 0.0, %v2441
        %v2443 = vpop.f32.mrb[0].mxu0
        %v2444 = vpop.f32.mrb[0].mxu0
        %v2445 = vadd.f32 0.0, %v2444
        %v2446 = vpop.f32.mrb[0].mxu0
        %2447 = vmatprep.mubr.bf16.mxu0 0
        %2448 = vmatmul.mubr.bf16.gmra.mrb[0].mxu0 %v2389
        %v2449 = vpop.f32.mrb[0].mxu0
        %v2450 = vadd.f32 0.0, %v2449
        %v2451 = vpop.f32.mrb[0].mxu0
        %v2452 = vpop.f32.mrb[0].mxu0
        %v2453 = vadd.f32 0.0, %v2452
        %v2454 = vpop.f32.mrb[0].mxu0
        %2455 = vdwg.mxu0
        %v2456 = vmax.f32 %v2426, 0.0
        %v2457 = vmax.f32 %v2429, 0.0
        %v2458 = vmax.f32 %v2434, 0.0
        %v2459 = vmax.f32 %v2437, 0.0
        %v2460 = vmax.f32 %v2442, 0.0
        %v2461 = vmax.f32 %v2445, 0.0
        %v2462 = vmax.f32 %v2450, 0.0
        %v2463 = vmax.f32 %v2453, 0.0
        %v2464 = vmin.f32 %v2456, 6.0
        %v2465 = vmin.f32 %v2457, 6.0
        %v2466 = vmin.f32 %v2458, 6.0
        %v2467 = vmin.f32 %v2459, 6.0
        %v2468 = vmin.f32 %v2460, 6.0
        %v2469 = vmin.f32 %v2461, 6.0
        %v2470 = vmin.f32 %v2462, 6.0
        %v2471 = vmin.f32 %v2463, 6.0
        %v2472 = vpack.c.bf16 %v2465, %v2464
        %v2473 = vpack.c.bf16 %v2467, %v2466
        %v2474 = vpack.c.bf16 %v2469, %v2468
        %v2475 = vpack.c.bf16 %v2471, %v2470
        %s2476 = scalar_lea.vmem %s7, 48
        %v2477 = vld [vmem:[%s2476] sm:$0xf]
        %v2478 = vld [vmem:[%s2476 + $0x4] sm:$0xf]
        %v2479 = vld [vmem:[%s2476 + $0x8] sm:$0xf]
        %v2480 = vld [vmem:[%s2476 + $0xc] sm:$0xf]
        %v2485 = vunpack.c.l.b16 %v2477
        %v2486 = vunpack.c.l.b16 %v2478
        %v2487 = vunpack.c.l.b16 %v2479
        %v2488 = vunpack.c.l.b16 %v2480
        %v2489 = vpack.c.b16 %v2486, %v2485
        %v2490 = vpack.c.b16 %v2488, %v2487
        %v2494 = vsel %vm1595, %v2472, 0
        %v2497 = vsel %vm1595, %v2473, 0
        %v2500 = vsel %vm1595, %v2474, 0
        %v2503 = vsel %vm1595, %v2475, 0
        %2505 = vmatprep.subr.bf16.mxu0 0
        %2506 = vmatpush1.bf16.msra.mxu0 %v2489
        %2507 = vmatprep.subr.bf16.mxu0 0
        %2508 = vmatpush1.bf16.msra.mxu0 %v2490
        %2509 = vmatprep.subr.bf16.mxu0 0
        %2510 = vmatpush1.bf16.msra.mxu0 0
        %2511 = vmatprep.subr.bf16.mxu0 0
        %2512 = vmatpush1.bf16.msra.mxu0 0
        %2513 = vmatprep.subr.bf16.mxu0 0
        %2514 = vmatpush1.bf16.msra.mxu0 0
        %2515 = vmatprep.subr.bf16.mxu0 0
        %2516 = vmatpush1.bf16.msra.mxu0 0
        %2517 = vmatprep.subr.bf16.mxu0 0
        %2518 = vmatpush1.bf16.msra.mxu0 0
        %2519 = vmatprep.subr.bf16.mxu0 0
        %2520 = vmatpush1.bf16.msra.mxu0 0
        %2521 = vmatprep.subr.bf16.mxu0 0
        %2522 = vmatpush1.bf16.msra.mxu0 0
        %2523 = vmatprep.subr.bf16.mxu0 0
        %2524 = vmatpush1.bf16.msra.mxu0 0
        %2525 = vmatprep.subr.bf16.mxu0 0
        %2526 = vmatpush1.bf16.msra.mxu0 0
        %2527 = vmatprep.subr.bf16.mxu0 0
        %2528 = vmatpush1.bf16.msra.mxu0 0
        %2529 = vmatprep.subr.bf16.mxu0 0
        %2530 = vmatpush1.bf16.msra.mxu0 0
        %2531 = vmatprep.subr.bf16.mxu0 0
        %2532 = vmatpush1.bf16.msra.mxu0 0
        %2533 = vmatprep.subr.bf16.mxu0 0
        %2534 = vmatpush1.bf16.msra.mxu0 0
        %2535 = vmatprep.subr.bf16.mxu0 0
        %2536 = vmatpush1.bf16.msra.mxu0 0
        %2537 = vmatprep.mubr.bf16.mxu0 0
        %2538 = vmatmul.mubr.bf16.gmra.mrb[0].mxu0 %v2494
        %v2539 = vpop.f32.mrb[0].mxu0
        %v2540 = vadd.f32 0.0, %v2539
        %v2541 = vpop.f32.mrb[0].mxu0
        %v2542 = vpop.f32.mrb[0].mxu0
        %v2543 = vadd.f32 0.0, %v2542
        %v2544 = vpop.f32.mrb[0].mxu0
        %2545 = vmatprep.mubr.bf16.mxu0 0
        %2546 = vmatmul.mubr.bf16.gmra.mrb[0].mxu0 %v2497
        %v2547 = vpop.f32.mrb[0].mxu0
        %v2548 = vadd.f32 0.0, %v2547
        %v2549 = vpop.f32.mrb[0].mxu0
        %v2550 = vpop.f32.mrb[0].mxu0
        %v2551 = vadd.f32 0.0, %v2550
        %v2552 = vpop.f32.mrb[0].mxu0
        %2553 = vmatprep.mubr.bf16.mxu0 0
        %2554 = vmatmul.mubr.bf16.gmra.mrb[0].mxu0 %v2500
        %v2555 = vpop.f32.mrb[0].mxu0
        %v2556 = vadd.f32 0.0, %v2555
        %v2557 = vpop.f32.mrb[0].mxu0
        %v2558 = vpop.f32.mrb[0].mxu0
        %v2559 = vadd.f32 0.0, %v2558
        %v2560 = vpop.f32.mrb[0].mxu0
        %2561 = vmatprep.mubr.bf16.mxu0 0
        %2562 = vmatmul.mubr.bf16.gmra.mrb[0].mxu0 %v2503
        %v2563 = vpop.f32.mrb[0].mxu0
        %v2564 = vadd.f32 0.0, %v2563
        %v2565 = vpop.f32.mrb[0].mxu0
        %v2566 = vpop.f32.mrb[0].mxu0
        %v2567 = vadd.f32 0.0, %v2566
        %v2568 = vpop.f32.mrb[0].mxu0
        %2569 = vdwg.mxu0
        %v2570 = vadd.f32 %v2162, %v2540
        %v2571 = vadd.f32 %v2163, %v2543
        %v2572 = vadd.f32 %v2164, %v2548
        %v2573 = vadd.f32 %v2165, %v2551
        %v2574 = vadd.f32 %v2166, %v2556
        %v2575 = vadd.f32 %v2167, %v2559
        %v2576 = vadd.f32 %v2168, %v2564
        %v2577 = vadd.f32 %v2169, %v2567
        %2578 = vrot.lane.b32.xlu0 %v959, 64
        %v2579 = vpop.permute.xlu0 %2578
        %2580 = vrot.lane.b32.xlu0 %v960, 64
        %v2581 = vpop.permute.xlu0 %2580
        %2582 = vrot.lane.b32.xlu0 %v961, 64
        %v2583 = vpop.permute.xlu0 %2582
        %2584 = vrot.lane.b32.xlu0 %v962, 64
        %v2585 = vpop.permute.xlu0 %2584
        %2586 = vrot.lane.b32.xlu0 %v963, 64
        %v2587 = vpop.permute.xlu0 %2586
        %2588 = vrot.lane.b32.xlu0 %v964, 64
        %v2589 = vpop.permute.xlu0 %2588
        %2590 = vrot.lane.b32.xlu0 %v965, 64
        %v2591 = vpop.permute.xlu0 %2590
        %2592 = vrot.lane.b32.xlu0 %v966, 64
        %v2593 = vpop.permute.xlu0 %2592
        %v2595 = vsel %vm976, %v2579, 0
        %v2598 = vsel %vm976, %v2581, 0
        %v2601 = vsel %vm976, %v2583, 0
        %v2604 = vsel %vm976, %v2585, 0
        %v2607 = vsel %vm976, %v2587, 0
        %v2610 = vsel %vm976, %v2589, 0
        %v2613 = vsel %vm976, %v2591, 0
        %v2616 = vsel %vm976, %v2593, 0
        %2618 = vmatprep.subr.bf16.mxu0 0
        %2619 = vmatpush1.bf16.xpose.msra.mxu0 %v2607
        %2620 = vmatprep.subr.bf16.mxu0 0
        %2621 = vmatpush1.bf16.xpose.msra.mxu0 %v2610
        %2622 = vmatprep.subr.bf16.mxu0 0
        %2623 = vmatpush1.bf16.xpose.msra.mxu0 %v2613
        %2624 = vmatprep.subr.bf16.mxu0 0
        %2625 = vmatpush1.bf16.xpose.msra.mxu0 %v2616
        %2626 = vmatprep.subr.bf16.mxu0 0
        %2627 = vmatpush1.bf16.xpose.msra.mxu0 0
        %2628 = vmatprep.subr.bf16.mxu0 0
        %2629 = vmatpush1.bf16.xpose.msra.mxu0 0
        %2630 = vmatprep.subr.bf16.mxu0 0
        %2631 = vmatpush1.bf16.xpose.msra.mxu0 0
        %2632 = vmatprep.subr.bf16.mxu0 0
        %2633 = vmatpush1.bf16.xpose.msra.mxu0 0
        %2634 = vmatprep.subr.bf16.mxu0 0
        %2635 = vmatpush1.bf16.xpose.msra.mxu0 0
        %2636 = vmatprep.subr.bf16.mxu0 0
        %2637 = vmatpush1.bf16.xpose.msra.mxu0 0
        %2638 = vmatprep.subr.bf16.mxu0 0
        %2639 = vmatpush1.bf16.xpose.msra.mxu0 0
        %2640 = vmatprep.subr.bf16.mxu0 0
        %2641 = vmatpush1.bf16.xpose.msra.mxu0 0
        %2642 = vmatprep.subr.bf16.mxu0 0
        %2643 = vmatpush1.bf16.xpose.msra.mxu0 0
        %2644 = vmatprep.subr.bf16.mxu0 0
        %2645 = vmatpush1.bf16.xpose.msra.mxu0 0
        %2646 = vmatprep.subr.bf16.mxu0 0
        %2647 = vmatpush1.bf16.xpose.msra.mxu0 0
        %2648 = vmatprep.subr.bf16.mxu0 0
        %2649 = vmatpush1.bf16.xpose.msra.mxu0 0
        %2650 = vmatprep.mubr.bf16.mxu0 0
        %2651 = vmatmul.mubr.bf16.gmra.mrb[0].mxu0 %v2595
        %v2652 = vpop.f32.mrb[0].mxu0
        %v2653 = vadd.f32 0.0, %v2652
        %v2654 = vpop.f32.mrb[0].mxu0
        %v2655 = vpop.f32.mrb[0].mxu0
        %v2656 = vadd.f32 0.0, %v2655
        %v2657 = vpop.f32.mrb[0].mxu0
        %2658 = vmatprep.mubr.bf16.mxu0 0
        %2659 = vmatmul.mubr.bf16.gmra.mrb[0].mxu0 %v2598
        %v2660 = vpop.f32.mrb[0].mxu0
        %v2661 = vadd.f32 0.0, %v2660
        %v2662 = vpop.f32.mrb[0].mxu0
        %v2663 = vpop.f32.mrb[0].mxu0
        %v2664 = vadd.f32 0.0, %v2663
        %v2665 = vpop.f32.mrb[0].mxu0
        %2666 = vmatprep.mubr.bf16.mxu0 0
        %2667 = vmatmul.mubr.bf16.gmra.mrb[0].mxu0 %v2601
        %v2668 = vpop.f32.mrb[0].mxu0
        %v2669 = vadd.f32 0.0, %v2668
        %v2670 = vpop.f32.mrb[0].mxu0
        %v2671 = vpop.f32.mrb[0].mxu0
        %v2672 = vadd.f32 0.0, %v2671
        %v2673 = vpop.f32.mrb[0].mxu0
        %2674 = vmatprep.mubr.bf16.mxu0 0
        %2675 = vmatmul.mubr.bf16.gmra.mrb[0].mxu0 %v2604
        %v2676 = vpop.f32.mrb[0].mxu0
        %v2677 = vadd.f32 0.0, %v2676
        %v2678 = vpop.f32.mrb[0].mxu0
        %v2679 = vpop.f32.mrb[0].mxu0
        %v2680 = vadd.f32 0.0, %v2679
        %v2681 = vpop.f32.mrb[0].mxu0
        %2682 = vdwg.mxu0
        %v2683 = vsel %vm1066, %v2653, -inf
        %2684 = vmax.xlane.f32.xlu0 %v2683
        %v2685 = vpop.xlane.xlu0 %2684
        %v2686 = vsel %vm1066, %v2656, -inf
        %2687 = vmax.xlane.f32.xlu0 %v2686
        %v2688 = vpop.xlane.xlu0 %2687
        %v2689 = vsel %vm1066, %v2661, -inf
        %2690 = vmax.xlane.f32.xlu0 %v2689
        %v2691 = vpop.xlane.xlu0 %2690
        %v2692 = vsel %vm1066, %v2664, -inf
        %2693 = vmax.xlane.f32.xlu0 %v2692
        %v2694 = vpop.xlane.xlu0 %2693
        %v2695 = vsel %vm1066, %v2669, -inf
        %2696 = vmax.xlane.f32.xlu0 %v2695
        %v2697 = vpop.xlane.xlu0 %2696
        %v2698 = vsel %vm1066, %v2672, -inf
        %2699 = vmax.xlane.f32.xlu0 %v2698
        %v2700 = vpop.xlane.xlu0 %2699
        %v2701 = vsel %vm1066, %v2677, -inf
        %2702 = vmax.xlane.f32.xlu0 %v2701
        %v2703 = vpop.xlane.xlu0 %2702
        %v2704 = vsel %vm1066, %v2680, -inf
        %2705 = vmax.xlane.f32.xlu0 %v2704
        %v2706 = vpop.xlane.xlu0 %2705
        %v2707 = vsub.f32 %v2653, %v2685
        %v2708 = vsub.f32 %v2656, %v2688
        %v2709 = vsub.f32 %v2661, %v2691
        %v2710 = vsub.f32 %v2664, %v2694
        %v2711 = vsub.f32 %v2669, %v2697
        %v2712 = vsub.f32 %v2672, %v2700
        %v2713 = vsub.f32 %v2677, %v2703
        %v2714 = vsub.f32 %v2680, %v2706
        %v2715 = vmul.f32 %v2707, 1.442695
        %v2716 = vpow.pop %v2715
        %v2717 = vmul.f32 %v2708, 1.442695
        %v2718 = vpow.pop %v2717
        %v2719 = vmul.f32 %v2709, 1.442695
        %v2720 = vpow.pop %v2719
        %v2721 = vmul.f32 %v2710, 1.442695
        %v2722 = vpow.pop %v2721
        %v2723 = vmul.f32 %v2711, 1.442695
        %v2724 = vpow.pop %v2723
        %v2725 = vmul.f32 %v2712, 1.442695
        %v2726 = vpow.pop %v2725
        %v2727 = vmul.f32 %v2713, 1.442695
        %v2728 = vpow.pop %v2727
        %v2729 = vmul.f32 %v2714, 1.442695
        %v2730 = vpow.pop %v2729
        %v2731 = vsel %vm1066, %v2716, 0.0
        %2732 = vadd.xlane.f32.xlu0 %v2731
        %v2733 = vpop.xlane.xlu0 %2732
        %v2734 = vsel %vm1066, %v2718, 0.0
        %2735 = vadd.xlane.f32.xlu0 %v2734
        %v2736 = vpop.xlane.xlu0 %2735
        %v2737 = vsel %vm1066, %v2720, 0.0
        %2738 = vadd.xlane.f32.xlu0 %v2737
        %v2739 = vpop.xlane.xlu0 %2738
        %v2740 = vsel %vm1066, %v2722, 0.0
        %2741 = vadd.xlane.f32.xlu0 %v2740
        %v2742 = vpop.xlane.xlu0 %2741
        %v2743 = vsel %vm1066, %v2724, 0.0
        %2744 = vadd.xlane.f32.xlu0 %v2743
        %v2745 = vpop.xlane.xlu0 %2744
        %v2746 = vsel %vm1066, %v2726, 0.0
        %2747 = vadd.xlane.f32.xlu0 %v2746
        %v2748 = vpop.xlane.xlu0 %2747
        %v2749 = vsel %vm1066, %v2728, 0.0
        %2750 = vadd.xlane.f32.xlu0 %v2749
        %v2751 = vpop.xlane.xlu0 %2750
        %v2752 = vsel %vm1066, %v2730, 0.0
        %2753 = vadd.xlane.f32.xlu0 %v2752
        %v2754 = vpop.xlane.xlu0 %2753
        %v2755 = vrcp.pop %v2733
        %v2756 = vrcp.pop %v2736
        %v2757 = vrcp.pop %v2739
        %v2758 = vrcp.pop %v2742
        %v2759 = vrcp.pop %v2745
        %v2760 = vrcp.pop %v2748
        %v2761 = vrcp.pop %v2751
        %v2762 = vrcp.pop %v2754
        %v2763 = vmul.f32 %v2716, %v2755
        %v2764 = vmul.f32 %v2718, %v2756
        %v2765 = vmul.f32 %v2720, %v2757
        %v2766 = vmul.f32 %v2722, %v2758
        %v2767 = vmul.f32 %v2724, %v2759
        %v2768 = vmul.f32 %v2726, %v2760
        %v2769 = vmul.f32 %v2728, %v2761
        %v2770 = vmul.f32 %v2730, %v2762
        %v2771 = vpack.c.bf16 %v2764, %v2763
        %v2772 = vpack.c.bf16 %v2766, %v2765
        %v2773 = vpack.c.bf16 %v2768, %v2767
        %v2774 = vpack.c.bf16 %v2770, %v2769
        %v2776 = vsel %vm1066, %v2771, 0
        %v2779 = vsel %vm1066, %v2772, 0
        %v2782 = vsel %vm1066, %v2773, 0
        %v2785 = vsel %vm1066, %v2774, 0
        %2787 = vmatprep.subr.bf16.mxu0 0
        %2788 = vmatpush1.bf16.msra.mxu0 %v968
        %2789 = vmatprep.subr.bf16.mxu0 0
        %2790 = vmatpush1.bf16.msra.mxu0 %v970
        %2791 = vmatprep.subr.bf16.mxu0 0
        %2792 = vmatpush1.bf16.msra.mxu0 %v972
        %2793 = vmatprep.subr.bf16.mxu0 0
        %2794 = vmatpush1.bf16.msra.mxu0 %v974
        %2795 = vmatprep.subr.bf16.mxu0 0
        %2796 = vmatpush1.bf16.msra.mxu0 0
        %2797 = vmatprep.subr.bf16.mxu0 0
        %2798 = vmatpush1.bf16.msra.mxu0 0
        %2799 = vmatprep.subr.bf16.mxu0 0
        %2800 = vmatpush1.bf16.msra.mxu0 0
        %2801 = vmatprep.subr.bf16.mxu0 0
        %2802 = vmatpush1.bf16.msra.mxu0 0
        %2803 = vmatprep.subr.bf16.mxu0 0
        %2804 = vmatpush1.bf16.msra.mxu0 0
        %2805 = vmatprep.subr.bf16.mxu0 0
        %2806 = vmatpush1.bf16.msra.mxu0 0
        %2807 = vmatprep.subr.bf16.mxu0 0
        %2808 = vmatpush1.bf16.msra.mxu0 0
        %2809 = vmatprep.subr.bf16.mxu0 0
        %2810 = vmatpush1.bf16.msra.mxu0 0
        %2811 = vmatprep.subr.bf16.mxu0 0
        %2812 = vmatpush1.bf16.msra.mxu0 0
        %2813 = vmatprep.subr.bf16.mxu0 0
        %2814 = vmatpush1.bf16.msra.mxu0 0
        %2815 = vmatprep.subr.bf16.mxu0 0
        %2816 = vmatpush1.bf16.msra.mxu0 0
        %2817 = vmatprep.subr.bf16.mxu0 0
        %2818 = vmatpush1.bf16.msra.mxu0 0
        %2819 = vmatprep.mubr.bf16.mxu0 0
        %2820 = vmatmul.mubr.bf16.gmra.mrb[0].mxu0 %v2776
        %v2821 = vpop.f32.mrb[0].mxu0
        %v2822 = vadd.f32 0.0, %v2821
        %v2823 = vpop.f32.mrb[0].mxu0
        %v2824 = vpop.f32.mrb[0].mxu0
        %v2825 = vadd.f32 0.0, %v2824
        %v2826 = vpop.f32.mrb[0].mxu0
        %2827 = vmatprep.mubr.bf16.mxu0 0
        %2828 = vmatmul.mubr.bf16.gmra.mrb[0].mxu0 %v2779
        %v2829 = vpop.f32.mrb[0].mxu0
        %v2830 = vadd.f32 0.0, %v2829
        %v2831 = vpop.f32.mrb[0].mxu0
        %v2832 = vpop.f32.mrb[0].mxu0
        %v2833 = vadd.f32 0.0, %v2832
        %v2834 = vpop.f32.mrb[0].mxu0
        %2835 = vmatprep.mubr.bf16.mxu0 0
        %2836 = vmatmul.mubr.bf16.gmra.mrb[0].mxu0 %v2782
        %v2837 = vpop.f32.mrb[0].mxu0
        %v2838 = vadd.f32 0.0, %v2837
        %v2839 = vpop.f32.mrb[0].mxu0
        %v2840 = vpop.f32.mrb[0].mxu0
        %v2841 = vadd.f32 0.0, %v2840
        %v2842 = vpop.f32.mrb[0].mxu0
        %2843 = vmatprep.mubr.bf16.mxu0 0
        %2844 = vmatmul.mubr.bf16.gmra.mrb[0].mxu0 %v2785
        %v2845 = vpop.f32.mrb[0].mxu0
        %v2846 = vadd.f32 0.0, %v2845
        %v2847 = vpop.f32.mrb[0].mxu0
        %v2848 = vpop.f32.mrb[0].mxu0
        %v2849 = vadd.f32 0.0, %v2848
        %v2850 = vpop.f32.mrb[0].mxu0
        %2851 = vdwg.mxu0
        %v2852 = vmax.f32 %v2822, 0.0
        %v2853 = vmax.f32 %v2825, 0.0
        %v2854 = vmax.f32 %v2830, 0.0
        %v2855 = vmax.f32 %v2833, 0.0
        %v2856 = vmax.f32 %v2838, 0.0
        %v2857 = vmax.f32 %v2841, 0.0
        %v2858 = vmax.f32 %v2846, 0.0
        %v2859 = vmax.f32 %v2849, 0.0
        %v2860 = vmin.f32 %v2852, 6.0
        %v2861 = vmin.f32 %v2853, 6.0
        %v2862 = vmin.f32 %v2854, 6.0
        %v2863 = vmin.f32 %v2855, 6.0
        %v2864 = vmin.f32 %v2856, 6.0
        %v2865 = vmin.f32 %v2857, 6.0
        %v2866 = vmin.f32 %v2858, 6.0
        %v2867 = vmin.f32 %v2859, 6.0
        %v2868 = vpack.c.bf16 %v2861, %v2860
        %v2869 = vpack.c.bf16 %v2863, %v2862
        %v2870 = vpack.c.bf16 %v2865, %v2864
        %v2871 = vpack.c.bf16 %v2867, %v2866
        %s2872 = scalar_lea.vmem %s7, 64
        %v2873 = vld [vmem:[%s2872] sm:$0xf]
        %v2874 = vld [vmem:[%s2872 + $0x4] sm:$0xf]
        %v2875 = vld [vmem:[%s2872 + $0x8] sm:$0xf]
        %v2876 = vld [vmem:[%s2872 + $0xc] sm:$0xf]
        %v2881 = vunpack.c.l.b16 %v2873
        %v2882 = vunpack.c.l.b16 %v2874
        %v2883 = vunpack.c.l.b16 %v2875
        %v2884 = vunpack.c.l.b16 %v2876
        %v2885 = vpack.c.b16 %v2882, %v2881
        %v2886 = vpack.c.b16 %v2884, %v2883
        %v2890 = vsel %vm1595, %v2868, 0
        %v2893 = vsel %vm1595, %v2869, 0
        %v2896 = vsel %vm1595, %v2870, 0
        %v2899 = vsel %vm1595, %v2871, 0
        %2901 = vmatprep.subr.bf16.mxu0 0
        %2902 = vmatpush1.bf16.msra.mxu0 %v2885
        %2903 = vmatprep.subr.bf16.mxu0 0
        %2904 = vmatpush1.bf16.msra.mxu0 %v2886
        %2905 = vmatprep.subr.bf16.mxu0 0
        %2906 = vmatpush1.bf16.msra.mxu0 0
        %2907 = vmatprep.subr.bf16.mxu0 0
        %2908 = vmatpush1.bf16.msra.mxu0 0
        %2909 = vmatprep.subr.bf16.mxu0 0
        %2910 = vmatpush1.bf16.msra.mxu0 0
        %2911 = vmatprep.subr.bf16.mxu0 0
        %2912 = vmatpush1.bf16.msra.mxu0 0
        %2913 = vmatprep.subr.bf16.mxu0 0
        %2914 = vmatpush1.bf16.msra.mxu0 0
        %2915 = vmatprep.subr.bf16.mxu0 0
        %2916 = vmatpush1.bf16.msra.mxu0 0
        %2917 = vmatprep.subr.bf16.mxu0 0
        %2918 = vmatpush1.bf16.msra.mxu0 0
        %2919 = vmatprep.subr.bf16.mxu0 0
        %2920 = vmatpush1.bf16.msra.mxu0 0
        %2921 = vmatprep.subr.bf16.mxu0 0
        %2922 = vmatpush1.bf16.msra.mxu0 0
        %2923 = vmatprep.subr.bf16.mxu0 0
        %2924 = vmatpush1.bf16.msra.mxu0 0
        %2925 = vmatprep.subr.bf16.mxu0 0
        %2926 = vmatpush1.bf16.msra.mxu0 0
        %2927 = vmatprep.subr.bf16.mxu0 0
        %2928 = vmatpush1.bf16.msra.mxu0 0
        %2929 = vmatprep.subr.bf16.mxu0 0
        %2930 = vmatpush1.bf16.msra.mxu0 0
        %2931 = vmatprep.subr.bf16.mxu0 0
        %2932 = vmatpush1.bf16.msra.mxu0 0
        %2933 = vmatprep.mubr.bf16.mxu0 0
        %2934 = vmatmul.mubr.bf16.gmra.mrb[0].mxu0 %v2890
        %v2935 = vpop.f32.mrb[0].mxu0
        %v2936 = vadd.f32 0.0, %v2935
        %v2937 = vpop.f32.mrb[0].mxu0
        %v2938 = vpop.f32.mrb[0].mxu0
        %v2939 = vadd.f32 0.0, %v2938
        %v2940 = vpop.f32.mrb[0].mxu0
        %2941 = vmatprep.mubr.bf16.mxu0 0
        %2942 = vmatmul.mubr.bf16.gmra.mrb[0].mxu0 %v2893
        %v2943 = vpop.f32.mrb[0].mxu0
        %v2944 = vadd.f32 0.0, %v2943
        %v2945 = vpop.f32.mrb[0].mxu0
        %v2946 = vpop.f32.mrb[0].mxu0
        %v2947 = vadd.f32 0.0, %v2946
        %v2948 = vpop.f32.mrb[0].mxu0
        %2949 = vmatprep.mubr.bf16.mxu0 0
        %2950 = vmatmul.mubr.bf16.gmra.mrb[0].mxu0 %v2896
        %v2951 = vpop.f32.mrb[0].mxu0
        %v2952 = vadd.f32 0.0, %v2951
        %v2953 = vpop.f32.mrb[0].mxu0
        %v2954 = vpop.f32.mrb[0].mxu0
        %v2955 = vadd.f32 0.0, %v2954
        %v2956 = vpop.f32.mrb[0].mxu0
        %2957 = vmatprep.mubr.bf16.mxu0 0
        %2958 = vmatmul.mubr.bf16.gmra.mrb[0].mxu0 %v2899
        %v2959 = vpop.f32.mrb[0].mxu0
        %v2960 = vadd.f32 0.0, %v2959
        %v2961 = vpop.f32.mrb[0].mxu0
        %v2962 = vpop.f32.mrb[0].mxu0
        %v2963 = vadd.f32 0.0, %v2962
        %v2964 = vpop.f32.mrb[0].mxu0
        %2965 = vdwg.mxu0
        %v2966 = vadd.f32 %v2570, %v2936
        %v2967 = vadd.f32 %v2571, %v2939
        %v2968 = vadd.f32 %v2572, %v2944
        %v2969 = vadd.f32 %v2573, %v2947
        %v2970 = vadd.f32 %v2574, %v2952
        %v2971 = vadd.f32 %v2575, %v2955
        %v2972 = vadd.f32 %v2576, %v2960
        %v2973 = vadd.f32 %v2577, %v2963
        %2974 = vrot.lane.b32.xlu0 %v959, 48
        %v2975 = vpop.permute.xlu0 %2974
        %2976 = vrot.lane.b32.xlu0 %v960, 48
        %v2977 = vpop.permute.xlu0 %2976
        %2978 = vrot.lane.b32.xlu0 %v961, 48
        %v2979 = vpop.permute.xlu0 %2978
        %2980 = vrot.lane.b32.xlu0 %v962, 48
        %v2981 = vpop.permute.xlu0 %2980
        %2982 = vrot.lane.b32.xlu0 %v963, 48
        %v2983 = vpop.permute.xlu0 %2982
        %2984 = vrot.lane.b32.xlu0 %v964, 48
        %v2985 = vpop.permute.xlu0 %2984
        %2986 = vrot.lane.b32.xlu0 %v965, 48
        %v2987 = vpop.permute.xlu0 %2986
        %2988 = vrot.lane.b32.xlu0 %v966, 48
        %v2989 = vpop.permute.xlu0 %2988
        %v2991 = vsel %vm976, %v2975, 0
        %v2994 = vsel %vm976, %v2977, 0
        %v2997 = vsel %vm976, %v2979, 0
        %v3000 = vsel %vm976, %v2981, 0
        %v3003 = vsel %vm976, %v2983, 0
        %v3006 = vsel %vm976, %v2985, 0
        %v3009 = vsel %vm976, %v2987, 0
        %v3012 = vsel %vm976, %v2989, 0
        %3014 = vmatprep.subr.bf16.mxu0 0
        %3015 = vmatpush1.bf16.xpose.msra.mxu0 %v3003
        %3016 = vmatprep.subr.bf16.mxu0 0
        %3017 = vmatpush1.bf16.xpose.msra.mxu0 %v3006
        %3018 = vmatprep.subr.bf16.mxu0 0
        %3019 = vmatpush1.bf16.xpose.msra.mxu0 %v3009
        %3020 = vmatprep.subr.bf16.mxu0 0
        %3021 = vmatpush1.bf16.xpose.msra.mxu0 %v3012
        %3022 = vmatprep.subr.bf16.mxu0 0
        %3023 = vmatpush1.bf16.xpose.msra.mxu0 0
        %3024 = vmatprep.subr.bf16.mxu0 0
        %3025 = vmatpush1.bf16.xpose.msra.mxu0 0
        %3026 = vmatprep.subr.bf16.mxu0 0
        %3027 = vmatpush1.bf16.xpose.msra.mxu0 0
        %3028 = vmatprep.subr.bf16.mxu0 0
        %3029 = vmatpush1.bf16.xpose.msra.mxu0 0
        %3030 = vmatprep.subr.bf16.mxu0 0
        %3031 = vmatpush1.bf16.xpose.msra.mxu0 0
        %3032 = vmatprep.subr.bf16.mxu0 0
        %3033 = vmatpush1.bf16.xpose.msra.mxu0 0
        %3034 = vmatprep.subr.bf16.mxu0 0
        %3035 = vmatpush1.bf16.xpose.msra.mxu0 0
        %3036 = vmatprep.subr.bf16.mxu0 0
        %3037 = vmatpush1.bf16.xpose.msra.mxu0 0
        %3038 = vmatprep.subr.bf16.mxu0 0
        %3039 = vmatpush1.bf16.xpose.msra.mxu0 0
        %3040 = vmatprep.subr.bf16.mxu0 0
        %3041 = vmatpush1.bf16.xpose.msra.mxu0 0
        %3042 = vmatprep.subr.bf16.mxu0 0
        %3043 = vmatpush1.bf16.xpose.msra.mxu0 0
        %3044 = vmatprep.subr.bf16.mxu0 0
        %3045 = vmatpush1.bf16.xpose.msra.mxu0 0
        %3046 = vmatprep.mubr.bf16.mxu0 0
        %3047 = vmatmul.mubr.bf16.gmra.mrb[0].mxu0 %v2991
        %v3048 = vpop.f32.mrb[0].mxu0
        %v3049 = vadd.f32 0.0, %v3048
        %v3050 = vpop.f32.mrb[0].mxu0
        %v3051 = vpop.f32.mrb[0].mxu0
        %v3052 = vadd.f32 0.0, %v3051
        %v3053 = vpop.f32.mrb[0].mxu0
        %3054 = vmatprep.mubr.bf16.mxu0 0
        %3055 = vmatmul.mubr.bf16.gmra.mrb[0].mxu0 %v2994
        %v3056 = vpop.f32.mrb[0].mxu0
        %v3057 = vadd.f32 0.0, %v3056
        %v3058 = vpop.f32.mrb[0].mxu0
        %v3059 = vpop.f32.mrb[0].mxu0
        %v3060 = vadd.f32 0.0, %v3059
        %v3061 = vpop.f32.mrb[0].mxu0
        %3062 = vmatprep.mubr.bf16.mxu0 0
        %3063 = vmatmul.mubr.bf16.gmra.mrb[0].mxu0 %v2997
        %v3064 = vpop.f32.mrb[0].mxu0
        %v3065 = vadd.f32 0.0, %v3064
        %v3066 = vpop.f32.mrb[0].mxu0
        %v3067 = vpop.f32.mrb[0].mxu0
        %v3068 = vadd.f32 0.0, %v3067
        %v3069 = vpop.f32.mrb[0].mxu0
        %3070 = vmatprep.mubr.bf16.mxu0 0
        %3071 = vmatmul.mubr.bf16.gmra.mrb[0].mxu0 %v3000
        %v3072 = vpop.f32.mrb[0].mxu0
        %v3073 = vadd.f32 0.0, %v3072
        %v3074 = vpop.f32.mrb[0].mxu0
        %v3075 = vpop.f32.mrb[0].mxu0
        %v3076 = vadd.f32 0.0, %v3075
        %v3077 = vpop.f32.mrb[0].mxu0
        %3078 = vdwg.mxu0
        %v3079 = vsel %vm1066, %v3049, -inf
        %3080 = vmax.xlane.f32.xlu0 %v3079
        %v3081 = vpop.xlane.xlu0 %3080
        %v3082 = vsel %vm1066, %v3052, -inf
        %3083 = vmax.xlane.f32.xlu0 %v3082
        %v3084 = vpop.xlane.xlu0 %3083
        %v3085 = vsel %vm1066, %v3057, -inf
        %3086 = vmax.xlane.f32.xlu0 %v3085
        %v3087 = vpop.xlane.xlu0 %3086
        %v3088 = vsel %vm1066, %v3060, -inf
        %3089 = vmax.xlane.f32.xlu0 %v3088
        %v3090 = vpop.xlane.xlu0 %3089
        %v3091 = vsel %vm1066, %v3065, -inf
        %3092 = vmax.xlane.f32.xlu0 %v3091
        %v3093 = vpop.xlane.xlu0 %3092
        %v3094 = vsel %vm1066, %v3068, -inf
        %3095 = vmax.xlane.f32.xlu0 %v3094
        %v3096 = vpop.xlane.xlu0 %3095
        %v3097 = vsel %vm1066, %v3073, -inf
        %3098 = vmax.xlane.f32.xlu0 %v3097
        %v3099 = vpop.xlane.xlu0 %3098
        %v3100 = vsel %vm1066, %v3076, -inf
        %3101 = vmax.xlane.f32.xlu0 %v3100
        %v3102 = vpop.xlane.xlu0 %3101
        %v3103 = vsub.f32 %v3049, %v3081
        %v3104 = vsub.f32 %v3052, %v3084
        %v3105 = vsub.f32 %v3057, %v3087
        %v3106 = vsub.f32 %v3060, %v3090
        %v3107 = vsub.f32 %v3065, %v3093
        %v3108 = vsub.f32 %v3068, %v3096
        %v3109 = vsub.f32 %v3073, %v3099
        %v3110 = vsub.f32 %v3076, %v3102
        %v3111 = vmul.f32 %v3103, 1.442695
        %v3112 = vpow.pop %v3111
        %v3113 = vmul.f32 %v3104, 1.442695
        %v3114 = vpow.pop %v3113
        %v3115 = vmul.f32 %v3105, 1.442695
        %v3116 = vpow.pop %v3115
        %v3117 = vmul.f32 %v3106, 1.442695
        %v3118 = vpow.pop %v3117
        %v3119 = vmul.f32 %v3107, 1.442695
        %v3120 = vpow.pop %v3119
        %v3121 = vmul.f32 %v3108, 1.442695
        %v3122 = vpow.pop %v3121
        %v3123 = vmul.f32 %v3109, 1.442695
        %v3124 = vpow.pop %v3123
        %v3125 = vmul.f32 %v3110, 1.442695
        %v3126 = vpow.pop %v3125
        %v3127 = vsel %vm1066, %v3112, 0.0
        %3128 = vadd.xlane.f32.xlu0 %v3127
        %v3129 = vpop.xlane.xlu0 %3128
        %v3130 = vsel %vm1066, %v3114, 0.0
        %3131 = vadd.xlane.f32.xlu0 %v3130
        %v3132 = vpop.xlane.xlu0 %3131
        %v3133 = vsel %vm1066, %v3116, 0.0
        %3134 = vadd.xlane.f32.xlu0 %v3133
        %v3135 = vpop.xlane.xlu0 %3134
        %v3136 = vsel %vm1066, %v3118, 0.0
        %3137 = vadd.xlane.f32.xlu0 %v3136
        %v3138 = vpop.xlane.xlu0 %3137
        %v3139 = vsel %vm1066, %v3120, 0.0
        %3140 = vadd.xlane.f32.xlu0 %v3139
        %v3141 = vpop.xlane.xlu0 %3140
        %v3142 = vsel %vm1066, %v3122, 0.0
        %3143 = vadd.xlane.f32.xlu0 %v3142
        %v3144 = vpop.xlane.xlu0 %3143
        %v3145 = vsel %vm1066, %v3124, 0.0
        %3146 = vadd.xlane.f32.xlu0 %v3145
        %v3147 = vpop.xlane.xlu0 %3146
        %v3148 = vsel %vm1066, %v3126, 0.0
        %3149 = vadd.xlane.f32.xlu0 %v3148
        %v3150 = vpop.xlane.xlu0 %3149
        %v3151 = vrcp.pop %v3129
        %v3152 = vrcp.pop %v3132
        %v3153 = vrcp.pop %v3135
        %v3154 = vrcp.pop %v3138
        %v3155 = vrcp.pop %v3141
        %v3156 = vrcp.pop %v3144
        %v3157 = vrcp.pop %v3147
        %v3158 = vrcp.pop %v3150
        %v3159 = vmul.f32 %v3112, %v3151
        %v3160 = vmul.f32 %v3114, %v3152
        %v3161 = vmul.f32 %v3116, %v3153
        %v3162 = vmul.f32 %v3118, %v3154
        %v3163 = vmul.f32 %v3120, %v3155
        %v3164 = vmul.f32 %v3122, %v3156
        %v3165 = vmul.f32 %v3124, %v3157
        %v3166 = vmul.f32 %v3126, %v3158
        %v3167 = vpack.c.bf16 %v3160, %v3159
        %v3168 = vpack.c.bf16 %v3162, %v3161
        %v3169 = vpack.c.bf16 %v3164, %v3163
        %v3170 = vpack.c.bf16 %v3166, %v3165
        %3175 = vrot.lane.b32.xlu0 %v968, 96
        %v3176 = vpop.permute.xlu0 %3175
        %3177 = vrot.lane.b32.xlu0 %v970, 96
        %v3178 = vpop.permute.xlu0 %3177
        %3179 = vrot.lane.b32.xlu0 %v972, 96
        %v3180 = vpop.permute.xlu0 %3179
        %3181 = vrot.lane.b32.xlu0 %v974, 96
        %v3182 = vpop.permute.xlu0 %3181
        %v3188 = vsel %vm1066, %v3167, 0
        %v3191 = vsel %vm1066, %v3168, 0
        %v3194 = vsel %vm1066, %v3169, 0
        %v3197 = vsel %vm1066, %v3170, 0
        %3199 = vmatprep.subr.bf16.mxu0 0
        %3200 = vmatpush1.bf16.msra.mxu0 %v3176
        %3201 = vmatprep.subr.bf16.mxu0 0
        %3202 = vmatpush1.bf16.msra.mxu0 %v3178
        %3203 = vmatprep.subr.bf16.mxu0 0
        %3204 = vmatpush1.bf16.msra.mxu0 %v3180
        %3205 = vmatprep.subr.bf16.mxu0 0
        %3206 = vmatpush1.bf16.msra.mxu0 %v3182
        %3207 = vmatprep.subr.bf16.mxu0 0
        %3208 = vmatpush1.bf16.msra.mxu0 0
        %3209 = vmatprep.subr.bf16.mxu0 0
        %3210 = vmatpush1.bf16.msra.mxu0 0
        %3211 = vmatprep.subr.bf16.mxu0 0
        %3212 = vmatpush1.bf16.msra.mxu0 0
        %3213 = vmatprep.subr.bf16.mxu0 0
        %3214 = vmatpush1.bf16.msra.mxu0 0
        %3215 = vmatprep.subr.bf16.mxu0 0
        %3216 = vmatpush1.bf16.msra.mxu0 0
        %3217 = vmatprep.subr.bf16.mxu0 0
        %3218 = vmatpush1.bf16.msra.mxu0 0
        %3219 = vmatprep.subr.bf16.mxu0 0
        %3220 = vmatpush1.bf16.msra.mxu0 0
        %3221 = vmatprep.subr.bf16.mxu0 0
        %3222 = vmatpush1.bf16.msra.mxu0 0
        %3223 = vmatprep.subr.bf16.mxu0 0
        %3224 = vmatpush1.bf16.msra.mxu0 0
        %3225 = vmatprep.subr.bf16.mxu0 0
        %3226 = vmatpush1.bf16.msra.mxu0 0
        %3227 = vmatprep.subr.bf16.mxu0 0
        %3228 = vmatpush1.bf16.msra.mxu0 0
        %3229 = vmatprep.subr.bf16.mxu0 0
        %3230 = vmatpush1.bf16.msra.mxu0 0
        %3231 = vmatprep.mubr.bf16.mxu0 0
        %3232 = vmatmul.mubr.bf16.gmra.mrb[0].mxu0 %v3188
        %v3233 = vpop.f32.mrb[0].mxu0
        %v3234 = vadd.f32 0.0, %v3233
        %v3235 = vpop.f32.mrb[0].mxu0
        %v3236 = vpop.f32.mrb[0].mxu0
        %v3237 = vadd.f32 0.0, %v3236
        %v3238 = vpop.f32.mrb[0].mxu0
        %3239 = vmatprep.mubr.bf16.mxu0 0
        %3240 = vmatmul.mubr.bf16.gmra.mrb[0].mxu0 %v3191
        %v3241 = vpop.f32.mrb[0].mxu0
        %v3242 = vadd.f32 0.0, %v3241
        %v3243 = vpop.f32.mrb[0].mxu0
        %v3244 = vpop.f32.mrb[0].mxu0
        %v3245 = vadd.f32 0.0, %v3244
        %v3246 = vpop.f32.mrb[0].mxu0
        %3247 = vmatprep.mubr.bf16.mxu0 0
        %3248 = vmatmul.mubr.bf16.gmra.mrb[0].mxu0 %v3194
        %v3249 = vpop.f32.mrb[0].mxu0
        %v3250 = vadd.f32 0.0, %v3249
        %v3251 = vpop.f32.mrb[0].mxu0
        %v3252 = vpop.f32.mrb[0].mxu0
        %v3253 = vadd.f32 0.0, %v3252
        %v3254 = vpop.f32.mrb[0].mxu0
        %3255 = vmatprep.mubr.bf16.mxu0 0
        %3256 = vmatmul.mubr.bf16.gmra.mrb[0].mxu0 %v3197
        %v3257 = vpop.f32.mrb[0].mxu0
        %v3258 = vadd.f32 0.0, %v3257
        %v3259 = vpop.f32.mrb[0].mxu0
        %v3260 = vpop.f32.mrb[0].mxu0
        %v3261 = vadd.f32 0.0, %v3260
        %v3262 = vpop.f32.mrb[0].mxu0
        %3263 = vdwg.mxu0
        %v3264 = vmax.f32 %v3234, 0.0
        %v3265 = vmax.f32 %v3237, 0.0
        %v3266 = vmax.f32 %v3242, 0.0
        %v3267 = vmax.f32 %v3245, 0.0
        %v3268 = vmax.f32 %v3250, 0.0
        %v3269 = vmax.f32 %v3253, 0.0
        %v3270 = vmax.f32 %v3258, 0.0
        %v3271 = vmax.f32 %v3261, 0.0
        %v3272 = vmin.f32 %v3264, 6.0
        %v3273 = vmin.f32 %v3265, 6.0
        %v3274 = vmin.f32 %v3266, 6.0
        %v3275 = vmin.f32 %v3267, 6.0
        %v3276 = vmin.f32 %v3268, 6.0
        %v3277 = vmin.f32 %v3269, 6.0
        %v3278 = vmin.f32 %v3270, 6.0
        %v3279 = vmin.f32 %v3271, 6.0
        %v3280 = vpack.c.bf16 %v3273, %v3272
        %v3281 = vpack.c.bf16 %v3275, %v3274
        %v3282 = vpack.c.bf16 %v3277, %v3276
        %v3283 = vpack.c.bf16 %v3279, %v3278
        %s3284 = scalar_lea.vmem %s7, 80
        %v3285 = vld [vmem:[%s3284] sm:$0xf]
        %v3286 = vld [vmem:[%s3284 + $0x4] sm:$0xf]
        %v3287 = vld [vmem:[%s3284 + $0x8] sm:$0xf]
        %v3288 = vld [vmem:[%s3284 + $0xc] sm:$0xf]
        %v3293 = vunpack.c.l.b16 %v3285
        %v3294 = vunpack.c.l.b16 %v3286
        %v3295 = vunpack.c.l.b16 %v3287
        %v3296 = vunpack.c.l.b16 %v3288
        %v3297 = vpack.c.b16 %v3294, %v3293
        %v3298 = vpack.c.b16 %v3296, %v3295
        %v3302 = vsel %vm1595, %v3280, 0
        %v3305 = vsel %vm1595, %v3281, 0
        %v3308 = vsel %vm1595, %v3282, 0
        %v3311 = vsel %vm1595, %v3283, 0
        %3313 = vmatprep.subr.bf16.mxu0 0
        %3314 = vmatpush1.bf16.msra.mxu0 %v3297
        %3315 = vmatprep.subr.bf16.mxu0 0
        %3316 = vmatpush1.bf16.msra.mxu0 %v3298
        %3317 = vmatprep.subr.bf16.mxu0 0
        %3318 = vmatpush1.bf16.msra.mxu0 0
        %3319 = vmatprep.subr.bf16.mxu0 0
        %3320 = vmatpush1.bf16.msra.mxu0 0
        %3321 = vmatprep.subr.bf16.mxu0 0
        %3322 = vmatpush1.bf16.msra.mxu0 0
        %3323 = vmatprep.subr.bf16.mxu0 0
        %3324 = vmatpush1.bf16.msra.mxu0 0
        %3325 = vmatprep.subr.bf16.mxu0 0
        %3326 = vmatpush1.bf16.msra.mxu0 0
        %3327 = vmatprep.subr.bf16.mxu0 0
        %3328 = vmatpush1.bf16.msra.mxu0 0
        %3329 = vmatprep.subr.bf16.mxu0 0
        %3330 = vmatpush1.bf16.msra.mxu0 0
        %3331 = vmatprep.subr.bf16.mxu0 0
        %3332 = vmatpush1.bf16.msra.mxu0 0
        %3333 = vmatprep.subr.bf16.mxu0 0
        %3334 = vmatpush1.bf16.msra.mxu0 0
        %3335 = vmatprep.subr.bf16.mxu0 0
        %3336 = vmatpush1.bf16.msra.mxu0 0
        %3337 = vmatprep.subr.bf16.mxu0 0
        %3338 = vmatpush1.bf16.msra.mxu0 0
        %3339 = vmatprep.subr.bf16.mxu0 0
        %3340 = vmatpush1.bf16.msra.mxu0 0
        %3341 = vmatprep.subr.bf16.mxu0 0
        %3342 = vmatpush1.bf16.msra.mxu0 0
        %3343 = vmatprep.subr.bf16.mxu0 0
        %3344 = vmatpush1.bf16.msra.mxu0 0
        %3345 = vmatprep.mubr.bf16.mxu0 0
        %3346 = vmatmul.mubr.bf16.gmra.mrb[0].mxu0 %v3302
        %v3347 = vpop.f32.mrb[0].mxu0
        %v3348 = vadd.f32 0.0, %v3347
        %v3349 = vpop.f32.mrb[0].mxu0
        %v3350 = vpop.f32.mrb[0].mxu0
        %v3351 = vadd.f32 0.0, %v3350
        %v3352 = vpop.f32.mrb[0].mxu0
        %3353 = vmatprep.mubr.bf16.mxu0 0
        %3354 = vmatmul.mubr.bf16.gmra.mrb[0].mxu0 %v3305
        %v3355 = vpop.f32.mrb[0].mxu0
        %v3356 = vadd.f32 0.0, %v3355
        %v3357 = vpop.f32.mrb[0].mxu0
        %v3358 = vpop.f32.mrb[0].mxu0
        %v3359 = vadd.f32 0.0, %v3358
        %v3360 = vpop.f32.mrb[0].mxu0
        %3361 = vmatprep.mubr.bf16.mxu0 0
        %3362 = vmatmul.mubr.bf16.gmra.mrb[0].mxu0 %v3308
        %v3363 = vpop.f32.mrb[0].mxu0
        %v3364 = vadd.f32 0.0, %v3363
        %v3365 = vpop.f32.mrb[0].mxu0
        %v3366 = vpop.f32.mrb[0].mxu0
        %v3367 = vadd.f32 0.0, %v3366
        %v3368 = vpop.f32.mrb[0].mxu0
        %3369 = vmatprep.mubr.bf16.mxu0 0
        %3370 = vmatmul.mubr.bf16.gmra.mrb[0].mxu0 %v3311
        %v3371 = vpop.f32.mrb[0].mxu0
        %v3372 = vadd.f32 0.0, %v3371
        %v3373 = vpop.f32.mrb[0].mxu0
        %v3374 = vpop.f32.mrb[0].mxu0
        %v3375 = vadd.f32 0.0, %v3374
        %v3376 = vpop.f32.mrb[0].mxu0
        %3377 = vdwg.mxu0
        %v3378 = vadd.f32 %v2966, %v3348
        %v3379 = vadd.f32 %v2967, %v3351
        %v3380 = vadd.f32 %v2968, %v3356
        %v3381 = vadd.f32 %v2969, %v3359
        %v3382 = vadd.f32 %v2970, %v3364
        %v3383 = vadd.f32 %v2971, %v3367
        %v3384 = vadd.f32 %v2972, %v3372
        %v3385 = vadd.f32 %v2973, %v3375
        %3386 = vrot.lane.b32.xlu0 %v959, 32
        %v3387 = vpop.permute.xlu0 %3386
        %3388 = vrot.lane.b32.xlu0 %v960, 32
        %v3389 = vpop.permute.xlu0 %3388
        %3390 = vrot.lane.b32.xlu0 %v961, 32
        %v3391 = vpop.permute.xlu0 %3390
        %3392 = vrot.lane.b32.xlu0 %v962, 32
        %v3393 = vpop.permute.xlu0 %3392
        %3394 = vrot.lane.b32.xlu0 %v963, 32
        %v3395 = vpop.permute.xlu0 %3394
        %3396 = vrot.lane.b32.xlu0 %v964, 32
        %v3397 = vpop.permute.xlu0 %3396
        %3398 = vrot.lane.b32.xlu0 %v965, 32
        %v3399 = vpop.permute.xlu0 %3398
        %3400 = vrot.lane.b32.xlu0 %v966, 32
        %v3401 = vpop.permute.xlu0 %3400
        %v3403 = vsel %vm976, %v3387, 0
        %v3406 = vsel %vm976, %v3389, 0
        %v3409 = vsel %vm976, %v3391, 0
        %v3412 = vsel %vm976, %v3393, 0
        %v3415 = vsel %vm976, %v3395, 0
        %v3418 = vsel %vm976, %v3397, 0
        %v3421 = vsel %vm976, %v3399, 0
        %v3424 = vsel %vm976, %v3401, 0
        %3426 = vmatprep.subr.bf16.mxu0 0
        %3427 = vmatpush1.bf16.xpose.msra.mxu0 %v3415
        %3428 = vmatprep.subr.bf16.mxu0 0
        %3429 = vmatpush1.bf16.xpose.msra.mxu0 %v3418
        %3430 = vmatprep.subr.bf16.mxu0 0
        %3431 = vmatpush1.bf16.xpose.msra.mxu0 %v3421
        %3432 = vmatprep.subr.bf16.mxu0 0
        %3433 = vmatpush1.bf16.xpose.msra.mxu0 %v3424
        %3434 = vmatprep.subr.bf16.mxu0 0
        %3435 = vmatpush1.bf16.xpose.msra.mxu0 0
        %3436 = vmatprep.subr.bf16.mxu0 0
        %3437 = vmatpush1.bf16.xpose.msra.mxu0 0
        %3438 = vmatprep.subr.bf16.mxu0 0
        %3439 = vmatpush1.bf16.xpose.msra.mxu0 0
        %3440 = vmatprep.subr.bf16.mxu0 0
        %3441 = vmatpush1.bf16.xpose.msra.mxu0 0
        %3442 = vmatprep.subr.bf16.mxu0 0
        %3443 = vmatpush1.bf16.xpose.msra.mxu0 0
        %3444 = vmatprep.subr.bf16.mxu0 0
        %3445 = vmatpush1.bf16.xpose.msra.mxu0 0
        %3446 = vmatprep.subr.bf16.mxu0 0
        %3447 = vmatpush1.bf16.xpose.msra.mxu0 0
        %3448 = vmatprep.subr.bf16.mxu0 0
        %3449 = vmatpush1.bf16.xpose.msra.mxu0 0
        %3450 = vmatprep.subr.bf16.mxu0 0
        %3451 = vmatpush1.bf16.xpose.msra.mxu0 0
        %3452 = vmatprep.subr.bf16.mxu0 0
        %3453 = vmatpush1.bf16.xpose.msra.mxu0 0
        %3454 = vmatprep.subr.bf16.mxu0 0
        %3455 = vmatpush1.bf16.xpose.msra.mxu0 0
        %3456 = vmatprep.subr.bf16.mxu0 0
        %3457 = vmatpush1.bf16.xpose.msra.mxu0 0
        %3458 = vmatprep.mubr.bf16.mxu0 0
        %3459 = vmatmul.mubr.bf16.gmra.mrb[0].mxu0 %v3403
        %v3460 = vpop.f32.mrb[0].mxu0
        %v3461 = vadd.f32 0.0, %v3460
        %v3462 = vpop.f32.mrb[0].mxu0
        %v3463 = vpop.f32.mrb[0].mxu0
        %v3464 = vadd.f32 0.0, %v3463
        %v3465 = vpop.f32.mrb[0].mxu0
        %3466 = vmatprep.mubr.bf16.mxu0 0
        %3467 = vmatmul.mubr.bf16.gmra.mrb[0].mxu0 %v3406
        %v3468 = vpop.f32.mrb[0].mxu0
        %v3469 = vadd.f32 0.0, %v3468
        %v3470 = vpop.f32.mrb[0].mxu0
        %v3471 = vpop.f32.mrb[0].mxu0
        %v3472 = vadd.f32 0.0, %v3471
        %v3473 = vpop.f32.mrb[0].mxu0
        %3474 = vmatprep.mubr.bf16.mxu0 0
        %3475 = vmatmul.mubr.bf16.gmra.mrb[0].mxu0 %v3409
        %v3476 = vpop.f32.mrb[0].mxu0
        %v3477 = vadd.f32 0.0, %v3476
        %v3478 = vpop.f32.mrb[0].mxu0
        %v3479 = vpop.f32.mrb[0].mxu0
        %v3480 = vadd.f32 0.0, %v3479
        %v3481 = vpop.f32.mrb[0].mxu0
        %3482 = vmatprep.mubr.bf16.mxu0 0
        %3483 = vmatmul.mubr.bf16.gmra.mrb[0].mxu0 %v3412
        %v3484 = vpop.f32.mrb[0].mxu0
        %v3485 = vadd.f32 0.0, %v3484
        %v3486 = vpop.f32.mrb[0].mxu0
        %v3487 = vpop.f32.mrb[0].mxu0
        %v3488 = vadd.f32 0.0, %v3487
        %v3489 = vpop.f32.mrb[0].mxu0
        %3490 = vdwg.mxu0
        %v3491 = vsel %vm1066, %v3461, -inf
        %3492 = vmax.xlane.f32.xlu0 %v3491
        %v3493 = vpop.xlane.xlu0 %3492
        %v3494 = vsel %vm1066, %v3464, -inf
        %3495 = vmax.xlane.f32.xlu0 %v3494
        %v3496 = vpop.xlane.xlu0 %3495
        %v3497 = vsel %vm1066, %v3469, -inf
        %3498 = vmax.xlane.f32.xlu0 %v3497
        %v3499 = vpop.xlane.xlu0 %3498
        %v3500 = vsel %vm1066, %v3472, -inf
        %3501 = vmax.xlane.f32.xlu0 %v3500
        %v3502 = vpop.xlane.xlu0 %3501
        %v3503 = vsel %vm1066, %v3477, -inf
        %3504 = vmax.xlane.f32.xlu0 %v3503
        %v3505 = vpop.xlane.xlu0 %3504
        %v3506 = vsel %vm1066, %v3480, -inf
        %3507 = vmax.xlane.f32.xlu0 %v3506
        %v3508 = vpop.xlane.xlu0 %3507
        %v3509 = vsel %vm1066, %v3485, -inf
        %3510 = vmax.xlane.f32.xlu0 %v3509
        %v3511 = vpop.xlane.xlu0 %3510
        %v3512 = vsel %vm1066, %v3488, -inf
        %3513 = vmax.xlane.f32.xlu0 %v3512
        %v3514 = vpop.xlane.xlu0 %3513
        %v3515 = vsub.f32 %v3461, %v3493
        %v3516 = vsub.f32 %v3464, %v3496
        %v3517 = vsub.f32 %v3469, %v3499
        %v3518 = vsub.f32 %v3472, %v3502
        %v3519 = vsub.f32 %v3477, %v3505
        %v3520 = vsub.f32 %v3480, %v3508
        %v3521 = vsub.f32 %v3485, %v3511
        %v3522 = vsub.f32 %v3488, %v3514
        %v3523 = vmul.f32 %v3515, 1.442695
        %v3524 = vpow.pop %v3523
        %v3525 = vmul.f32 %v3516, 1.442695
        %v3526 = vpow.pop %v3525
        %v3527 = vmul.f32 %v3517, 1.442695
        %v3528 = vpow.pop %v3527
        %v3529 = vmul.f32 %v3518, 1.442695
        %v3530 = vpow.pop %v3529
        %v3531 = vmul.f32 %v3519, 1.442695
        %v3532 = vpow.pop %v3531
        %v3533 = vmul.f32 %v3520, 1.442695
        %v3534 = vpow.pop %v3533
        %v3535 = vmul.f32 %v3521, 1.442695
        %v3536 = vpow.pop %v3535
        %v3537 = vmul.f32 %v3522, 1.442695
        %v3538 = vpow.pop %v3537
        %v3539 = vsel %vm1066, %v3524, 0.0
        %3540 = vadd.xlane.f32.xlu0 %v3539
        %v3541 = vpop.xlane.xlu0 %3540
        %v3542 = vsel %vm1066, %v3526, 0.0
        %3543 = vadd.xlane.f32.xlu0 %v3542
        %v3544 = vpop.xlane.xlu0 %3543
        %v3545 = vsel %vm1066, %v3528, 0.0
        %3546 = vadd.xlane.f32.xlu0 %v3545
        %v3547 = vpop.xlane.xlu0 %3546
        %v3548 = vsel %vm1066, %v3530, 0.0
        %3549 = vadd.xlane.f32.xlu0 %v3548
        %v3550 = vpop.xlane.xlu0 %3549
        %v3551 = vsel %vm1066, %v3532, 0.0
        %3552 = vadd.xlane.f32.xlu0 %v3551
        %v3553 = vpop.xlane.xlu0 %3552
        %v3554 = vsel %vm1066, %v3534, 0.0
        %3555 = vadd.xlane.f32.xlu0 %v3554
        %v3556 = vpop.xlane.xlu0 %3555
        %v3557 = vsel %vm1066, %v3536, 0.0
        %3558 = vadd.xlane.f32.xlu0 %v3557
        %v3559 = vpop.xlane.xlu0 %3558
        %v3560 = vsel %vm1066, %v3538, 0.0
        %3561 = vadd.xlane.f32.xlu0 %v3560
        %v3562 = vpop.xlane.xlu0 %3561
        %v3563 = vrcp.pop %v3541
        %v3564 = vrcp.pop %v3544
        %v3565 = vrcp.pop %v3547
        %v3566 = vrcp.pop %v3550
        %v3567 = vrcp.pop %v3553
        %v3568 = vrcp.pop %v3556
        %v3569 = vrcp.pop %v3559
        %v3570 = vrcp.pop %v3562
        %v3571 = vmul.f32 %v3524, %v3563
        %v3572 = vmul.f32 %v3526, %v3564
        %v3573 = vmul.f32 %v3528, %v3565
        %v3574 = vmul.f32 %v3530, %v3566
        %v3575 = vmul.f32 %v3532, %v3567
        %v3576 = vmul.f32 %v3534, %v3568
        %v3577 = vmul.f32 %v3536, %v3569
        %v3578 = vmul.f32 %v3538, %v3570
        %v3579 = vpack.c.bf16 %v3572, %v3571
        %v3580 = vpack.c.bf16 %v3574, %v3573
        %v3581 = vpack.c.bf16 %v3576, %v3575
        %v3582 = vpack.c.bf16 %v3578, %v3577
        %3583 = vrot.lane.b32.xlu0 %v968, 64
        %v3584 = vpop.permute.xlu0 %3583
        %3585 = vrot.lane.b32.xlu0 %v970, 64
        %v3586 = vpop.permute.xlu0 %3585
        %3587 = vrot.lane.b32.xlu0 %v972, 64
        %v3588 = vpop.permute.xlu0 %3587
        %3589 = vrot.lane.b32.xlu0 %v974, 64
        %v3590 = vpop.permute.xlu0 %3589
        %v3596 = vsel %vm1066, %v3579, 0
        %v3599 = vsel %vm1066, %v3580, 0
        %v3602 = vsel %vm1066, %v3581, 0
        %v3605 = vsel %vm1066, %v3582, 0
        %3607 = vmatprep.subr.bf16.mxu0 0
        %3608 = vmatpush1.bf16.msra.mxu0 %v3584
        %3609 = vmatprep.subr.bf16.mxu0 0
        %3610 = vmatpush1.bf16.msra.mxu0 %v3586
        %3611 = vmatprep.subr.bf16.mxu0 0
        %3612 = vmatpush1.bf16.msra.mxu0 %v3588
        %3613 = vmatprep.subr.bf16.mxu0 0
        %3614 = vmatpush1.bf16.msra.mxu0 %v3590
        %3615 = vmatprep.subr.bf16.mxu0 0
        %3616 = vmatpush1.bf16.msra.mxu0 0
        %3617 = vmatprep.subr.bf16.mxu0 0
        %3618 = vmatpush1.bf16.msra.mxu0 0
        %3619 = vmatprep.subr.bf16.mxu0 0
        %3620 = vmatpush1.bf16.msra.mxu0 0
        %3621 = vmatprep.subr.bf16.mxu0 0
        %3622 = vmatpush1.bf16.msra.mxu0 0
        %3623 = vmatprep.subr.bf16.mxu0 0
        %3624 = vmatpush1.bf16.msra.mxu0 0
        %3625 = vmatprep.subr.bf16.mxu0 0
        %3626 = vmatpush1.bf16.msra.mxu0 0
        %3627 = vmatprep.subr.bf16.mxu0 0
        %3628 = vmatpush1.bf16.msra.mxu0 0
        %3629 = vmatprep.subr.bf16.mxu0 0
        %3630 = vmatpush1.bf16.msra.mxu0 0
        %3631 = vmatprep.subr.bf16.mxu0 0
        %3632 = vmatpush1.bf16.msra.mxu0 0
        %3633 = vmatprep.subr.bf16.mxu0 0
        %3634 = vmatpush1.bf16.msra.mxu0 0
        %3635 = vmatprep.subr.bf16.mxu0 0
        %3636 = vmatpush1.bf16.msra.mxu0 0
        %3637 = vmatprep.subr.bf16.mxu0 0
        %3638 = vmatpush1.bf16.msra.mxu0 0
        %3639 = vmatprep.mubr.bf16.mxu0 0
        %3640 = vmatmul.mubr.bf16.gmra.mrb[0].mxu0 %v3596
        %v3641 = vpop.f32.mrb[0].mxu0
        %v3642 = vadd.f32 0.0, %v3641
        %v3643 = vpop.f32.mrb[0].mxu0
        %v3644 = vpop.f32.mrb[0].mxu0
        %v3645 = vadd.f32 0.0, %v3644
        %v3646 = vpop.f32.mrb[0].mxu0
        %3647 = vmatprep.mubr.bf16.mxu0 0
        %3648 = vmatmul.mubr.bf16.gmra.mrb[0].mxu0 %v3599
        %v3649 = vpop.f32.mrb[0].mxu0
        %v3650 = vadd.f32 0.0, %v3649
        %v3651 = vpop.f32.mrb[0].mxu0
        %v3652 = vpop.f32.mrb[0].mxu0
        %v3653 = vadd.f32 0.0, %v3652
        %v3654 = vpop.f32.mrb[0].mxu0
        %3655 = vmatprep.mubr.bf16.mxu0 0
        %3656 = vmatmul.mubr.bf16.gmra.mrb[0].mxu0 %v3602
        %v3657 = vpop.f32.mrb[0].mxu0
        %v3658 = vadd.f32 0.0, %v3657
        %v3659 = vpop.f32.mrb[0].mxu0
        %v3660 = vpop.f32.mrb[0].mxu0
        %v3661 = vadd.f32 0.0, %v3660
        %v3662 = vpop.f32.mrb[0].mxu0
        %3663 = vmatprep.mubr.bf16.mxu0 0
        %3664 = vmatmul.mubr.bf16.gmra.mrb[0].mxu0 %v3605
        %v3665 = vpop.f32.mrb[0].mxu0
        %v3666 = vadd.f32 0.0, %v3665
        %v3667 = vpop.f32.mrb[0].mxu0
        %v3668 = vpop.f32.mrb[0].mxu0
        %v3669 = vadd.f32 0.0, %v3668
        %v3670 = vpop.f32.mrb[0].mxu0
        %3671 = vdwg.mxu0
        %v3672 = vmax.f32 %v3642, 0.0
        %v3673 = vmax.f32 %v3645, 0.0
        %v3674 = vmax.f32 %v3650, 0.0
        %v3675 = vmax.f32 %v3653, 0.0
        %v3676 = vmax.f32 %v3658, 0.0
        %v3677 = vmax.f32 %v3661, 0.0
        %v3678 = vmax.f32 %v3666, 0.0
        %v3679 = vmax.f32 %v3669, 0.0
        %v3680 = vmin.f32 %v3672, 6.0
        %v3681 = vmin.f32 %v3673, 6.0
        %v3682 = vmin.f32 %v3674, 6.0
        %v3683 = vmin.f32 %v3675, 6.0
        %v3684 = vmin.f32 %v3676, 6.0
        %v3685 = vmin.f32 %v3677, 6.0
        %v3686 = vmin.f32 %v3678, 6.0
        %v3687 = vmin.f32 %v3679, 6.0
        %v3688 = vpack.c.bf16 %v3681, %v3680
        %v3689 = vpack.c.bf16 %v3683, %v3682
        %v3690 = vpack.c.bf16 %v3685, %v3684
        %v3691 = vpack.c.bf16 %v3687, %v3686
        %s3692 = scalar_lea.vmem %s7, 96
        %v3693 = vld [vmem:[%s3692] sm:$0xf]
        %v3694 = vld [vmem:[%s3692 + $0x4] sm:$0xf]
        %v3695 = vld [vmem:[%s3692 + $0x8] sm:$0xf]
        %v3696 = vld [vmem:[%s3692 + $0xc] sm:$0xf]
        %v3701 = vunpack.c.l.b16 %v3693
        %v3702 = vunpack.c.l.b16 %v3694
        %v3703 = vunpack.c.l.b16 %v3695
        %v3704 = vunpack.c.l.b16 %v3696
        %v3705 = vpack.c.b16 %v3702, %v3701
        %v3706 = vpack.c.b16 %v3704, %v3703
        %v3710 = vsel %vm1595, %v3688, 0
        %v3713 = vsel %vm1595, %v3689, 0
        %v3716 = vsel %vm1595, %v3690, 0
        %v3719 = vsel %vm1595, %v3691, 0
        %3721 = vmatprep.subr.bf16.mxu0 0
        %3722 = vmatpush1.bf16.msra.mxu0 %v3705
        %3723 = vmatprep.subr.bf16.mxu0 0
        %3724 = vmatpush1.bf16.msra.mxu0 %v3706
        %3725 = vmatprep.subr.bf16.mxu0 0
        %3726 = vmatpush1.bf16.msra.mxu0 0
        %3727 = vmatprep.subr.bf16.mxu0 0
        %3728 = vmatpush1.bf16.msra.mxu0 0
        %3729 = vmatprep.subr.bf16.mxu0 0
        %3730 = vmatpush1.bf16.msra.mxu0 0
        %3731 = vmatprep.subr.bf16.mxu0 0
        %3732 = vmatpush1.bf16.msra.mxu0 0
        %3733 = vmatprep.subr.bf16.mxu0 0
        %3734 = vmatpush1.bf16.msra.mxu0 0
        %3735 = vmatprep.subr.bf16.mxu0 0
        %3736 = vmatpush1.bf16.msra.mxu0 0
        %3737 = vmatprep.subr.bf16.mxu0 0
        %3738 = vmatpush1.bf16.msra.mxu0 0
        %3739 = vmatprep.subr.bf16.mxu0 0
        %3740 = vmatpush1.bf16.msra.mxu0 0
        %3741 = vmatprep.subr.bf16.mxu0 0
        %3742 = vmatpush1.bf16.msra.mxu0 0
        %3743 = vmatprep.subr.bf16.mxu0 0
        %3744 = vmatpush1.bf16.msra.mxu0 0
        %3745 = vmatprep.subr.bf16.mxu0 0
        %3746 = vmatpush1.bf16.msra.mxu0 0
        %3747 = vmatprep.subr.bf16.mxu0 0
        %3748 = vmatpush1.bf16.msra.mxu0 0
        %3749 = vmatprep.subr.bf16.mxu0 0
        %3750 = vmatpush1.bf16.msra.mxu0 0
        %3751 = vmatprep.subr.bf16.mxu0 0
        %3752 = vmatpush1.bf16.msra.mxu0 0
        %3753 = vmatprep.mubr.bf16.mxu0 0
        %3754 = vmatmul.mubr.bf16.gmra.mrb[0].mxu0 %v3710
        %v3755 = vpop.f32.mrb[0].mxu0
        %v3756 = vadd.f32 0.0, %v3755
        %v3757 = vpop.f32.mrb[0].mxu0
        %v3758 = vpop.f32.mrb[0].mxu0
        %v3759 = vadd.f32 0.0, %v3758
        %v3760 = vpop.f32.mrb[0].mxu0
        %3761 = vmatprep.mubr.bf16.mxu0 0
        %3762 = vmatmul.mubr.bf16.gmra.mrb[0].mxu0 %v3713
        %v3763 = vpop.f32.mrb[0].mxu0
        %v3764 = vadd.f32 0.0, %v3763
        %v3765 = vpop.f32.mrb[0].mxu0
        %v3766 = vpop.f32.mrb[0].mxu0
        %v3767 = vadd.f32 0.0, %v3766
        %v3768 = vpop.f32.mrb[0].mxu0
        %3769 = vmatprep.mubr.bf16.mxu0 0
        %3770 = vmatmul.mubr.bf16.gmra.mrb[0].mxu0 %v3716
        %v3771 = vpop.f32.mrb[0].mxu0
        %v3772 = vadd.f32 0.0, %v3771
        %v3773 = vpop.f32.mrb[0].mxu0
        %v3774 = vpop.f32.mrb[0].mxu0
        %v3775 = vadd.f32 0.0, %v3774
        %v3776 = vpop.f32.mrb[0].mxu0
        %3777 = vmatprep.mubr.bf16.mxu0 0
        %3778 = vmatmul.mubr.bf16.gmra.mrb[0].mxu0 %v3719
        %v3779 = vpop.f32.mrb[0].mxu0
        %v3780 = vadd.f32 0.0, %v3779
        %v3781 = vpop.f32.mrb[0].mxu0
        %v3782 = vpop.f32.mrb[0].mxu0
        %v3783 = vadd.f32 0.0, %v3782
        %v3784 = vpop.f32.mrb[0].mxu0
        %3785 = vdwg.mxu0
        %v3786 = vadd.f32 %v3378, %v3756
        %v3787 = vadd.f32 %v3379, %v3759
        %v3788 = vadd.f32 %v3380, %v3764
        %v3789 = vadd.f32 %v3381, %v3767
        %v3790 = vadd.f32 %v3382, %v3772
        %v3791 = vadd.f32 %v3383, %v3775
        %v3792 = vadd.f32 %v3384, %v3780
        %v3793 = vadd.f32 %v3385, %v3783
        %3794 = vrot.lane.b32.xlu0 %v959, 16
        %v3795 = vpop.permute.xlu0 %3794
        %3796 = vrot.lane.b32.xlu0 %v960, 16
        %v3797 = vpop.permute.xlu0 %3796
        %3798 = vrot.lane.b32.xlu0 %v961, 16
        %v3799 = vpop.permute.xlu0 %3798
        %3800 = vrot.lane.b32.xlu0 %v962, 16
        %v3801 = vpop.permute.xlu0 %3800
        %3802 = vrot.lane.b32.xlu0 %v963, 16
        %v3803 = vpop.permute.xlu0 %3802
        %3804 = vrot.lane.b32.xlu0 %v964, 16
        %v3805 = vpop.permute.xlu0 %3804
        %3806 = vrot.lane.b32.xlu0 %v965, 16
        %v3807 = vpop.permute.xlu0 %3806
        %3808 = vrot.lane.b32.xlu0 %v966, 16
        %v3809 = vpop.permute.xlu0 %3808
        %v3811 = vsel %vm976, %v3795, 0
        %v3814 = vsel %vm976, %v3797, 0
        %v3817 = vsel %vm976, %v3799, 0
        %v3820 = vsel %vm976, %v3801, 0
        %v3823 = vsel %vm976, %v3803, 0
        %v3826 = vsel %vm976, %v3805, 0
        %v3829 = vsel %vm976, %v3807, 0
        %v3832 = vsel %vm976, %v3809, 0
        %3834 = vmatprep.subr.bf16.mxu0 0
        %3835 = vmatpush1.bf16.xpose.msra.mxu0 %v3823
        %3836 = vmatprep.subr.bf16.mxu0 0
        %3837 = vmatpush1.bf16.xpose.msra.mxu0 %v3826
        %3838 = vmatprep.subr.bf16.mxu0 0
        %3839 = vmatpush1.bf16.xpose.msra.mxu0 %v3829
        %3840 = vmatprep.subr.bf16.mxu0 0
        %3841 = vmatpush1.bf16.xpose.msra.mxu0 %v3832
        %3842 = vmatprep.subr.bf16.mxu0 0
        %3843 = vmatpush1.bf16.xpose.msra.mxu0 0
        %3844 = vmatprep.subr.bf16.mxu0 0
        %3845 = vmatpush1.bf16.xpose.msra.mxu0 0
        %3846 = vmatprep.subr.bf16.mxu0 0
        %3847 = vmatpush1.bf16.xpose.msra.mxu0 0
        %3848 = vmatprep.subr.bf16.mxu0 0
        %3849 = vmatpush1.bf16.xpose.msra.mxu0 0
        %3850 = vmatprep.subr.bf16.mxu0 0
        %3851 = vmatpush1.bf16.xpose.msra.mxu0 0
        %3852 = vmatprep.subr.bf16.mxu0 0
        %3853 = vmatpush1.bf16.xpose.msra.mxu0 0
        %3854 = vmatprep.subr.bf16.mxu0 0
        %3855 = vmatpush1.bf16.xpose.msra.mxu0 0
        %3856 = vmatprep.subr.bf16.mxu0 0
        %3857 = vmatpush1.bf16.xpose.msra.mxu0 0
        %3858 = vmatprep.subr.bf16.mxu0 0
        %3859 = vmatpush1.bf16.xpose.msra.mxu0 0
        %3860 = vmatprep.subr.bf16.mxu0 0
        %3861 = vmatpush1.bf16.xpose.msra.mxu0 0
        %3862 = vmatprep.subr.bf16.mxu0 0
        %3863 = vmatpush1.bf16.xpose.msra.mxu0 0
        %3864 = vmatprep.subr.bf16.mxu0 0
        %3865 = vmatpush1.bf16.xpose.msra.mxu0 0
        %3866 = vmatprep.mubr.bf16.mxu0 0
        %3867 = vmatmul.mubr.bf16.gmra.mrb[0].mxu0 %v3811
        %v3868 = vpop.f32.mrb[0].mxu0
        %v3869 = vadd.f32 0.0, %v3868
        %v3870 = vpop.f32.mrb[0].mxu0
        %v3871 = vpop.f32.mrb[0].mxu0
        %v3872 = vadd.f32 0.0, %v3871
        %v3873 = vpop.f32.mrb[0].mxu0
        %3874 = vmatprep.mubr.bf16.mxu0 0
        %3875 = vmatmul.mubr.bf16.gmra.mrb[0].mxu0 %v3814
        %v3876 = vpop.f32.mrb[0].mxu0
        %v3877 = vadd.f32 0.0, %v3876
        %v3878 = vpop.f32.mrb[0].mxu0
        %v3879 = vpop.f32.mrb[0].mxu0
        %v3880 = vadd.f32 0.0, %v3879
        %v3881 = vpop.f32.mrb[0].mxu0
        %3882 = vmatprep.mubr.bf16.mxu0 0
        %3883 = vmatmul.mubr.bf16.gmra.mrb[0].mxu0 %v3817
        %v3884 = vpop.f32.mrb[0].mxu0
        %v3885 = vadd.f32 0.0, %v3884
        %v3886 = vpop.f32.mrb[0].mxu0
        %v3887 = vpop.f32.mrb[0].mxu0
        %v3888 = vadd.f32 0.0, %v3887
        %v3889 = vpop.f32.mrb[0].mxu0
        %3890 = vmatprep.mubr.bf16.mxu0 0
        %3891 = vmatmul.mubr.bf16.gmra.mrb[0].mxu0 %v3820
        %v3892 = vpop.f32.mrb[0].mxu0
        %v3893 = vadd.f32 0.0, %v3892
        %v3894 = vpop.f32.mrb[0].mxu0
        %v3895 = vpop.f32.mrb[0].mxu0
        %v3896 = vadd.f32 0.0, %v3895
        %v3897 = vpop.f32.mrb[0].mxu0
        %3898 = vdwg.mxu0
        %v3899 = vsel %vm1066, %v3869, -inf
        %3900 = vmax.xlane.f32.xlu0 %v3899
        %v3901 = vpop.xlane.xlu0 %3900
        %v3902 = vsel %vm1066, %v3872, -inf
        %3903 = vmax.xlane.f32.xlu0 %v3902
        %v3904 = vpop.xlane.xlu0 %3903
        %v3905 = vsel %vm1066, %v3877, -inf
        %3906 = vmax.xlane.f32.xlu0 %v3905
        %v3907 = vpop.xlane.xlu0 %3906
        %v3908 = vsel %vm1066, %v3880, -inf
        %3909 = vmax.xlane.f32.xlu0 %v3908
        %v3910 = vpop.xlane.xlu0 %3909
        %v3911 = vsel %vm1066, %v3885, -inf
        %3912 = vmax.xlane.f32.xlu0 %v3911
        %v3913 = vpop.xlane.xlu0 %3912
        %v3914 = vsel %vm1066, %v3888, -inf
        %3915 = vmax.xlane.f32.xlu0 %v3914
        %v3916 = vpop.xlane.xlu0 %3915
        %v3917 = vsel %vm1066, %v3893, -inf
        %3918 = vmax.xlane.f32.xlu0 %v3917
        %v3919 = vpop.xlane.xlu0 %3918
        %v3920 = vsel %vm1066, %v3896, -inf
        %3921 = vmax.xlane.f32.xlu0 %v3920
        %v3922 = vpop.xlane.xlu0 %3921
        %v3923 = vsub.f32 %v3869, %v3901
        %v3924 = vsub.f32 %v3872, %v3904
        %v3925 = vsub.f32 %v3877, %v3907
        %v3926 = vsub.f32 %v3880, %v3910
        %v3927 = vsub.f32 %v3885, %v3913
        %v3928 = vsub.f32 %v3888, %v3916
        %v3929 = vsub.f32 %v3893, %v3919
        %v3930 = vsub.f32 %v3896, %v3922
        %v3931 = vmul.f32 %v3923, 1.442695
        %v3932 = vpow.pop %v3931
        %v3933 = vmul.f32 %v3924, 1.442695
        %v3934 = vpow.pop %v3933
        %v3935 = vmul.f32 %v3925, 1.442695
        %v3936 = vpow.pop %v3935
        %v3937 = vmul.f32 %v3926, 1.442695
        %v3938 = vpow.pop %v3937
        %v3939 = vmul.f32 %v3927, 1.442695
        %v3940 = vpow.pop %v3939
        %v3941 = vmul.f32 %v3928, 1.442695
        %v3942 = vpow.pop %v3941
        %v3943 = vmul.f32 %v3929, 1.442695
        %v3944 = vpow.pop %v3943
        %v3945 = vmul.f32 %v3930, 1.442695
        %v3946 = vpow.pop %v3945
        %v3947 = vsel %vm1066, %v3932, 0.0
        %3948 = vadd.xlane.f32.xlu0 %v3947
        %v3949 = vpop.xlane.xlu0 %3948
        %v3950 = vsel %vm1066, %v3934, 0.0
        %3951 = vadd.xlane.f32.xlu0 %v3950
        %v3952 = vpop.xlane.xlu0 %3951
        %v3953 = vsel %vm1066, %v3936, 0.0
        %3954 = vadd.xlane.f32.xlu0 %v3953
        %v3955 = vpop.xlane.xlu0 %3954
        %v3956 = vsel %vm1066, %v3938, 0.0
        %3957 = vadd.xlane.f32.xlu0 %v3956
        %v3958 = vpop.xlane.xlu0 %3957
        %v3959 = vsel %vm1066, %v3940, 0.0
        %3960 = vadd.xlane.f32.xlu0 %v3959
        %v3961 = vpop.xlane.xlu0 %3960
        %v3962 = vsel %vm1066, %v3942, 0.0
        %3963 = vadd.xlane.f32.xlu0 %v3962
        %v3964 = vpop.xlane.xlu0 %3963
        %v3965 = vsel %vm1066, %v3944, 0.0
        %3966 = vadd.xlane.f32.xlu0 %v3965
        %v3967 = vpop.xlane.xlu0 %3966
        %v3968 = vsel %vm1066, %v3946, 0.0
        %3969 = vadd.xlane.f32.xlu0 %v3968
        %v3970 = vpop.xlane.xlu0 %3969
        %v3971 = vrcp.pop %v3949
        %v3972 = vrcp.pop %v3952
        %v3973 = vrcp.pop %v3955
        %v3974 = vrcp.pop %v3958
        %v3975 = vrcp.pop %v3961
        %v3976 = vrcp.pop %v3964
        %v3977 = vrcp.pop %v3967
        %v3978 = vrcp.pop %v3970
        %v3979 = vmul.f32 %v3932, %v3971
        %v3980 = vmul.f32 %v3934, %v3972
        %v3981 = vmul.f32 %v3936, %v3973
        %v3982 = vmul.f32 %v3938, %v3974
        %v3983 = vmul.f32 %v3940, %v3975
        %v3984 = vmul.f32 %v3942, %v3976
        %v3985 = vmul.f32 %v3944, %v3977
        %v3986 = vmul.f32 %v3946, %v3978
        %v3987 = vpack.c.bf16 %v3980, %v3979
        %v3988 = vpack.c.bf16 %v3982, %v3981
        %v3989 = vpack.c.bf16 %v3984, %v3983
        %v3990 = vpack.c.bf16 %v3986, %v3985
        %3991 = vrot.lane.b32.xlu0 %v968, 32
        %v3992 = vpop.permute.xlu0 %3991
        %3993 = vrot.lane.b32.xlu0 %v970, 32
        %v3994 = vpop.permute.xlu0 %3993
        %3995 = vrot.lane.b32.xlu0 %v972, 32
        %v3996 = vpop.permute.xlu0 %3995
        %3997 = vrot.lane.b32.xlu0 %v974, 32
        %v3998 = vpop.permute.xlu0 %3997
        %v4004 = vsel %vm1066, %v3987, 0
        %v4007 = vsel %vm1066, %v3988, 0
        %v4010 = vsel %vm1066, %v3989, 0
        %v4013 = vsel %vm1066, %v3990, 0
        %4015 = vmatprep.subr.bf16.mxu0 0
        %4016 = vmatpush1.bf16.msra.mxu0 %v3992
        %4017 = vmatprep.subr.bf16.mxu0 0
        %4018 = vmatpush1.bf16.msra.mxu0 %v3994
        %4019 = vmatprep.subr.bf16.mxu0 0
        %4020 = vmatpush1.bf16.msra.mxu0 %v3996
        %4021 = vmatprep.subr.bf16.mxu0 0
        %4022 = vmatpush1.bf16.msra.mxu0 %v3998
        %4023 = vmatprep.subr.bf16.mxu0 0
        %4024 = vmatpush1.bf16.msra.mxu0 0
        %4025 = vmatprep.subr.bf16.mxu0 0
        %4026 = vmatpush1.bf16.msra.mxu0 0
        %4027 = vmatprep.subr.bf16.mxu0 0
        %4028 = vmatpush1.bf16.msra.mxu0 0
        %4029 = vmatprep.subr.bf16.mxu0 0
        %4030 = vmatpush1.bf16.msra.mxu0 0
        %4031 = vmatprep.subr.bf16.mxu0 0
        %4032 = vmatpush1.bf16.msra.mxu0 0
        %4033 = vmatprep.subr.bf16.mxu0 0
        %4034 = vmatpush1.bf16.msra.mxu0 0
        %4035 = vmatprep.subr.bf16.mxu0 0
        %4036 = vmatpush1.bf16.msra.mxu0 0
        %4037 = vmatprep.subr.bf16.mxu0 0
        %4038 = vmatpush1.bf16.msra.mxu0 0
        %4039 = vmatprep.subr.bf16.mxu0 0
        %4040 = vmatpush1.bf16.msra.mxu0 0
        %4041 = vmatprep.subr.bf16.mxu0 0
        %4042 = vmatpush1.bf16.msra.mxu0 0
        %4043 = vmatprep.subr.bf16.mxu0 0
        %4044 = vmatpush1.bf16.msra.mxu0 0
        %4045 = vmatprep.subr.bf16.mxu0 0
        %4046 = vmatpush1.bf16.msra.mxu0 0
        %4047 = vmatprep.mubr.bf16.mxu0 0
        %4048 = vmatmul.mubr.bf16.gmra.mrb[0].mxu0 %v4004
        %v4049 = vpop.f32.mrb[0].mxu0
        %v4050 = vadd.f32 0.0, %v4049
        %v4051 = vpop.f32.mrb[0].mxu0
        %v4052 = vpop.f32.mrb[0].mxu0
        %v4053 = vadd.f32 0.0, %v4052
        %v4054 = vpop.f32.mrb[0].mxu0
        %4055 = vmatprep.mubr.bf16.mxu0 0
        %4056 = vmatmul.mubr.bf16.gmra.mrb[0].mxu0 %v4007
        %v4057 = vpop.f32.mrb[0].mxu0
        %v4058 = vadd.f32 0.0, %v4057
        %v4059 = vpop.f32.mrb[0].mxu0
        %v4060 = vpop.f32.mrb[0].mxu0
        %v4061 = vadd.f32 0.0, %v4060
        %v4062 = vpop.f32.mrb[0].mxu0
        %4063 = vmatprep.mubr.bf16.mxu0 0
        %4064 = vmatmul.mubr.bf16.gmra.mrb[0].mxu0 %v4010
        %v4065 = vpop.f32.mrb[0].mxu0
        %v4066 = vadd.f32 0.0, %v4065
        %v4067 = vpop.f32.mrb[0].mxu0
        %v4068 = vpop.f32.mrb[0].mxu0
        %v4069 = vadd.f32 0.0, %v4068
        %v4070 = vpop.f32.mrb[0].mxu0
        %4071 = vmatprep.mubr.bf16.mxu0 0
        %4072 = vmatmul.mubr.bf16.gmra.mrb[0].mxu0 %v4013
        %v4073 = vpop.f32.mrb[0].mxu0
        %v4074 = vadd.f32 0.0, %v4073
        %v4075 = vpop.f32.mrb[0].mxu0
        %v4076 = vpop.f32.mrb[0].mxu0
        %v4077 = vadd.f32 0.0, %v4076
        %v4078 = vpop.f32.mrb[0].mxu0
        %4079 = vdwg.mxu0
        %v4080 = vmax.f32 %v4050, 0.0
        %v4081 = vmax.f32 %v4053, 0.0
        %v4082 = vmax.f32 %v4058, 0.0
        %v4083 = vmax.f32 %v4061, 0.0
        %v4084 = vmax.f32 %v4066, 0.0
        %v4085 = vmax.f32 %v4069, 0.0
        %v4086 = vmax.f32 %v4074, 0.0
        %v4087 = vmax.f32 %v4077, 0.0
        %v4088 = vmin.f32 %v4080, 6.0
        %v4089 = vmin.f32 %v4081, 6.0
        %v4090 = vmin.f32 %v4082, 6.0
        %v4091 = vmin.f32 %v4083, 6.0
        %v4092 = vmin.f32 %v4084, 6.0
        %v4093 = vmin.f32 %v4085, 6.0
        %v4094 = vmin.f32 %v4086, 6.0
        %v4095 = vmin.f32 %v4087, 6.0
        %v4096 = vpack.c.bf16 %v4089, %v4088
        %v4097 = vpack.c.bf16 %v4091, %v4090
        %v4098 = vpack.c.bf16 %v4093, %v4092
        %v4099 = vpack.c.bf16 %v4095, %v4094
        %s4100 = scalar_lea.vmem %s7, 112
        %v4101 = vld [vmem:[%s4100] sm:$0xf]
        %v4102 = vld [vmem:[%s4100 + $0x4] sm:$0xf]
        %v4103 = vld [vmem:[%s4100 + $0x8] sm:$0xf]
        %v4104 = vld [vmem:[%s4100 + $0xc] sm:$0xf]
        %v4109 = vunpack.c.l.b16 %v4101
        %v4110 = vunpack.c.l.b16 %v4102
        %v4111 = vunpack.c.l.b16 %v4103
        %v4112 = vunpack.c.l.b16 %v4104
        %v4113 = vpack.c.b16 %v4110, %v4109
        %v4114 = vpack.c.b16 %v4112, %v4111
        %v4118 = vsel %vm1595, %v4096, 0
        %v4121 = vsel %vm1595, %v4097, 0
        %v4124 = vsel %vm1595, %v4098, 0
        %v4127 = vsel %vm1595, %v4099, 0
        %4129 = vmatprep.subr.bf16.mxu0 0
        %4130 = vmatpush1.bf16.msra.mxu0 %v4113
        %4131 = vmatprep.subr.bf16.mxu0 0
        %4132 = vmatpush1.bf16.msra.mxu0 %v4114
        %4133 = vmatprep.subr.bf16.mxu0 0
        %4134 = vmatpush1.bf16.msra.mxu0 0
        %4135 = vmatprep.subr.bf16.mxu0 0
        %4136 = vmatpush1.bf16.msra.mxu0 0
        %4137 = vmatprep.subr.bf16.mxu0 0
        %4138 = vmatpush1.bf16.msra.mxu0 0
        %4139 = vmatprep.subr.bf16.mxu0 0
        %4140 = vmatpush1.bf16.msra.mxu0 0
        %4141 = vmatprep.subr.bf16.mxu0 0
        %4142 = vmatpush1.bf16.msra.mxu0 0
        %4143 = vmatprep.subr.bf16.mxu0 0
        %4144 = vmatpush1.bf16.msra.mxu0 0
        %4145 = vmatprep.subr.bf16.mxu0 0
        %4146 = vmatpush1.bf16.msra.mxu0 0
        %4147 = vmatprep.subr.bf16.mxu0 0
        %4148 = vmatpush1.bf16.msra.mxu0 0
        %4149 = vmatprep.subr.bf16.mxu0 0
        %4150 = vmatpush1.bf16.msra.mxu0 0
        %4151 = vmatprep.subr.bf16.mxu0 0
        %4152 = vmatpush1.bf16.msra.mxu0 0
        %4153 = vmatprep.subr.bf16.mxu0 0
        %4154 = vmatpush1.bf16.msra.mxu0 0
        %4155 = vmatprep.subr.bf16.mxu0 0
        %4156 = vmatpush1.bf16.msra.mxu0 0
        %4157 = vmatprep.subr.bf16.mxu0 0
        %4158 = vmatpush1.bf16.msra.mxu0 0
        %4159 = vmatprep.subr.bf16.mxu0 0
        %4160 = vmatpush1.bf16.msra.mxu0 0
        %4161 = vmatprep.mubr.bf16.mxu0 0
        %4162 = vmatmul.mubr.bf16.gmra.mrb[0].mxu0 %v4118
        %v4163 = vpop.f32.mrb[0].mxu0
        %v4164 = vadd.f32 0.0, %v4163
        %v4165 = vpop.f32.mrb[0].mxu0
        %v4166 = vpop.f32.mrb[0].mxu0
        %v4167 = vadd.f32 0.0, %v4166
        %v4168 = vpop.f32.mrb[0].mxu0
        %4169 = vmatprep.mubr.bf16.mxu0 0
        %4170 = vmatmul.mubr.bf16.gmra.mrb[0].mxu0 %v4121
        %v4171 = vpop.f32.mrb[0].mxu0
        %v4172 = vadd.f32 0.0, %v4171
        %v4173 = vpop.f32.mrb[0].mxu0
        %v4174 = vpop.f32.mrb[0].mxu0
        %v4175 = vadd.f32 0.0, %v4174
        %v4176 = vpop.f32.mrb[0].mxu0
        %4177 = vmatprep.mubr.bf16.mxu0 0
        %4178 = vmatmul.mubr.bf16.gmra.mrb[0].mxu0 %v4124
        %v4179 = vpop.f32.mrb[0].mxu0
        %v4180 = vadd.f32 0.0, %v4179
        %v4181 = vpop.f32.mrb[0].mxu0
        %v4182 = vpop.f32.mrb[0].mxu0
        %v4183 = vadd.f32 0.0, %v4182
        %v4184 = vpop.f32.mrb[0].mxu0
        %4185 = vmatprep.mubr.bf16.mxu0 0
        %4186 = vmatmul.mubr.bf16.gmra.mrb[0].mxu0 %v4127
        %v4187 = vpop.f32.mrb[0].mxu0
        %v4188 = vadd.f32 0.0, %v4187
        %v4189 = vpop.f32.mrb[0].mxu0
        %v4190 = vpop.f32.mrb[0].mxu0
        %v4191 = vadd.f32 0.0, %v4190
        %v4192 = vpop.f32.mrb[0].mxu0
        %4193 = vdwg.mxu0
        %v4194 = vadd.f32 %v3786, %v4164
        %v4195 = vadd.f32 %v3787, %v4167
        %v4196 = vadd.f32 %v3788, %v4172
        %v4197 = vadd.f32 %v3789, %v4175
        %v4198 = vadd.f32 %v3790, %v4180
        %v4199 = vadd.f32 %v3791, %v4183
        %v4200 = vadd.f32 %v3792, %v4188
        %v4201 = vadd.f32 %v3793, %v4191
        %v4203 = vlaneseq
        %v4204 = vshrl.u32 %v4203, 7
        %v4205 = vsub.s32 0, %v4204
        %v4206 = vrot.slane %v975, %v4205
        %v4208 = vadd.f32 %v4194, %v4206
        %v4209 = vadd.f32 %v4195, %v4206
        %v4210 = vadd.f32 %v4196, %v4206
        %v4211 = vadd.f32 %v4197, %v4206
        %v4212 = vadd.f32 %v4198, %v4206
        %v4213 = vadd.f32 %v4199, %v4206
        %v4214 = vadd.f32 %v4200, %v4206
        %v4215 = vadd.f32 %v4201, %v4206
        %v4216 = vadd.f32 %v494, %v4208
        %v4217 = vadd.f32 %v495, %v4209
        %v4218 = vadd.f32 %v496, %v4210
        %v4219 = vadd.f32 %v497, %v4211
        %v4220 = vadd.f32 %v498, %v4212
        %v4221 = vadd.f32 %v499, %v4213
        %v4222 = vadd.f32 %v500, %v4214
        %v4223 = vadd.f32 %v501, %v4215
        %v4224 = vpack.c.bf16 %v4217, %v4216
        %v4225 = vpack.c.bf16 %v4219, %v4218
        %v4226 = vpack.c.bf16 %v4221, %v4220
        %v4227 = vpack.c.bf16 %v4223, %v4222
        %v4228 = vld [vmem:[%s9] sm:$0xff]
        %v4229 = vld [vmem:[%s9 + $0x8] sm:$0xff]
        %v4230 = vld [vmem:[%s9 + $0x10] sm:$0xff]
        %v4231 = vld [vmem:[%s9 + $0x18] sm:$0xff]
        %v4232 = vld [vmem:[%s9 + $0x20] sm:$0xff]
        %v4233 = vld [vmem:[%s9 + $0x28] sm:$0xff]
        %v4234 = vld [vmem:[%s9 + $0x30] sm:$0xff]
        %v4235 = vld [vmem:[%s9 + $0x38] sm:$0xff]
        %v4236 = vld [vmem:[%s9 + $0x40] sm:$0xff]
        %v4237 = vld [vmem:[%s9 + $0x48] sm:$0xff]
        %v4238 = vld [vmem:[%s9 + $0x50] sm:$0xff]
        %v4239 = vld [vmem:[%s9 + $0x58] sm:$0xff]
        %v4240 = vld [vmem:[%s9 + $0x60] sm:$0xff]
        %v4241 = vld [vmem:[%s9 + $0x68] sm:$0xff]
        %v4242 = vld [vmem:[%s9 + $0x70] sm:$0xff]
        %v4243 = vld [vmem:[%s9 + $0x78] sm:$0xff]
        %v4244 = vld [vmem:[%s10] sm:$0x3]
        %v4246 = vlaneseq
        %v4247 = vshrl.u32 %v4246, 7
        %v4248 = vsub.s32 0, %v4247
        %v4249 = vrot.slane %v4244, %v4248
        %v4250 = vlaneseq
        %v4251 = vshrl.u32 %v4250, 7
        %v4252 = vsub.s32 1, %v4251
        %v4253 = vrot.slane %v4244, %v4252
        %v4272 = vunpack.c.l.b16 %v4228
        %v4273 = vunpack.c.h.b16 %v4228
        %v4274 = vunpack.c.l.b16 %v4229
        %v4275 = vunpack.c.h.b16 %v4229
        %v4276 = vunpack.c.l.b16 %v4230
        %v4277 = vunpack.c.h.b16 %v4230
        %v4278 = vunpack.c.l.b16 %v4231
        %v4279 = vunpack.c.h.b16 %v4231
        %v4280 = vunpack.c.l.b16 %v4232
        %v4281 = vunpack.c.h.b16 %v4232
        %v4282 = vunpack.c.l.b16 %v4233
        %v4283 = vunpack.c.h.b16 %v4233
        %v4284 = vunpack.c.l.b16 %v4234
        %v4285 = vunpack.c.h.b16 %v4234
        %v4286 = vunpack.c.l.b16 %v4235
        %v4287 = vunpack.c.h.b16 %v4235
        %v4288 = vunpack.c.l.b16 %v4236
        %v4289 = vunpack.c.h.b16 %v4236
        %v4290 = vunpack.c.l.b16 %v4237
        %v4291 = vunpack.c.h.b16 %v4237
        %v4292 = vunpack.c.l.b16 %v4238
        %v4293 = vunpack.c.h.b16 %v4238
        %v4294 = vunpack.c.l.b16 %v4239
        %v4295 = vunpack.c.h.b16 %v4239
        %v4296 = vunpack.c.l.b16 %v4240
        %v4297 = vunpack.c.h.b16 %v4240
        %v4298 = vunpack.c.l.b16 %v4241
        %v4299 = vunpack.c.h.b16 %v4241
        %v4300 = vunpack.c.l.b16 %v4242
        %v4301 = vunpack.c.h.b16 %v4242
        %v4302 = vunpack.c.l.b16 %v4243
        %v4303 = vunpack.c.h.b16 %v4243
        %v4304 = vpack.c.b16 %v4274, %v4272
        %v4305 = vpack.c.b16 %v4275, %v4273
        %v4306 = vpack.c.b16 %v4278, %v4276
        %v4307 = vpack.c.b16 %v4279, %v4277
        %v4308 = vpack.c.b16 %v4282, %v4280
        %v4309 = vpack.c.b16 %v4283, %v4281
        %v4310 = vpack.c.b16 %v4286, %v4284
        %v4311 = vpack.c.b16 %v4287, %v4285
        %v4312 = vpack.c.b16 %v4290, %v4288
        %v4313 = vpack.c.b16 %v4291, %v4289
        %v4314 = vpack.c.b16 %v4294, %v4292
        %v4315 = vpack.c.b16 %v4295, %v4293
        %v4316 = vpack.c.b16 %v4298, %v4296
        %v4317 = vpack.c.b16 %v4299, %v4297
        %v4318 = vpack.c.b16 %v4302, %v4300
        %v4319 = vpack.c.b16 %v4303, %v4301
        %4336 = vmatprep.subr.bf16.mxu0 %v4305
        %4337 = vmatpush1.bf16.msra.mxu0 %v4304
        %4338 = vmatprep.subr.bf16.mxu0 %v4307
        %4339 = vmatpush1.bf16.msra.mxu0 %v4306
        %4340 = vmatprep.subr.bf16.mxu0 %v4309
        %4341 = vmatpush1.bf16.msra.mxu0 %v4308
        %4342 = vmatprep.subr.bf16.mxu0 %v4311
        %4343 = vmatpush1.bf16.msra.mxu0 %v4310
        %4344 = vmatprep.subr.bf16.mxu0 %v4313
        %4345 = vmatpush1.bf16.msra.mxu0 %v4312
        %4346 = vmatprep.subr.bf16.mxu0 %v4315
        %4347 = vmatpush1.bf16.msra.mxu0 %v4314
        %4348 = vmatprep.subr.bf16.mxu0 %v4317
        %4349 = vmatpush1.bf16.msra.mxu0 %v4316
        %4350 = vmatprep.subr.bf16.mxu0 %v4319
        %4351 = vmatpush1.bf16.msra.mxu0 %v4318
        %4352 = vmatprep.subr.bf16.mxu0 0
        %4353 = vmatpush1.bf16.msra.mxu0 0
        %4354 = vmatprep.subr.bf16.mxu0 0
        %4355 = vmatpush1.bf16.msra.mxu0 0
        %4356 = vmatprep.subr.bf16.mxu0 0
        %4357 = vmatpush1.bf16.msra.mxu0 0
        %4358 = vmatprep.subr.bf16.mxu0 0
        %4359 = vmatpush1.bf16.msra.mxu0 0
        %4360 = vmatprep.subr.bf16.mxu0 0
        %4361 = vmatpush1.bf16.msra.mxu0 0
        %4362 = vmatprep.subr.bf16.mxu0 0
        %4363 = vmatpush1.bf16.msra.mxu0 0
        %4364 = vmatprep.subr.bf16.mxu0 0
        %4365 = vmatpush1.bf16.msra.mxu0 0
        %4366 = vmatprep.subr.bf16.mxu0 0
        %4367 = vmatpush1.bf16.msra.mxu0 0
        %4368 = vmatprep.mubr.bf16.mxu0 0
        %4369 = vmatmul.mubr.bf16.gmra.mrb[0].mxu0 %v4224
        %v4370 = vpop.f32.mrb[0].mxu0
        %v4371 = vadd.f32 %v4249, %v4370
        %v4372 = vpop.f32.mrb[0].mxu0
        %v4373 = vadd.f32 %v4253, %v4372
        %v4374 = vpop.f32.mrb[0].mxu0
        %v4375 = vadd.f32 %v4249, %v4374
        %v4376 = vpop.f32.mrb[0].mxu0
        %v4377 = vadd.f32 %v4253, %v4376
        %4378 = vmatprep.mubr.bf16.mxu0 0
        %4379 = vmatmul.mubr.bf16.gmra.mrb[0].mxu0 %v4225
        %v4380 = vpop.f32.mrb[0].mxu0
        %v4381 = vadd.f32 %v4249, %v4380
        %v4382 = vpop.f32.mrb[0].mxu0
        %v4383 = vadd.f32 %v4253, %v4382
        %v4384 = vpop.f32.mrb[0].mxu0
        %v4385 = vadd.f32 %v4249, %v4384
        %v4386 = vpop.f32.mrb[0].mxu0
        %v4387 = vadd.f32 %v4253, %v4386
        %4388 = vmatprep.mubr.bf16.mxu0 0
        %4389 = vmatmul.mubr.bf16.gmra.mrb[0].mxu0 %v4226
        %v4390 = vpop.f32.mrb[0].mxu0
        %v4391 = vadd.f32 %v4249, %v4390
        %v4392 = vpop.f32.mrb[0].mxu0
        %v4393 = vadd.f32 %v4253, %v4392
        %v4394 = vpop.f32.mrb[0].mxu0
        %v4395 = vadd.f32 %v4249, %v4394
        %v4396 = vpop.f32.mrb[0].mxu0
        %v4397 = vadd.f32 %v4253, %v4396
        %4398 = vmatprep.mubr.bf16.mxu0 0
        %4399 = vmatmul.mubr.bf16.gmra.mrb[0].mxu0 %v4227
        %v4400 = vpop.f32.mrb[0].mxu0
        %v4401 = vadd.f32 %v4249, %v4400
        %v4402 = vpop.f32.mrb[0].mxu0
        %v4403 = vadd.f32 %v4253, %v4402
        %v4404 = vpop.f32.mrb[0].mxu0
        %v4405 = vadd.f32 %v4249, %v4404
        %v4406 = vpop.f32.mrb[0].mxu0
        %v4407 = vadd.f32 %v4253, %v4406
        %4408 = vdwg.mxu0
        %v4409 = vld [vmem:[%s11] sm:$0xff]
        %v4410 = vld [vmem:[%s11 + $0x8] sm:$0xff]
        %v4411 = vld [vmem:[%s11 + $0x10] sm:$0x1]
        %v4412 = vld [vmem:[%s11 + $0x18] sm:$0x1]
        %v4413 = vld [vmem:[%s12] sm:$0x3]
        %v4422 = vrot.slane %v4371, 7
        %v4423 = vrot.slane %v4375, 7
        %v4424 = vrot.slane %v4381, 7
        %v4425 = vrot.slane %v4385, 7
        %v4426 = vrot.slane %v4391, 7
        %v4427 = vrot.slane %v4395, 7
        %v4428 = vrot.slane %v4401, 7
        %v4429 = vrot.slane %v4405, 7
        %vm4438 = vcmask 1040384
        %v4439 = vsel %vm4438, 0.0, %v4422
        %v4440 = vsel %vm4438, 0.0, %v4423
        %v4441 = vsel %vm4438, 0.0, %v4424
        %v4442 = vsel %vm4438, 0.0, %v4425
        %v4443 = vsel %vm4438, 0.0, %v4426
        %v4444 = vsel %vm4438, 0.0, %v4427
        %v4445 = vsel %vm4438, 0.0, %v4428
        %v4446 = vsel %vm4438, 0.0, %v4429
        %v4447 = vrot.slane %v4371, 1
        %v4448 = vrot.slane %v4375, 1
        %v4449 = vrot.slane %v4381, 1
        %v4450 = vrot.slane %v4385, 1
        %v4451 = vrot.slane %v4391, 1
        %v4452 = vrot.slane %v4395, 1
        %v4453 = vrot.slane %v4401, 1
        %v4454 = vrot.slane %v4405, 1
        %vm4463 = vcmask 1046528
        %v4464 = vsel %vm4463, %v4447, 0.0
        %v4465 = vsel %vm4463, %v4448, 0.0
        %v4466 = vsel %vm4463, %v4449, 0.0
        %v4467 = vsel %vm4463, %v4450, 0.0
        %v4468 = vsel %vm4463, %v4451, 0.0
        %v4469 = vsel %vm4463, %v4452, 0.0
        %v4470 = vsel %vm4463, %v4453, 0.0
        %v4471 = vsel %vm4463, %v4454, 0.0
        %v4472 = vlaneseq
        %v4473 = vshrl.u32 %v4472, 7
        %v4474 = vsub.s32 0, %v4473
        %v4475 = vrot.slane %v4409, %v4474
        %v4476 = vmul.f32 %v4475, 0.0
        %v4477 = vmul.f32 %v4439, %v4475
        %v4478 = vmul.f32 %v4440, %v4475
        %v4479 = vmul.f32 %v4441, %v4475
        %v4480 = vmul.f32 %v4442, %v4475
        %v4481 = vmul.f32 %v4443, %v4475
        %v4482 = vmul.f32 %v4444, %v4475
        %v4483 = vmul.f32 %v4445, %v4475
        %v4484 = vadd.f32 %v4476, 0.0
        %v4485 = vadd.f32 %v4477, 0.0
        %v4486 = vadd.f32 %v4478, 0.0
        %v4487 = vadd.f32 %v4479, 0.0
        %v4488 = vadd.f32 %v4480, 0.0
        %v4489 = vadd.f32 %v4481, 0.0
        %v4490 = vadd.f32 %v4482, 0.0
        %v4491 = vadd.f32 %v4483, 0.0
        %v4492 = vlaneseq
        %v4493 = vshrl.u32 %v4492, 7
        %v4494 = vsub.s32 1, %v4493
        %v4495 = vrot.slane %v4409, %v4494
        %v4496 = vmul.f32 %v4495, 0.0
        %v4497 = vmul.f32 %v4371, %v4495
        %v4498 = vmul.f32 %v4375, %v4495
        %v4499 = vmul.f32 %v4381, %v4495
        %v4500 = vmul.f32 %v4385, %v4495
        %v4501 = vmul.f32 %v4391, %v4495
        %v4502 = vmul.f32 %v4395, %v4495
        %v4503 = vmul.f32 %v4401, %v4495
        %v4504 = vadd.f32 %v4484, %v4496
        %v4505 = vadd.f32 %v4485, %v4497
        %v4506 = vadd.f32 %v4486, %v4498
        %v4507 = vadd.f32 %v4487, %v4499
        %v4508 = vadd.f32 %v4488, %v4500
        %v4509 = vadd.f32 %v4489, %v4501
        %v4510 = vadd.f32 %v4490, %v4502
        %v4511 = vadd.f32 %v4491, %v4503
        %v4512 = vlaneseq
        %v4513 = vshrl.u32 %v4512, 7
        %v4514 = vsub.s32 2, %v4513
        %v4515 = vrot.slane %v4409, %v4514
        %v4516 = vmul.f32 %v4515, 0.0
        %v4517 = vmul.f32 %v4464, %v4515
        %v4518 = vmul.f32 %v4465, %v4515
        %v4519 = vmul.f32 %v4466, %v4515
        %v4520 = vmul.f32 %v4467, %v4515
        %v4521 = vmul.f32 %v4468, %v4515
        %v4522 = vmul.f32 %v4469, %v4515
        %v4523 = vmul.f32 %v4470, %v4515
        %v4524 = vadd.f32 %v4504, %v4516
        %v4525 = vadd.f32 %v4505, %v4517
        %v4526 = vadd.f32 %v4506, %v4518
        %v4527 = vadd.f32 %v4507, %v4519
        %v4528 = vadd.f32 %v4508, %v4520
        %v4529 = vadd.f32 %v4509, %v4521
        %v4530 = vadd.f32 %v4510, %v4522
        %v4531 = vadd.f32 %v4511, %v4523
        %v4532 = vlaneseq
        %v4533 = vshrl.u32 %v4532, 7
        %v4534 = vsub.s32 3, %v4533
        %v4535 = vrot.slane %v4409, %v4534
        %v4536 = vmul.f32 %v4439, %v4535
        %v4537 = vmul.f32 %v4440, %v4535
        %v4538 = vmul.f32 %v4441, %v4535
        %v4539 = vmul.f32 %v4442, %v4535
        %v4540 = vmul.f32 %v4443, %v4535
        %v4541 = vmul.f32 %v4444, %v4535
        %v4542 = vmul.f32 %v4445, %v4535
        %v4543 = vmul.f32 %v4446, %v4535
        %v4544 = vadd.f32 %v4524, %v4536
        %v4545 = vadd.f32 %v4525, %v4537
        %v4546 = vadd.f32 %v4526, %v4538
        %v4547 = vadd.f32 %v4527, %v4539
        %v4548 = vadd.f32 %v4528, %v4540
        %v4549 = vadd.f32 %v4529, %v4541
        %v4550 = vadd.f32 %v4530, %v4542
        %v4551 = vadd.f32 %v4531, %v4543
        %v4552 = vlaneseq
        %v4553 = vshrl.u32 %v4552, 7
        %v4554 = vsub.s32 4, %v4553
        %v4555 = vrot.slane %v4409, %v4554
        %v4556 = vmul.f32 %v4371, %v4555
        %v4557 = vmul.f32 %v4375, %v4555
        %v4558 = vmul.f32 %v4381, %v4555
        %v4559 = vmul.f32 %v4385, %v4555
        %v4560 = vmul.f32 %v4391, %v4555
        %v4561 = vmul.f32 %v4395, %v4555
        %v4562 = vmul.f32 %v4401, %v4555
        %v4563 = vmul.f32 %v4405, %v4555
        %v4564 = vadd.f32 %v4544, %v4556
        %v4565 = vadd.f32 %v4545, %v4557
        %v4566 = vadd.f32 %v4546, %v4558
        %v4567 = vadd.f32 %v4547, %v4559
        %v4568 = vadd.f32 %v4548, %v4560
        %v4569 = vadd.f32 %v4549, %v4561
        %v4570 = vadd.f32 %v4550, %v4562
        %v4571 = vadd.f32 %v4551, %v4563
        %v4572 = vlaneseq
        %v4573 = vshrl.u32 %v4572, 7
        %v4574 = vsub.s32 5, %v4573
        %v4575 = vrot.slane %v4409, %v4574
        %v4576 = vmul.f32 %v4464, %v4575
        %v4577 = vmul.f32 %v4465, %v4575
        %v4578 = vmul.f32 %v4466, %v4575
        %v4579 = vmul.f32 %v4467, %v4575
        %v4580 = vmul.f32 %v4468, %v4575
        %v4581 = vmul.f32 %v4469, %v4575
        %v4582 = vmul.f32 %v4470, %v4575
        %v4583 = vmul.f32 %v4471, %v4575
        %v4584 = vadd.f32 %v4564, %v4576
        %v4585 = vadd.f32 %v4565, %v4577
        %v4586 = vadd.f32 %v4566, %v4578
        %v4587 = vadd.f32 %v4567, %v4579
        %v4588 = vadd.f32 %v4568, %v4580
        %v4589 = vadd.f32 %v4569, %v4581
        %v4590 = vadd.f32 %v4570, %v4582
        %v4591 = vadd.f32 %v4571, %v4583
        %v4592 = vlaneseq
        %v4593 = vshrl.u32 %v4592, 7
        %v4594 = vsub.s32 6, %v4593
        %v4595 = vrot.slane %v4409, %v4594
        %v4596 = vmul.f32 %v4440, %v4595
        %v4597 = vmul.f32 %v4441, %v4595
        %v4598 = vmul.f32 %v4442, %v4595
        %v4599 = vmul.f32 %v4443, %v4595
        %v4600 = vmul.f32 %v4444, %v4595
        %v4601 = vmul.f32 %v4445, %v4595
        %v4602 = vmul.f32 %v4446, %v4595
        %v4603 = vmul.f32 %v4595, 0.0
        %v4604 = vadd.f32 %v4584, %v4596
        %v4605 = vadd.f32 %v4585, %v4597
        %v4606 = vadd.f32 %v4586, %v4598
        %v4607 = vadd.f32 %v4587, %v4599
        %v4608 = vadd.f32 %v4588, %v4600
        %v4609 = vadd.f32 %v4589, %v4601
        %v4610 = vadd.f32 %v4590, %v4602
        %v4611 = vadd.f32 %v4591, %v4603
        %v4612 = vlaneseq
        %v4613 = vshrl.u32 %v4612, 7
        %v4614 = vsub.s32 7, %v4613
        %v4615 = vrot.slane %v4409, %v4614
        %v4616 = vmul.f32 %v4375, %v4615
        %v4617 = vmul.f32 %v4381, %v4615
        %v4618 = vmul.f32 %v4385, %v4615
        %v4619 = vmul.f32 %v4391, %v4615
        %v4620 = vmul.f32 %v4395, %v4615
        %v4621 = vmul.f32 %v4401, %v4615
        %v4622 = vmul.f32 %v4405, %v4615
        %v4623 = vmul.f32 %v4615, 0.0
        %v4624 = vadd.f32 %v4604, %v4616
        %v4625 = vadd.f32 %v4605, %v4617
        %v4626 = vadd.f32 %v4606, %v4618
        %v4627 = vadd.f32 %v4607, %v4619
        %v4628 = vadd.f32 %v4608, %v4620
        %v4629 = vadd.f32 %v4609, %v4621
        %v4630 = vadd.f32 %v4610, %v4622
        %v4631 = vadd.f32 %v4611, %v4623
        %v4632 = vlaneseq
        %v4633 = vshrl.u32 %v4632, 7
        %v4634 = vsub.s32 0, %v4633
        %v4635 = vrot.slane %v4411, %v4634
        %v4636 = vmul.f32 %v4465, %v4635
        %v4637 = vmul.f32 %v4466, %v4635
        %v4638 = vmul.f32 %v4467, %v4635
        %v4639 = vmul.f32 %v4468, %v4635
        %v4640 = vmul.f32 %v4469, %v4635
        %v4641 = vmul.f32 %v4470, %v4635
        %v4642 = vmul.f32 %v4471, %v4635
        %v4643 = vmul.f32 %v4635, 0.0
        %v4644 = vadd.f32 %v4624, %v4636
        %v4645 = vadd.f32 %v4625, %v4637
        %v4646 = vadd.f32 %v4626, %v4638
        %v4647 = vadd.f32 %v4627, %v4639
        %v4648 = vadd.f32 %v4628, %v4640
        %v4649 = vadd.f32 %v4629, %v4641
        %v4650 = vadd.f32 %v4630, %v4642
        %v4651 = vadd.f32 %v4631, %v4643
        %v4653 = vlaneseq
        %v4654 = vshrl.u32 %v4653, 7
        %v4655 = vsub.s32 0, %v4654
        %v4656 = vrot.slane %v4413, %v4655
        %v4658 = vadd.f32 %v4644, %v4656
        %v4659 = vadd.f32 %v4645, %v4656
        %v4660 = vadd.f32 %v4646, %v4656
        %v4661 = vadd.f32 %v4647, %v4656
        %v4662 = vadd.f32 %v4648, %v4656
        %v4663 = vadd.f32 %v4649, %v4656
        %v4664 = vadd.f32 %v4650, %v4656
        %v4665 = vadd.f32 %v4651, %v4656
        %v4666 = vmax.f32 %v4658, 0.0
        %v4667 = vmax.f32 %v4659, 0.0
        %v4668 = vmax.f32 %v4660, 0.0
        %v4669 = vmax.f32 %v4661, 0.0
        %v4670 = vmax.f32 %v4662, 0.0
        %v4671 = vmax.f32 %v4663, 0.0
        %v4672 = vmax.f32 %v4664, 0.0
        %v4673 = vmax.f32 %v4665, 0.0
        %v4674 = vmin.f32 %v4666, 6.0
        %v4675 = vmin.f32 %v4667, 6.0
        %v4676 = vmin.f32 %v4668, 6.0
        %v4677 = vmin.f32 %v4669, 6.0
        %v4678 = vmin.f32 %v4670, 6.0
        %v4679 = vmin.f32 %v4671, 6.0
        %v4680 = vmin.f32 %v4672, 6.0
        %v4681 = vmin.f32 %v4673, 6.0
        %v4690 = vrot.slane %v4373, 7
        %v4691 = vrot.slane %v4377, 7
        %v4692 = vrot.slane %v4383, 7
        %v4693 = vrot.slane %v4387, 7
        %v4694 = vrot.slane %v4393, 7
        %v4695 = vrot.slane %v4397, 7
        %v4696 = vrot.slane %v4403, 7
        %v4697 = vrot.slane %v4407, 7
        %v4706 = vsel %vm4438, 0.0, %v4690
        %v4707 = vsel %vm4438, 0.0, %v4691
        %v4708 = vsel %vm4438, 0.0, %v4692
        %v4709 = vsel %vm4438, 0.0, %v4693
        %v4710 = vsel %vm4438, 0.0, %v4694
        %v4711 = vsel %vm4438, 0.0, %v4695
        %v4712 = vsel %vm4438, 0.0, %v4696
        %v4713 = vsel %vm4438, 0.0, %v4697
        %v4714 = vrot.slane %v4373, 1
        %v4715 = vrot.slane %v4377, 1
        %v4716 = vrot.slane %v4383, 1
        %v4717 = vrot.slane %v4387, 1
        %v4718 = vrot.slane %v4393, 1
        %v4719 = vrot.slane %v4397, 1
        %v4720 = vrot.slane %v4403, 1
        %v4721 = vrot.slane %v4407, 1
        %v4730 = vsel %vm4463, %v4714, 0.0
        %v4731 = vsel %vm4463, %v4715, 0.0
        %v4732 = vsel %vm4463, %v4716, 0.0
        %v4733 = vsel %vm4463, %v4717, 0.0
        %v4734 = vsel %vm4463, %v4718, 0.0
        %v4735 = vsel %vm4463, %v4719, 0.0
        %v4736 = vsel %vm4463, %v4720, 0.0
        %v4737 = vsel %vm4463, %v4721, 0.0
        %v4738 = vlaneseq
        %v4739 = vshrl.u32 %v4738, 7
        %v4740 = vsub.s32 0, %v4739
        %v4741 = vrot.slane %v4410, %v4740
        %v4742 = vmul.f32 %v4741, 0.0
        %v4743 = vmul.f32 %v4706, %v4741
        %v4744 = vmul.f32 %v4707, %v4741
        %v4745 = vmul.f32 %v4708, %v4741
        %v4746 = vmul.f32 %v4709, %v4741
        %v4747 = vmul.f32 %v4710, %v4741
        %v4748 = vmul.f32 %v4711, %v4741
        %v4749 = vmul.f32 %v4712, %v4741
        %v4750 = vadd.f32 %v4742, 0.0
        %v4751 = vadd.f32 %v4743, 0.0
        %v4752 = vadd.f32 %v4744, 0.0
        %v4753 = vadd.f32 %v4745, 0.0
        %v4754 = vadd.f32 %v4746, 0.0
        %v4755 = vadd.f32 %v4747, 0.0
        %v4756 = vadd.f32 %v4748, 0.0
        %v4757 = vadd.f32 %v4749, 0.0
        %v4758 = vlaneseq
        %v4759 = vshrl.u32 %v4758, 7
        %v4760 = vsub.s32 1, %v4759
        %v4761 = vrot.slane %v4410, %v4760
        %v4762 = vmul.f32 %v4761, 0.0
        %v4763 = vmul.f32 %v4373, %v4761
        %v4764 = vmul.f32 %v4377, %v4761
        %v4765 = vmul.f32 %v4383, %v4761
        %v4766 = vmul.f32 %v4387, %v4761
        %v4767 = vmul.f32 %v4393, %v4761
        %v4768 = vmul.f32 %v4397, %v4761
        %v4769 = vmul.f32 %v4403, %v4761
        %v4770 = vadd.f32 %v4750, %v4762
        %v4771 = vadd.f32 %v4751, %v4763
        %v4772 = vadd.f32 %v4752, %v4764
        %v4773 = vadd.f32 %v4753, %v4765
        %v4774 = vadd.f32 %v4754, %v4766
        %v4775 = vadd.f32 %v4755, %v4767
        %v4776 = vadd.f32 %v4756, %v4768
        %v4777 = vadd.f32 %v4757, %v4769
        %v4778 = vlaneseq
        %v4779 = vshrl.u32 %v4778, 7
        %v4780 = vsub.s32 2, %v4779
        %v4781 = vrot.slane %v4410, %v4780
        %v4782 = vmul.f32 %v4781, 0.0
        %v4783 = vmul.f32 %v4730, %v4781
        %v4784 = vmul.f32 %v4731, %v4781
        %v4785 = vmul.f32 %v4732, %v4781
        %v4786 = vmul.f32 %v4733, %v4781
        %v4787 = vmul.f32 %v4734, %v4781
        %v4788 = vmul.f32 %v4735, %v4781
        %v4789 = vmul.f32 %v4736, %v4781
        %v4790 = vadd.f32 %v4770, %v4782
        %v4791 = vadd.f32 %v4771, %v4783
        %v4792 = vadd.f32 %v4772, %v4784
        %v4793 = vadd.f32 %v4773, %v4785
        %v4794 = vadd.f32 %v4774, %v4786
        %v4795 = vadd.f32 %v4775, %v4787
        %v4796 = vadd.f32 %v4776, %v4788
        %v4797 = vadd.f32 %v4777, %v4789
        %v4798 = vlaneseq
        %v4799 = vshrl.u32 %v4798, 7
        %v4800 = vsub.s32 3, %v4799
        %v4801 = vrot.slane %v4410, %v4800
        %v4802 = vmul.f32 %v4706, %v4801
        %v4803 = vmul.f32 %v4707, %v4801
        %v4804 = vmul.f32 %v4708, %v4801
        %v4805 = vmul.f32 %v4709, %v4801
        %v4806 = vmul.f32 %v4710, %v4801
        %v4807 = vmul.f32 %v4711, %v4801
        %v4808 = vmul.f32 %v4712, %v4801
        %v4809 = vmul.f32 %v4713, %v4801
        %v4810 = vadd.f32 %v4790, %v4802
        %v4811 = vadd.f32 %v4791, %v4803
        %v4812 = vadd.f32 %v4792, %v4804
        %v4813 = vadd.f32 %v4793, %v4805
        %v4814 = vadd.f32 %v4794, %v4806
        %v4815 = vadd.f32 %v4795, %v4807
        %v4816 = vadd.f32 %v4796, %v4808
        %v4817 = vadd.f32 %v4797, %v4809
        %v4818 = vlaneseq
        %v4819 = vshrl.u32 %v4818, 7
        %v4820 = vsub.s32 4, %v4819
        %v4821 = vrot.slane %v4410, %v4820
        %v4822 = vmul.f32 %v4373, %v4821
        %v4823 = vmul.f32 %v4377, %v4821
        %v4824 = vmul.f32 %v4383, %v4821
        %v4825 = vmul.f32 %v4387, %v4821
        %v4826 = vmul.f32 %v4393, %v4821
        %v4827 = vmul.f32 %v4397, %v4821
        %v4828 = vmul.f32 %v4403, %v4821
        %v4829 = vmul.f32 %v4407, %v4821
        %v4830 = vadd.f32 %v4810, %v4822
        %v4831 = vadd.f32 %v4811, %v4823
        %v4832 = vadd.f32 %v4812, %v4824
        %v4833 = vadd.f32 %v4813, %v4825
        %v4834 = vadd.f32 %v4814, %v4826
        %v4835 = vadd.f32 %v4815, %v4827
        %v4836 = vadd.f32 %v4816, %v4828
        %v4837 = vadd.f32 %v4817, %v4829
        %v4838 = vlaneseq
        %v4839 = vshrl.u32 %v4838, 7
        %v4840 = vsub.s32 5, %v4839
        %v4841 = vrot.slane %v4410, %v4840
        %v4842 = vmul.f32 %v4730, %v4841
        %v4843 = vmul.f32 %v4731, %v4841
        %v4844 = vmul.f32 %v4732, %v4841
        %v4845 = vmul.f32 %v4733, %v4841
        %v4846 = vmul.f32 %v4734, %v4841
        %v4847 = vmul.f32 %v4735, %v4841
        %v4848 = vmul.f32 %v4736, %v4841
        %v4849 = vmul.f32 %v4737, %v4841
        %v4850 = vadd.f32 %v4830, %v4842
        %v4851 = vadd.f32 %v4831, %v4843
        %v4852 = vadd.f32 %v4832, %v4844
        %v4853 = vadd.f32 %v4833, %v4845
        %v4854 = vadd.f32 %v4834, %v4846
        %v4855 = vadd.f32 %v4835, %v4847
        %v4856 = vadd.f32 %v4836, %v4848
        %v4857 = vadd.f32 %v4837, %v4849
        %v4858 = vlaneseq
        %v4859 = vshrl.u32 %v4858, 7
        %v4860 = vsub.s32 6, %v4859
        %v4861 = vrot.slane %v4410, %v4860
        %v4862 = vmul.f32 %v4707, %v4861
        %v4863 = vmul.f32 %v4708, %v4861
        %v4864 = vmul.f32 %v4709, %v4861
        %v4865 = vmul.f32 %v4710, %v4861
        %v4866 = vmul.f32 %v4711, %v4861
        %v4867 = vmul.f32 %v4712, %v4861
        %v4868 = vmul.f32 %v4713, %v4861
        %v4869 = vmul.f32 %v4861, 0.0
        %v4870 = vadd.f32 %v4850, %v4862
        %v4871 = vadd.f32 %v4851, %v4863
        %v4872 = vadd.f32 %v4852, %v4864
        %v4873 = vadd.f32 %v4853, %v4865
        %v4874 = vadd.f32 %v4854, %v4866
        %v4875 = vadd.f32 %v4855, %v4867
        %v4876 = vadd.f32 %v4856, %v4868
        %v4877 = vadd.f32 %v4857, %v4869
        %v4878 = vlaneseq
        %v4879 = vshrl.u32 %v4878, 7
        %v4880 = vsub.s32 7, %v4879
        %v4881 = vrot.slane %v4410, %v4880
        %v4882 = vmul.f32 %v4377, %v4881
        %v4883 = vmul.f32 %v4383, %v4881
        %v4884 = vmul.f32 %v4387, %v4881
        %v4885 = vmul.f32 %v4393, %v4881
        %v4886 = vmul.f32 %v4397, %v4881
        %v4887 = vmul.f32 %v4403, %v4881
        %v4888 = vmul.f32 %v4407, %v4881
        %v4889 = vmul.f32 %v4881, 0.0
        %v4890 = vadd.f32 %v4870, %v4882
        %v4891 = vadd.f32 %v4871, %v4883
        %v4892 = vadd.f32 %v4872, %v4884
        %v4893 = vadd.f32 %v4873, %v4885
        %v4894 = vadd.f32 %v4874, %v4886
        %v4895 = vadd.f32 %v4875, %v4887
        %v4896 = vadd.f32 %v4876, %v4888
        %v4897 = vadd.f32 %v4877, %v4889
        %v4898 = vlaneseq
        %v4899 = vshrl.u32 %v4898, 7
        %v4900 = vsub.s32 0, %v4899
        %v4901 = vrot.slane %v4412, %v4900
        %v4902 = vmul.f32 %v4731, %v4901
        %v4903 = vmul.f32 %v4732, %v4901
        %v4904 = vmul.f32 %v4733, %v4901
        %v4905 = vmul.f32 %v4734, %v4901
        %v4906 = vmul.f32 %v4735, %v4901
        %v4907 = vmul.f32 %v4736, %v4901
        %v4908 = vmul.f32 %v4737, %v4901
        %v4909 = vmul.f32 %v4901, 0.0
        %v4910 = vadd.f32 %v4890, %v4902
        %v4911 = vadd.f32 %v4891, %v4903
        %v4912 = vadd.f32 %v4892, %v4904
        %v4913 = vadd.f32 %v4893, %v4905
        %v4914 = vadd.f32 %v4894, %v4906
        %v4915 = vadd.f32 %v4895, %v4907
        %v4916 = vadd.f32 %v4896, %v4908
        %v4917 = vadd.f32 %v4897, %v4909
        %v4918 = vrot.slane %v4413, 1
        %v4919 = vlaneseq
        %v4920 = vshrl.u32 %v4919, 7
        %v4921 = vsub.s32 0, %v4920
        %v4922 = vrot.slane %v4918, %v4921
        %v4924 = vadd.f32 %v4910, %v4922
        %v4925 = vadd.f32 %v4911, %v4922
        %v4926 = vadd.f32 %v4912, %v4922
        %v4927 = vadd.f32 %v4913, %v4922
        %v4928 = vadd.f32 %v4914, %v4922
        %v4929 = vadd.f32 %v4915, %v4922
        %v4930 = vadd.f32 %v4916, %v4922
        %v4931 = vadd.f32 %v4917, %v4922
        %v4932 = vmax.f32 %v4924, 0.0
        %v4933 = vmax.f32 %v4925, 0.0
        %v4934 = vmax.f32 %v4926, 0.0
        %v4935 = vmax.f32 %v4927, 0.0
        %v4936 = vmax.f32 %v4928, 0.0
        %v4937 = vmax.f32 %v4929, 0.0
        %v4938 = vmax.f32 %v4930, 0.0
        %v4939 = vmax.f32 %v4931, 0.0
        %v4940 = vmin.f32 %v4932, 6.0
        %v4941 = vmin.f32 %v4933, 6.0
        %v4942 = vmin.f32 %v4934, 6.0
        %v4943 = vmin.f32 %v4935, 6.0
        %v4944 = vmin.f32 %v4936, 6.0
        %v4945 = vmin.f32 %v4937, 6.0
        %v4946 = vmin.f32 %v4938, 6.0
        %v4947 = vmin.f32 %v4939, 6.0
        %v4948 = vpack.c.bf16 %v4675, %v4674
        %v4949 = vpack.c.bf16 %v4941, %v4940
        %v4950 = vpack.c.bf16 %v4677, %v4676
        %v4951 = vpack.c.bf16 %v4943, %v4942
        %v4952 = vpack.c.bf16 %v4679, %v4678
        %v4953 = vpack.c.bf16 %v4945, %v4944
        %v4954 = vpack.c.bf16 %v4681, %v4680
        %v4955 = vpack.c.bf16 %v4947, %v4946
        %v4956 = vld [vmem:[%s13] sm:$0xf]
        %v4957 = vld [vmem:[%s13 + $0x4] sm:$0xf]
        %v4958 = vld [vmem:[%s13 + $0x8] sm:$0xf]
        %v4959 = vld [vmem:[%s13 + $0xc] sm:$0xf]
        %v4960 = vld [vmem:[%s13 + $0x10] sm:$0xf]
        %v4961 = vld [vmem:[%s13 + $0x14] sm:$0xf]
        %v4962 = vld [vmem:[%s13 + $0x18] sm:$0xf]
        %v4963 = vld [vmem:[%s13 + $0x1c] sm:$0xf]
        %v4964 = vld [vmem:[%s13 + $0x20] sm:$0xf]
        %v4965 = vld [vmem:[%s13 + $0x24] sm:$0xf]
        %v4966 = vld [vmem:[%s13 + $0x28] sm:$0xf]
        %v4967 = vld [vmem:[%s13 + $0x2c] sm:$0xf]
        %v4968 = vld [vmem:[%s13 + $0x30] sm:$0xf]
        %v4969 = vld [vmem:[%s13 + $0x34] sm:$0xf]
        %v4970 = vld [vmem:[%s13 + $0x38] sm:$0xf]
        %v4971 = vld [vmem:[%s13 + $0x3c] sm:$0xf]
        %v4972 = vld [vmem:[%s13 + $0x40] sm:$0xf]
        %v4973 = vld [vmem:[%s13 + $0x44] sm:$0xf]
        %v4974 = vld [vmem:[%s13 + $0x48] sm:$0xf]
        %v4975 = vld [vmem:[%s13 + $0x4c] sm:$0xf]
        %v4976 = vld [vmem:[%s13 + $0x50] sm:$0xf]
        %v4977 = vld [vmem:[%s13 + $0x54] sm:$0xf]
        %v4978 = vld [vmem:[%s13 + $0x58] sm:$0xf]
        %v4979 = vld [vmem:[%s13 + $0x5c] sm:$0xf]
        %v4980 = vld [vmem:[%s13 + $0x60] sm:$0xf]
        %v4981 = vld [vmem:[%s13 + $0x64] sm:$0xf]
        %v4982 = vld [vmem:[%s13 + $0x68] sm:$0xf]
        %v4983 = vld [vmem:[%s13 + $0x6c] sm:$0xf]
        %v4984 = vld [vmem:[%s13 + $0x70] sm:$0xf]
        %v4985 = vld [vmem:[%s13 + $0x74] sm:$0xf]
        %v4986 = vld [vmem:[%s13 + $0x78] sm:$0xf]
        %v4987 = vld [vmem:[%s13 + $0x7c] sm:$0xf]
        %v4988 = vld [vmem:[%s14] sm:$0x1]
        %v4990 = vlaneseq
        %v4991 = vshrl.u32 %v4990, 7
        %v4992 = vsub.s32 0, %v4991
        %v4993 = vrot.slane %v4988, %v4992
        %v5027 = vunpack.c.l.b16 %v4956
        %v5028 = vunpack.c.l.b16 %v4957
        %v5029 = vunpack.c.l.b16 %v4958
        %v5030 = vunpack.c.l.b16 %v4959
        %v5031 = vunpack.c.l.b16 %v4960
        %v5032 = vunpack.c.l.b16 %v4961
        %v5033 = vunpack.c.l.b16 %v4962
        %v5034 = vunpack.c.l.b16 %v4963
        %v5035 = vunpack.c.l.b16 %v4964
        %v5036 = vunpack.c.l.b16 %v4965
        %v5037 = vunpack.c.l.b16 %v4966
        %v5038 = vunpack.c.l.b16 %v4967
        %v5039 = vunpack.c.l.b16 %v4968
        %v5040 = vunpack.c.l.b16 %v4969
        %v5041 = vunpack.c.l.b16 %v4970
        %v5042 = vunpack.c.l.b16 %v4971
        %v5043 = vunpack.c.l.b16 %v4972
        %v5044 = vunpack.c.l.b16 %v4973
        %v5045 = vunpack.c.l.b16 %v4974
        %v5046 = vunpack.c.l.b16 %v4975
        %v5047 = vunpack.c.l.b16 %v4976
        %v5048 = vunpack.c.l.b16 %v4977
        %v5049 = vunpack.c.l.b16 %v4978
        %v5050 = vunpack.c.l.b16 %v4979
        %v5051 = vunpack.c.l.b16 %v4980
        %v5052 = vunpack.c.l.b16 %v4981
        %v5053 = vunpack.c.l.b16 %v4982
        %v5054 = vunpack.c.l.b16 %v4983
        %v5055 = vunpack.c.l.b16 %v4984
        %v5056 = vunpack.c.l.b16 %v4985
        %v5057 = vunpack.c.l.b16 %v4986
        %v5058 = vunpack.c.l.b16 %v4987
        %v5059 = vpack.c.b16 %v5028, %v5027
        %v5060 = vpack.c.b16 %v5030, %v5029
        %v5061 = vpack.c.b16 %v5032, %v5031
        %v5062 = vpack.c.b16 %v5034, %v5033
        %v5063 = vpack.c.b16 %v5036, %v5035
        %v5064 = vpack.c.b16 %v5038, %v5037
        %v5065 = vpack.c.b16 %v5040, %v5039
        %v5066 = vpack.c.b16 %v5042, %v5041
        %v5067 = vpack.c.b16 %v5044, %v5043
        %v5068 = vpack.c.b16 %v5046, %v5045
        %v5069 = vpack.c.b16 %v5048, %v5047
        %v5070 = vpack.c.b16 %v5050, %v5049
        %v5071 = vpack.c.b16 %v5052, %v5051
        %v5072 = vpack.c.b16 %v5054, %v5053
        %v5073 = vpack.c.b16 %v5056, %v5055
        %v5074 = vpack.c.b16 %v5058, %v5057
        %5091 = vmatprep.subr.bf16.mxu0 0
        %5092 = vmatpush1.bf16.msra.mxu0 %v5059
        %5093 = vmatprep.subr.bf16.mxu0 0
        %5094 = vmatpush1.bf16.msra.mxu0 %v5060
        %5095 = vmatprep.subr.bf16.mxu0 0
        %5096 = vmatpush1.bf16.msra.mxu0 %v5061
        %5097 = vmatprep.subr.bf16.mxu0 0
        %5098 = vmatpush1.bf16.msra.mxu0 %v5062
        %5099 = vmatprep.subr.bf16.mxu0 0
        %5100 = vmatpush1.bf16.msra.mxu0 %v5063
        %5101 = vmatprep.subr.bf16.mxu0 0
        %5102 = vmatpush1.bf16.msra.mxu0 %v5064
        %5103 = vmatprep.subr.bf16.mxu0 0
        %5104 = vmatpush1.bf16.msra.mxu0 %v5065
        %5105 = vmatprep.subr.bf16.mxu0 0
        %5106 = vmatpush1.bf16.msra.mxu0 %v5066
        %5107 = vmatprep.subr.bf16.mxu0 0
        %5108 = vmatpush1.bf16.msra.mxu0 %v5067
        %5109 = vmatprep.subr.bf16.mxu0 0
        %5110 = vmatpush1.bf16.msra.mxu0 %v5068
        %5111 = vmatprep.subr.bf16.mxu0 0
        %5112 = vmatpush1.bf16.msra.mxu0 %v5069
        %5113 = vmatprep.subr.bf16.mxu0 0
        %5114 = vmatpush1.bf16.msra.mxu0 %v5070
        %5115 = vmatprep.subr.bf16.mxu0 0
        %5116 = vmatpush1.bf16.msra.mxu0 %v5071
        %5117 = vmatprep.subr.bf16.mxu0 0
        %5118 = vmatpush1.bf16.msra.mxu0 %v5072
        %5119 = vmatprep.subr.bf16.mxu0 0
        %5120 = vmatpush1.bf16.msra.mxu0 %v5073
        %5121 = vmatprep.subr.bf16.mxu0 0
        %5122 = vmatpush1.bf16.msra.mxu0 %v5074
        %5123 = vmatprep.mubr.bf16.mxu0 %v4949
        %5124 = vmatmul.mubr.bf16.gmra.mrb[0].mxu0 %v4948
        %v5125 = vpop.f32.mrb[0].mxu0
        %v5126 = vadd.f32 %v4993, %v5125
        %v5127 = vpop.f32.mrb[0].mxu0
        %v5128 = vpop.f32.mrb[0].mxu0
        %v5129 = vadd.f32 %v4993, %v5128
        %v5130 = vpop.f32.mrb[0].mxu0
        %5131 = vmatprep.mubr.bf16.mxu0 %v4951
        %5132 = vmatmul.mubr.bf16.gmra.mrb[0].mxu0 %v4950
        %v5133 = vpop.f32.mrb[0].mxu0
        %v5134 = vadd.f32 %v4993, %v5133
        %v5135 = vpop.f32.mrb[0].mxu0
        %v5136 = vpop.f32.mrb[0].mxu0
        %v5137 = vadd.f32 %v4993, %v5136
        %v5138 = vpop.f32.mrb[0].mxu0
        %5139 = vmatprep.mubr.bf16.mxu0 %v4953
        %5140 = vmatmul.mubr.bf16.gmra.mrb[0].mxu0 %v4952
        %v5141 = vpop.f32.mrb[0].mxu0
        %v5142 = vadd.f32 %v4993, %v5141
        %v5143 = vpop.f32.mrb[0].mxu0
        %v5144 = vpop.f32.mrb[0].mxu0
        %v5145 = vadd.f32 %v4993, %v5144
        %v5146 = vpop.f32.mrb[0].mxu0
        %5147 = vmatprep.mubr.bf16.mxu0 %v4955
        %5148 = vmatmul.mubr.bf16.gmra.mrb[0].mxu0 %v4954
        %v5149 = vpop.f32.mrb[0].mxu0
        %v5150 = vadd.f32 %v4993, %v5149
        %v5151 = vpop.f32.mrb[0].mxu0
        %v5152 = vpop.f32.mrb[0].mxu0
        %v5153 = vadd.f32 %v4993, %v5152
        %v5154 = vpop.f32.mrb[0].mxu0
        %5155 = vdwg.mxu0
        %v5156 = vadd.f32 %v4216, %v5126
        %v5157 = vadd.f32 %v4217, %v5129
        %v5158 = vadd.f32 %v4218, %v5134
        %v5159 = vadd.f32 %v4219, %v5137
        %v5160 = vadd.f32 %v4220, %v5142
        %v5161 = vadd.f32 %v4221, %v5145
        %v5162 = vadd.f32 %v4222, %v5150
        %v5163 = vadd.f32 %v4223, %v5153
        %5164 = vst [vmem:[%s487] sm:$0xff] %v5156
        %5165 = vst [vmem:[%s487 + $0x8] sm:$0xff] %v5157
        %5166 = vst [vmem:[%s487 + $0x10] sm:$0xff] %v5158
        %5167 = vst [vmem:[%s487 + $0x18] sm:$0xff] %v5159
        %5168 = vst [vmem:[%s487 + $0x20] sm:$0xff] %v5160
        %5169 = vst [vmem:[%s487 + $0x28] sm:$0xff] %v5161
        %5170 = vst [vmem:[%s487 + $0x30] sm:$0xff] %v5162
        %5171 = vst [vmem:[%s487 + $0x38] sm:$0xff] %v5163
        %s5172 = sand.u32 %s357, 1
        %s5173 = scalar_lea.sflag [#allocation3], %s5172
        %s5174 = sand.u32 %s357, 1
        %s5175 = smul.addr %s5174, 64
        %s5176 = scalar_lea.vmem [#allocation2], %s5175
        // Predicated region
        $region81: #{top_block_pallas.1} parent=79 // pred_check
          %p5177 = pneg %p367
        $region82: #{top_block_pallas.1} parent=79 // pred_check_branch
          %5179 = sbr.rel (%p5177) target = $region84
        $region83: #{top_block_pallas.1} parent=79 // pred_region
          %s5181 = ssub.s32 1024, 1024
          %5182 = vsyncadd %s5173, %s5181
          %s5183 = smul.addr %s29, 8
          %s5184 = smul.addr %s5183, 128
          %s5185 = scalar_lea.hbm %s15, %s5184
          %s5186 = sshll.u32 %s5176, 4
          %s5187 = int_to_ptr.vmem [resolvable:$true] %s5186
          %5192 = dma.vmem_to_hbm [thread:$0]  %s5187, 1024, %s5185, %s5173, 128, 128, 8
        $region84: #{top_block_pallas.1} parent=79 // pred_fallthru
          _
      $region80: #{top_block_pallas.1} parent=5 // pred_fallthru
        _
      %p5193 = scmp.le.s32.totalorder 2, %s24
      // Predicated region
      $region85: #{top_block_pallas.1} parent=5 // pred_check
        %p5194 = pneg %p5193
      $region86: #{top_block_pallas.1} parent=5 // pred_check_branch
        %5196 = sbr.rel (%p5194) target = $region88
      $region87: #{top_block_pallas.1} parent=5 // pred_region
        %s5197 = ssub.s32 %s24, 2
        // Predicated region
        $region89: #{top_block_pallas.1} parent=87 // pred_check
          %p5198 = pneg %p373
        $region90: #{top_block_pallas.1} parent=87 // pred_check_branch
          %5200 = sbr.rel (%p5198) target = $region92
        $region91: #{top_block_pallas.1} parent=87 // pred_region
          %s5201 = sand.u32 %s358, 1
          %s5202 = scalar_lea.sflag [#allocation3], %s5201
          %s5203 = sand.u32 %s358, 1
          %s5204 = smul.addr %s5203, 64
          %s5205 = scalar_lea.vmem [#allocation2], %s5204
          %5206 = dma.done %s5202, 1024
        $region92: #{top_block_pallas.1} parent=87 // pred_fallthru
          _
      $region88: #{top_block_pallas.1} parent=5 // pred_fallthru
        _
    $region6: #{top_block_pallas.1} parent=1 // loop_footer
      %s28 = sadd.s32 1, %s24
    $region7: #{top_block_pallas.1} parent=1 // loop_footer_branch
      %23 = sbr.rel target = $region3
    $region8: #{top_block_pallas.1} parent=1 // loop_exit
      _
    %5207 = vsyncpa [#allocation3], 1
    %s5208 = scalar_lea.sflag [#allocation3], 1
    %5209 = vsyncpa %s5208, 1

</llo_original>
